<compile_context>
chip_gen: v6e
topology: v6e:2x2x1
jax: 0.10.0
libtpu: 0.0.40
codegen_flags: <defaults>
</compile_context>

<pallas_src>
import functools
import numpy as np

import jax
import jax.numpy as jnp
from jax.experimental import pallas as pl
from jax.experimental.pallas import tpu as pltpu


# --------------------------------------------------------------------------
# small helpers
# --------------------------------------------------------------------------

_VMEM_LIMIT = 32 * 1024 * 1024   # <= default scoped budget on v6e/v7x, raises v5e's 16 MiB


def _cparams(n_axes):
    return pltpu.CompilerParams(
        dimension_semantics=("parallel",) * n_axes,
        vmem_limit_bytes=_VMEM_LIMIT)


def _lane_tile(M, tile):
    """Full extent if it fits (always legal), else a 128-multiple tile; the last
    grid block may be ragged and Pallas masks its store -- no pad/slice passes."""
    if M <= tile:
        return M
    assert tile % 128 == 0
    return tile


# --------------------------------------------------------------------------
# Pallas kernels
# --------------------------------------------------------------------------

def _wx_kernel(w_ref, x_ref, b_ref, o_ref, *, act):
    # o = act(W @ x + b): W (Cout,K) bf16, x (1,K,tm), b (Cout,1) f32 -> o (1,Cout,tm)
    x = x_ref[0].astype(w_ref.dtype)
    acc = jnp.dot(w_ref[...], x, preferred_element_type=jnp.float32)
    acc = acc + b_ref[...]
    if act == "relu":
        acc = jnp.maximum(acc, 0.0)
    o_ref[0] = acc.astype(o_ref.dtype)


def conv_wx(x, w, b, act="none", tile=16384, out_dtype=jnp.bfloat16):
    """Batched lane-dense matmul: x (B,K,M), w (Cout,K), b (Cout,) -> (B,Cout,M)."""
    B, K, M = x.shape
    Cout = w.shape[0]
    tm = _lane_tile(M, tile)
    return pl.pallas_call(
        functools.partial(_wx_kernel, act=act),
        grid=(B, pl.cdiv(M, tm)),
        in_specs=[
            pl.BlockSpec((Cout, K), lambda bb, ii: (0, 0)),
            pl.BlockSpec((1, K, tm), lambda bb, ii: (bb, 0, ii)),
            pl.BlockSpec((Cout, 1), lambda bb, ii: (0, 0)),
        ],
        out_specs=pl.BlockSpec((1, Cout, tm), lambda bb, ii: (bb, 0, ii)),
        out_shape=jax.ShapeDtypeStruct((B, Cout, M), out_dtype),
        compiler_params=_cparams(2),
    )(w, x, b.astype(jnp.float32).reshape(Cout, 1))


def _xw_kernel(x_ref, w_ref, o_ref):
    o_ref[0] = jnp.dot(x_ref[0], w_ref[...],
                       preferred_element_type=jnp.float32).astype(o_ref.dtype)


def matmul_xw(x, w, out_dtype=jnp.bfloat16):
    """x (B,R,K) @ w (K,Nout) -> (B,R,Nout); per-batch blocks (small R,K here)."""
    B, R, K = x.shape
    Nout = w.shape[1]
    return pl.pallas_call(
        _xw_kernel,
        grid=(B,),
        in_specs=[pl.BlockSpec((1, R, K), lambda bb: (bb, 0, 0)),
                  pl.BlockSpec((K, Nout), lambda bb: (0, 0))],
        out_specs=pl.BlockSpec((1, R, Nout), lambda bb: (bb, 0, 0)),
        out_shape=jax.ShapeDtypeStruct((B, R, Nout), out_dtype),
        compiler_params=_cparams(1),
    )(x, w)


def _tapmax_kernel(p_ref, o_ref):
    # p_ref: (1, k, C, tm) -> running max over the k taps.  Compute in f32
    # (exact for bf16 inputs; v5e's VPU has no bf16 path anyway).
    m = p_ref[0, 0].astype(jnp.float32)
    for t in range(1, p_ref.shape[1]):
        m = jnp.maximum(m, p_ref[0, t].astype(jnp.float32))
    o_ref[0] = m.astype(o_ref.dtype)


def _tap_max_pallas(p, tile=2048):
    """p (N, k, C, M) -> (N, C, M): elementwise max over axis 1, lane-tiled."""
    N, k, C, M = p.shape
    tm = _lane_tile(M, tile)
    return pl.pallas_call(
        _tapmax_kernel,
        grid=(N, pl.cdiv(M, tm)),
        in_specs=[pl.BlockSpec((1, k, C, tm), lambda bb, ii: (bb, 0, 0, ii))],
        out_specs=pl.BlockSpec((1, C, tm), lambda bb, ii: (bb, 0, ii)),
        out_shape=jax.ShapeDtypeStruct((N, C, M), p.dtype),
        compiler_params=_cparams(2),
    )(p)


def max_pool2d(x, k, stride):
    """F.max_pool2d(x, k, stride) on NCHW x, computed SEPARABLY (H pass, W pass).

    The strided tap selection is pure data rearrangement (JAX glue); the k-tap
    running max runs in Pallas.  Returns ((N, C, Hp*Wp), Hp, Wp).
    """
    N, C, H, W = x.shape
    assert H >= k and W >= k, "max_pool2d: input smaller than the pooling window"
    Hp = (H - k) // stride + 1
    Wp = (W - k) // stride + 1
    # H pass: (N, C, H, W) -> (N, C, Hp, W)
    taps = jnp.stack(
        [x[:, :, di:di + (Hp - 1) * stride + 1:stride, :] for di in range(k)],
        axis=1)                                              # (N, k, C, Hp, W)
    h_out = _tap_max_pallas(taps.reshape(N, k, C, Hp * W)).reshape(N, C, Hp, W)
    # W pass: (N, C, Hp, W) -> (N, C, Hp, Wp)
    taps = jnp.stack(
        [h_out[:, :, :, dj:dj + (Wp - 1) * stride + 1:stride] for dj in range(k)],
        axis=1)                                              # (N, k, C, Hp, Wp)
    out = _tap_max_pallas(taps.reshape(N, k, C, Hp * Wp))
    return out, Hp, Wp


def _esa_gate_kernel(x_ref, c3_ref, w4_ref, wx_ref, b_ref, o_ref):
    # fused tail: c4 = W4 @ c3_up + (W4 Wf W1) @ x + b_comb ; out = x * sigmoid(c4)
    x = x_ref[0]                                                 # (C, tm), native dtype
    s = jnp.dot(w4_ref[...], c3_ref[0], preferred_element_type=jnp.float32)
    s = s + jnp.dot(wx_ref[...], x.astype(wx_ref.dtype),
                    preferred_element_type=jnp.float32)
    s = s + b_ref[...]
    # exact sigmoid: exp over/underflow hits the correct 0/1 limits (no approx recip).
    m = 1.0 / (1.0 + jnp.exp(-s))
    o_ref[0] = (x.astype(jnp.float32) * m).astype(o_ref.dtype)


def esa_gate(x3, c3u, w4, wx_comb, b_comb, tile=16384):
    """out = x * sigmoid(W4 c3_up + (W4 Wf W1) x + b_comb), lane-tiled over pixels."""
    N, C, M = x3.shape
    f = c3u.shape[1]
    tm = _lane_tile(M, tile)
    return pl.pallas_call(
        _esa_gate_kernel,
        grid=(N, pl.cdiv(M, tm)),
        in_specs=[
            pl.BlockSpec((1, C, tm), lambda bb, ii: (bb, 0, ii)),
            pl.BlockSpec((1, f, tm), lambda bb, ii: (bb, 0, ii)),
            pl.BlockSpec((C, f), lambda bb, ii: (0, 0)),
            pl.BlockSpec((C, C), lambda bb, ii: (0, 0)),
            pl.BlockSpec((C, 1), lambda bb, ii: (0, 0)),
        ],
        out_specs=pl.BlockSpec((1, C, tm), lambda bb, ii: (bb, 0, ii)),
        out_shape=jax.ShapeDtypeStruct((N, C, M), x3.dtype),
        compiler_params=_cparams(2),
    )(x3, c3u, w4, wx_comb, b_comb.astype(jnp.float32).reshape(C, 1))


# --------------------------------------------------------------------------
# Glue: im2col / bilinear matrices (pure data rearrangement, plain JAX)
# --------------------------------------------------------------------------

def _im2col_ncm(x, k, stride, padding):
    """x (N,C,H,W) -> (N, C*k*k, Ho*Wo); feature order (c, di, dj) matches w.reshape."""
    N, C, H, W = x.shape
    if padding:
        x = jnp.pad(x, ((0, 0), (0, 0), (padding, padding), (padding, padding)))
    Hpad, Wpad = H + 2 * padding, W + 2 * padding
    Ho = (Hpad - k) // stride + 1
    Wo = (Wpad - k) // stride + 1
    cols = [x[:, :, di:di + (Ho - 1) * stride + 1:stride,
                    dj:dj + (Wo - 1) * stride + 1:stride]
            for di in range(k) for dj in range(k)]
    p = jnp.stack(cols, axis=2)                       # (N, C, k*k, Ho, Wo)
    return p.reshape(N, C * k * k, Ho * Wo), Ho, Wo


def conv2d_ncm(x, w, b, stride=1, padding=0, act="none", tile=16384,
               out_dtype=jnp.bfloat16):
    """PyTorch-semantics Conv2d on NCHW x; output is lane-dense (N, Cout, Ho*Wo).

    TODO(synk): for conv2 (3x3/stride-2 on the full-res map) a halo-DMA kernel
    (pl.ANY input + pltpu.make_async_copy of a row slab) would avoid materializing
    the 9x im2col patches in HBM and would allow folding conv1 into conv2's taps;
    kept as im2col + matmul here for lowering robustness.
    """
    Cout, Cin, k, _ = w.shape
    patches, Ho, Wo = _im2col_ncm(x, k, stride, padding)
    out = conv_wx(patches, w.reshape(Cout, Cin * k * k), b, act=act, tile=tile,
                  out_dtype=out_dtype)
    return out, Ho, Wo


def _bilinear_matrix(in_size, out_size):
    """Matrix reproducing F.interpolate(mode='bilinear', align_corners=False) on one axis."""
    M = np.zeros((out_size, in_size), dtype=np.float32)
    scale = in_size / out_size
    for i in range(out_size):
        src = max((i + 0.5) * scale - 0.5, 0.0)
        i0 = min(int(np.floor(src)), in_size - 1)
        i1 = min(i0 + 1, in_size - 1)
        lam = src - i0
        M[i, i0] += 1.0 - lam
        M[i, i1] += lam
    return jnp.asarray(M)


def bilinear_upsample_ncm(x_ncm, Hin, Win, Hout, Wout, dtype=jnp.bfloat16):
    """(N, C, Hin*Win) -> (N, C, Hout*Wout). Two lane-dense matmuls, zero transposes.

    TODO(synk): the H-interp (second matmul) can be fused into esa_gate (keep the
    W-interp result resident in VMEM, row-align the gate tiles) to remove the
    c3_up HBM round trip; kept as a separate kernel here for robustness.
    """
    N, C, _ = x_ncm.shape
    MwT = _bilinear_matrix(Win, Wout).T.astype(dtype)     # (Win, Wout)
    Mh = _bilinear_matrix(Hin, Hout).astype(dtype)        # (Hout, Hin)
    # 1) interpolate along W:  (N, C*Hin, Win) @ (Win, Wout)   (lane = Wout)
    u = matmul_xw(x_ncm.reshape(N, C * Hin, Win), MwT, out_dtype=dtype)
    # 2) interpolate along H:  per (n,c): Mh @ (Hin, Wout)      (lane = Wout)
    u = u.reshape(N * C, Hin, Wout)
    up = conv_wx(u, Mh, jnp.zeros((Hout,), jnp.float32), out_dtype=dtype)
    return up.reshape(N, C, Hout * Wout)


# --------------------------------------------------------------------------
# ESA forward (mirrors the PyTorch module)
# --------------------------------------------------------------------------

def esa_forward(x, p, compute_dtype=jnp.bfloat16):
    N, C, H, W = x.shape
    f = p["conv1_w"].shape[0]
    M = H * W
    x3 = x.reshape(N, C, M)                                       # lane = pixels
    cast = lambda a: a.astype(compute_dtype)

    # conv1: 1x1, n_feats -> f   (x read in its native dtype; bf16 intermediate out)
    w1 = p["conv1_w"].reshape(f, C)
    c1_ = conv_wx(x3, cast(w1), p["conv1_b"], out_dtype=compute_dtype)

    # conv2: 3x3, stride 2, valid
    c1, Ho, Wo = conv2d_ncm(c1_.reshape(N, f, H, W),
                            cast(p["conv2_w"]), p["conv2_b"], stride=2, padding=0,
                            out_dtype=compute_dtype)

    # 7x7 / stride-3 max pool (separable H pass + W pass, no 49x im2col stack)
    v_max, Hp, Wp = max_pool2d(c1.reshape(N, f, Ho, Wo), 7, 3)

    # conv_max -> relu -> conv3 -> relu -> conv3_   (tiny pooled map)
    # TODO(synk): fuse these three 3x3 convs (+ the bilinear W-interp) into one
    # pallas_call with a VMEM-resident padded scratch to drop the extra launches;
    # they are launch-overhead dominated, not HBM dominated.
    v_range, _, _ = conv2d_ncm(v_max.reshape(N, f, Hp, Wp),
                               cast(p["conv_max_w"]), p["conv_max_b"], 1, 1,
                               act="relu", out_dtype=compute_dtype)
    c3, _, _ = conv2d_ncm(v_range.reshape(N, f, Hp, Wp),
                          cast(p["conv3_w"]), p["conv3_b"], 1, 1, act="relu",
                          out_dtype=compute_dtype)
    c3, _, _ = conv2d_ncm(c3.reshape(N, f, Hp, Wp),
                          cast(p["conv3__w"]), p["conv3__b"], 1, 1,
                          out_dtype=compute_dtype)

    # bilinear upsample (Hp, Wp) -> (H, W)
    c3_up = bilinear_upsample_ncm(c3, Hp, Wp, H, W, dtype=compute_dtype)  # (N,f,M)

    # fused gate: conv_f / conv4 are 1x1 and compose linearly with conv1:
    #   c4 = W4 c3_up + (W4 Wf W1) x + (W4 (Wf b1 + bf) + b4)
    wf = p["conv_f_w"].reshape(f, f)
    w4 = p["conv4_w"].reshape(C, f)
    wx_comb = w4 @ wf @ w1                                        # (C, C), f32
    b_comb = w4 @ (wf @ p["conv1_b"] + p["conv_f_b"]) + p["conv4_b"]
    out = esa_gate(x3, c3_up, cast(w4), cast(wx_comb), b_comb)    # (N, C, M)
    return out.reshape(N, C, H, W)


def init_params(key, n_feats):
    f = n_feats // 4
    specs = {
        "conv1":    (f, n_feats, 1, 1),
        "conv_f":   (f, f, 1, 1),
        "conv_max": (f, f, 3, 3),
        "conv2":    (f, f, 3, 3),
        "conv3":    (f, f, 3, 3),
        "conv3_":   (f, f, 3, 3),
        "conv4":    (n_feats, f, 1, 1),
    }
    p = {}
    for k_rng, (name, shape) in zip(jax.random.split(key, len(specs)),
                                    specs.items()):
        kw, kb = jax.random.split(k_rng)
        fan_in = shape[1] * shape[2] * shape[3]
        bound = 1.0 / np.sqrt(fan_in)
        p[name + "_w"] = jax.random.uniform(kw, shape, jnp.float32, -bound, bound)
        p[name + "_b"] = jax.random.uniform(kb, (shape[0],), jnp.float32, -bound, bound)
    return p


if __name__ == "__main__":
    n_feats = 16
    N, H, W = 2, 32, 32

    key = jax.random.PRNGKey(0)
    kx, kp = jax.random.split(key)
    x = jax.random.normal(kx, (N, n_feats, H, W), jnp.float32)
    params = init_params(kp, n_feats)

    out = jax.jit(lambda xx: esa_forward(xx, params))(x)
    out = jax.block_until_ready(out)

    assert out.shape == x.shape and out.dtype == x.dtype
    assert bool(jnp.all(jnp.isfinite(out)))
    # out = x * sigmoid(...)  =>  |out| <= |x| (up to bf16 rounding)
    assert bool(jnp.all(jnp.abs(out) <= jnp.abs(x) * 1.001 + 1e-2))
    print("KERNEL_OK")
</pallas_src>

<mosaic_0001>
module attributes {stable_mosaic.version = 11 : i64} {
  func.func @_wx_kernel(%arg0: i32, %arg1: i32, %arg2: memref<4x16xbf16, #tpu.memory_space<vmem>>, %arg3: memref<1x16x1024xf32, #tpu.memory_space<vmem>>, %arg4: memref<4x1xf32, #tpu.memory_space<vmem>>, %arg5: memref<1x4x1024xbf16, #tpu.memory_space<vmem>>) attributes {dimension_semantics = [#tpu.dimension_semantics<parallel>, #tpu.dimension_semantics<parallel>], iteration_bounds = array<i64: 2, 1>, scalar_prefetch = 0 : i64, scratch_operands = 0 : i64, tpu.core_type = #tpu.core_type<tc>, window_params = [{pipeline_mode = #tpu.pipeline_mode<synchronous>, transform_indices = @transform_0, window_bounds = array<i64: 4, 16>}, {transform_indices = @transform_1, window_bounds = array<i64: 1, 16, 1024>}, {pipeline_mode = #tpu.pipeline_mode<synchronous>, transform_indices = @transform_2, window_bounds = array<i64: 4, 1>}, {transform_indices = @transform_3, window_bounds = array<i64: 1, 4, 1024>}]} {
    %c0 = arith.constant 0 : index
    %c0_0 = arith.constant 0 : index
    %c0_1 = arith.constant 0 : index
    %0 = vector.load %arg3[%c0, %c0_0, %c0_1] : memref<1x16x1024xf32, #tpu.memory_space<vmem>>, vector<1x16x1024xf32>
    %1 = vector.shape_cast %0 : vector<1x16x1024xf32> to vector<16x1024xf32>
    %2 = arith.truncf %1 : vector<16x1024xf32> to vector<16x1024xbf16>
    %c0_2 = arith.constant 0 : index
    %c0_3 = arith.constant 0 : index
    %3 = vector.load %arg2[%c0_2, %c0_3] : memref<4x16xbf16, #tpu.memory_space<vmem>>, vector<4x16xbf16>
    %cst = arith.constant dense<0.000000e+00> : vector<4x1024xf32>
    %4 = tpu.matmul %3, %2, %cst {dimension_numbers = #tpu.dot_dimension_numbers<[1], [0], [0], [1], [0, 0, 1, 1], [], []>} : vector<4x16xbf16>, vector<16x1024xbf16>, vector<4x1024xf32> -> vector<4x1024xf32>
    %c0_4 = arith.constant 0 : index
    %c0_5 = arith.constant 0 : index
    %5 = vector.load %arg4[%c0_4, %c0_5] : memref<4x1xf32, #tpu.memory_space<vmem>>, vector<4x1xf32>
    %6 = vector.broadcast %5 : vector<4x1xf32> to vector<4x1024xf32>
    %7 = arith.addf %4, %6 : vector<4x1024xf32>
    %8 = arith.truncf %7 : vector<4x1024xf32> to vector<4x1024xbf16>
    %c0_6 = arith.constant 0 : index
    %c0_7 = arith.constant 0 : index
    %c0_8 = arith.constant 0 : index
    %9 = vector.load %arg5[%c0_6, %c0_7, %c0_8] : memref<1x4x1024xbf16, #tpu.memory_space<vmem>>, vector<1x4x1024xbf16>
    %10 = vector.shape_cast %9 : vector<1x4x1024xbf16> to vector<4x1024xbf16>
    %11 = vector.shape_cast %8 : vector<4x1024xbf16> to vector<1x4x1024xbf16>
    tpu.vector_store %arg5[%c0_6, %c0_7, %c0_8], %11 {strides = array<i32>} : memref<1x4x1024xbf16, #tpu.memory_space<vmem>>, vector<1x4x1024xbf16>,
    return
  }
  func.func @transform_0(%arg0: i32, %arg1: i32) -> (i32, i32) {
    %c0_i32 = arith.constant 0 : i32
    %c0_i32_0 = arith.constant 0 : i32
    %c0_i32_1 = arith.constant 0 : i32
    return %c0_i32, %c0_i32_0 : i32, i32
  }
  func.func @transform_1(%arg0: i32, %arg1: i32) -> (i32, i32, i32) {
    %c0_i32 = arith.constant 0 : i32
    %c0_i32_0 = arith.constant 0 : i32
    return %arg0, %c0_i32, %arg1 : i32, i32, i32
  }
  func.func @transform_2(%arg0: i32, %arg1: i32) -> (i32, i32) {
    %c0_i32 = arith.constant 0 : i32
    %c0_i32_0 = arith.constant 0 : i32
    %c0_i32_1 = arith.constant 0 : i32
    return %c0_i32, %c0_i32_0 : i32, i32
  }
  func.func @transform_3(%arg0: i32, %arg1: i32) -> (i32, i32, i32) {
    %c0_i32 = arith.constant 0 : i32
    %c0_i32_0 = arith.constant 0 : i32
    return %arg0, %c0_i32, %arg1 : i32, i32, i32
  }
}

module attributes {stable_mosaic.version = 11 : i64} {
  func.func @_wx_kernel(%arg0: i32, %arg1: i32, %arg2: memref<4x36xbf16, #tpu.memory_space<vmem>>, %arg3: memref<1x36x225xbf16, #tpu.memory_space<vmem>>, %arg4: memref<4x1xf32, #tpu.memory_space<vmem>>, %arg5: memref<1x4x225xbf16, #tpu.memory_space<vmem>>) attributes {dimension_semantics = [#tpu.dimension_semantics<parallel>, #tpu.dimension_semantics<parallel>], iteration_bounds = array<i64: 2, 1>, scalar_prefetch = 0 : i64, scratch_operands = 0 : i64, tpu.core_type = #tpu.core_type<tc>, window_params = [{pipeline_mode = #tpu.pipeline_mode<synchronous>, transform_indices = @transform_0, window_bounds = array<i64: 4, 36>}, {transform_indices = @transform_1, window_bounds = array<i64: 1, 36, 225>}, {pipeline_mode = #tpu.pipeline_mode<synchronous>, transform_indices = @transform_2, window_bounds = array<i64: 4, 1>}, {transform_indices = @transform_3, window_bounds = array<i64: 1, 4, 225>}]} {
    %c0 = arith.constant 0 : index
    %c0_0 = arith.constant 0 : index
    %c0_1 = arith.constant 0 : index
    %0 = vector.load %arg3[%c0, %c0_0, %c0_1] : memref<1x36x225xbf16, #tpu.memory_space<vmem>>, vector<1x36x225xbf16>
    %1 = vector.shape_cast %0 : vector<1x36x225xbf16> to vector<36x225xbf16>
    %c0_2 = arith.constant 0 : index
    %c0_3 = arith.constant 0 : index
    %2 = vector.load %arg2[%c0_2, %c0_3] : memref<4x36xbf16, #tpu.memory_space<vmem>>, vector<4x36xbf16>
    %cst = arith.constant dense<0.000000e+00> : vector<4x225xf32>
    %3 = tpu.matmul %2, %1, %cst {dimension_numbers = #tpu.dot_dimension_numbers<[1], [0], [0], [1], [0, 0, 1, 1], [], []>} : vector<4x36xbf16>, vector<36x225xbf16>, vector<4x225xf32> -> vector<4x225xf32>
    %c0_4 = arith.constant 0 : index
    %c0_5 = arith.constant 0 : index
    %4 = vector.load %arg4[%c0_4, %c0_5] : memref<4x1xf32, #tpu.memory_space<vmem>>, vector<4x1xf32>
    %5 = vector.broadcast %4 : vector<4x1xf32> to vector<4x225xf32>
    %6 = arith.addf %3, %5 : vector<4x225xf32>
    %7 = arith.truncf %6 : vector<4x225xf32> to vector<4x225xbf16>
    %c0_6 = arith.constant 0 : index
    %c0_7 = arith.constant 0 : index
    %c0_8 = arith.constant 0 : index
    %8 = vector.load %arg5[%c0_6, %c0_7, %c0_8] : memref<1x4x225xbf16, #tpu.memory_space<vmem>>, vector<1x4x225xbf16>
    %9 = vector.shape_cast %8 : vector<1x4x225xbf16> to vector<4x225xbf16>
    %10 = vector.shape_cast %7 : vector<4x225xbf16> to vector<1x4x225xbf16>
    tpu.vector_store %arg5[%c0_6, %c0_7, %c0_8], %10 {strides = array<i32>} : memref<1x4x225xbf16, #tpu.memory_space<vmem>>, vector<1x4x225xbf16>,
    return
  }
  func.func @transform_0(%arg0: i32, %arg1: i32) -> (i32, i32) {
    %c0_i32 = arith.constant 0 : i32
    %c0_i32_0 = arith.constant 0 : i32
    %c0_i32_1 = arith.constant 0 : i32
    return %c0_i32, %c0_i32_0 : i32, i32
  }
  func.func @transform_1(%arg0: i32, %arg1: i32) -> (i32, i32, i32) {
    %c0_i32 = arith.constant 0 : i32
    %c0_i32_0 = arith.constant 0 : i32
    return %arg0, %c0_i32, %arg1 : i32, i32, i32
  }
  func.func @transform_2(%arg0: i32, %arg1: i32) -> (i32, i32) {
    %c0_i32 = arith.constant 0 : i32
    %c0_i32_0 = arith.constant 0 : i32
    %c0_i32_1 = arith.constant 0 : i32
    return %c0_i32, %c0_i32_0 : i32, i32
  }
  func.func @transform_3(%arg0: i32, %arg1: i32) -> (i32, i32, i32) {
    %c0_i32 = arith.constant 0 : i32
    %c0_i32_0 = arith.constant 0 : i32
    return %arg0, %c0_i32, %arg1 : i32, i32, i32
  }
}

module attributes {stable_mosaic.version = 11 : i64} {
  func.func @_tapmax_kernel(%arg0: i32, %arg1: i32, %arg2: memref<1x7x4x45xbf16, #tpu.memory_space<vmem>>, %arg3: memref<1x4x45xbf16, #tpu.memory_space<vmem>>) attributes {dimension_semantics = [#tpu.dimension_semantics<parallel>, #tpu.dimension_semantics<parallel>], iteration_bounds = array<i64: 2, 1>, scalar_prefetch = 0 : i64, scratch_operands = 0 : i64, tpu.core_type = #tpu.core_type<tc>, window_params = [{transform_indices = @transform_0, window_bounds = array<i64: 1, 7, 4, 45>}, {transform_indices = @transform_1, window_bounds = array<i64: 1, 4, 45>}]} {
    %c0 = arith.constant 0 : index
    %c0_0 = arith.constant 0 : index
    %c0_1 = arith.constant 0 : index
    %c0_2 = arith.constant 0 : index
    %0 = vector.load %arg2[%c0, %c0_0, %c0_1, %c0_2] : memref<1x7x4x45xbf16, #tpu.memory_space<vmem>>, vector<1x1x4x45xbf16>
    %1 = vector.shape_cast %0 : vector<1x1x4x45xbf16> to vector<4x45xbf16>
    %2 = arith.extf %1 : vector<4x45xbf16> to vector<4x45xf32>
    %c0_3 = arith.constant 0 : index
    %c1 = arith.constant 1 : index
    %c0_4 = arith.constant 0 : index
    %c0_5 = arith.constant 0 : index
    %3 = vector.load %arg2[%c0_3, %c1, %c0_4, %c0_5] : memref<1x7x4x45xbf16, #tpu.memory_space<vmem>>, vector<1x1x4x45xbf16>
    %4 = vector.shape_cast %3 : vector<1x1x4x45xbf16> to vector<4x45xbf16>
    %5 = arith.extf %4 : vector<4x45xbf16> to vector<4x45xf32>
    %6 = arith.maximumf %2, %5 : vector<4x45xf32>
    %c0_6 = arith.constant 0 : index
    %c2 = arith.constant 2 : index
    %c0_7 = arith.constant 0 : index
    %c0_8 = arith.constant 0 : index
    %7 = vector.load %arg2[%c0_6, %c2, %c0_7, %c0_8] : memref<1x7x4x45xbf16, #tpu.memory_space<vmem>>, vector<1x1x4x45xbf16>
    %8 = vector.shape_cast %7 : vector<1x1x4x45xbf16> to vector<4x45xbf16>
    %9 = arith.extf %8 : vector<4x45xbf16> to vector<4x45xf32>
    %10 = arith.maximumf %6, %9 : vector<4x45xf32>
    %c0_9 = arith.constant 0 : index
    %c3 = arith.constant 3 : index
    %c0_10 = arith.constant 0 : index
    %c0_11 = arith.constant 0 : index
    %11 = vector.load %arg2[%c0_9, %c3, %c0_10, %c0_11] : memref<1x7x4x45xbf16, #tpu.memory_space<vmem>>, vector<1x1x4x45xbf16>
    %12 = vector.shape_cast %11 : vector<1x1x4x45xbf16> to vector<4x45xbf16>
    %13 = arith.extf %12 : vector<4x45xbf16> to vector<4x45xf32>
    %14 = arith.maximumf %10, %13 : vector<4x45xf32>
    %c0_12 = arith.constant 0 : index
    %c4 = arith.constant 4 : index
    %c0_13 = arith.constant 0 : index
    %c0_14 = arith.constant 0 : index
    %15 = vector.load %arg2[%c0_12, %c4, %c0_13, %c0_14] : memref<1x7x4x45xbf16, #tpu.memory_space<vmem>>, vector<1x1x4x45xbf16>
    %16 = vector.shape_cast %15 : vector<1x1x4x45xbf16> to vector<4x45xbf16>
    %17 = arith.extf %16 : vector<4x45xbf16> to vector<4x45xf32>
    %18 = arith.maximumf %14, %17 : vector<4x45xf32>
    %c0_15 = arith.constant 0 : index
    %c5 = arith.constant 5 : index
    %c0_16 = arith.constant 0 : index
    %c0_17 = arith.constant 0 : index
    %19 = vector.load %arg2[%c0_15, %c5, %c0_16, %c0_17] : memref<1x7x4x45xbf16, #tpu.memory_space<vmem>>, vector<1x1x4x45xbf16>
    %20 = vector.shape_cast %19 : vector<1x1x4x45xbf16> to vector<4x45xbf16>
    %21 = arith.extf %20 : vector<4x45xbf16> to vector<4x45xf32>
    %22 = arith.maximumf %18, %21 : vector<4x45xf32>
    %c0_18 = arith.constant 0 : index
    %c6 = arith.constant 6 : index
    %c0_19 = arith.constant 0 : index
    %c0_20 = arith.constant 0 : index
    %23 = vector.load %arg2[%c0_18, %c6, %c0_19, %c0_20] : memref<1x7x4x45xbf16, #tpu.memory_space<vmem>>, vector<1x1x4x45xbf16>
    %24 = vector.shape_cast %23 : vector<1x1x4x45xbf16> to vector<4x45xbf16>
    %25 = arith.extf %24 : vector<4x45xbf16> to vector<4x45xf32>
    %26 = arith.maximumf %22, %25 : vector<4x45xf32>
    %27 = arith.truncf %26 : vector<4x45xf32> to vector<4x45xbf16>
    %c0_21 = arith.constant 0 : index
    %c0_22 = arith.constant 0 : index
    %c0_23 = arith.constant 0 : index
    %28 = vector.load %arg3[%c0_21, %c0_22, %c0_23] : memref<1x4x45xbf16, #tpu.memory_space<vmem>>, vector<1x4x45xbf16>
    %29 = vector.shape_cast %28 : vector<1x4x45xbf16> to vector<4x45xbf16>
    %30 = vector.shape_cast %27 : vector<4x45xbf16> to vector<1x4x45xbf16>
    tpu.vector_store %arg3[%c0_21, %c0_22, %c0_23], %30 {strides = array<i32>} : memref<1x4x45xbf16, #tpu.memory_space<vmem>>, vector<1x4x45xbf16>,
    return
  }
  func.func @transform_0(%arg0: i32, %arg1: i32) -> (i32, i32, i32, i32) {
    %c0_i32 = arith.constant 0 : i32
    %c0_i32_0 = arith.constant 0 : i32
    %c0_i32_1 = arith.constant 0 : i32
    return %arg0, %c0_i32, %c0_i32_0, %arg1 : i32, i32, i32, i32
  }
  func.func @transform_1(%arg0: i32, %arg1: i32) -> (i32, i32, i32) {
    %c0_i32 = arith.constant 0 : i32
    %c0_i32_0 = arith.constant 0 : i32
    return %arg0, %c0_i32, %arg1 : i32, i32, i32
  }
}

module attributes {stable_mosaic.version = 11 : i64} {
  func.func @_tapmax_kernel(%arg0: i32, %arg1: i32, %arg2: memref<1x7x4x9xbf16, #tpu.memory_space<vmem>>, %arg3: memref<1x4x9xbf16, #tpu.memory_space<vmem>>) attributes {dimension_semantics = [#tpu.dimension_semantics<parallel>, #tpu.dimension_semantics<parallel>], iteration_bounds = array<i64: 2, 1>, scalar_prefetch = 0 : i64, scratch_operands = 0 : i64, tpu.core_type = #tpu.core_type<tc>, window_params = [{transform_indices = @transform_0, window_bounds = array<i64: 1, 7, 4, 9>}, {transform_indices = @transform_1, window_bounds = array<i64: 1, 4, 9>}]} {
    %c0 = arith.constant 0 : index
    %c0_0 = arith.constant 0 : index
    %c0_1 = arith.constant 0 : index
    %c0_2 = arith.constant 0 : index
    %0 = vector.load %arg2[%c0, %c0_0, %c0_1, %c0_2] : memref<1x7x4x9xbf16, #tpu.memory_space<vmem>>, vector<1x1x4x9xbf16>
    %1 = vector.shape_cast %0 : vector<1x1x4x9xbf16> to vector<4x9xbf16>
    %2 = arith.extf %1 : vector<4x9xbf16> to vector<4x9xf32>
    %c0_3 = arith.constant 0 : index
    %c1 = arith.constant 1 : index
    %c0_4 = arith.constant 0 : index
    %c0_5 = arith.constant 0 : index
    %3 = vector.load %arg2[%c0_3, %c1, %c0_4, %c0_5] : memref<1x7x4x9xbf16, #tpu.memory_space<vmem>>, vector<1x1x4x9xbf16>
    %4 = vector.shape_cast %3 : vector<1x1x4x9xbf16> to vector<4x9xbf16>
    %5 = arith.extf %4 : vector<4x9xbf16> to vector<4x9xf32>
    %6 = arith.maximumf %2, %5 : vector<4x9xf32>
    %c0_6 = arith.constant 0 : index
    %c2 = arith.constant 2 : index
    %c0_7 = arith.constant 0 : index
    %c0_8 = arith.constant 0 : index
    %7 = vector.load %arg2[%c0_6, %c2, %c0_7, %c0_8] : memref<1x7x4x9xbf16, #tpu.memory_space<vmem>>, vector<1x1x4x9xbf16>
    %8 = vector.shape_cast %7 : vector<1x1x4x9xbf16> to vector<4x9xbf16>
    %9 = arith.extf %8 : vector<4x9xbf16> to vector<4x9xf32>
    %10 = arith.maximumf %6, %9 : vector<4x9xf32>
    %c0_9 = arith.constant 0 : index
    %c3 = arith.constant 3 : index
    %c0_10 = arith.constant 0 : index
    %c0_11 = arith.constant 0 : index
    %11 = vector.load %arg2[%c0_9, %c3, %c0_10, %c0_11] : memref<1x7x4x9xbf16, #tpu.memory_space<vmem>>, vector<1x1x4x9xbf16>
    %12 = vector.shape_cast %11 : vector<1x1x4x9xbf16> to vector<4x9xbf16>
    %13 = arith.extf %12 : vector<4x9xbf16> to vector<4x9xf32>
    %14 = arith.maximumf %10, %13 : vector<4x9xf32>
    %c0_12 = arith.constant 0 : index
    %c4 = arith.constant 4 : index
    %c0_13 = arith.constant 0 : index
    %c0_14 = arith.constant 0 : index
    %15 = vector.load %arg2[%c0_12, %c4, %c0_13, %c0_14] : memref<1x7x4x9xbf16, #tpu.memory_space<vmem>>, vector<1x1x4x9xbf16>
    %16 = vector.shape_cast %15 : vector<1x1x4x9xbf16> to vector<4x9xbf16>
    %17 = arith.extf %16 : vector<4x9xbf16> to vector<4x9xf32>
    %18 = arith.maximumf %14, %17 : vector<4x9xf32>
    %c0_15 = arith.constant 0 : index
    %c5 = arith.constant 5 : index
    %c0_16 = arith.constant 0 : index
    %c0_17 = arith.constant 0 : index
    %19 = vector.load %arg2[%c0_15, %c5, %c0_16, %c0_17] : memref<1x7x4x9xbf16, #tpu.memory_space<vmem>>, vector<1x1x4x9xbf16>
    %20 = vector.shape_cast %19 : vector<1x1x4x9xbf16> to vector<4x9xbf16>
    %21 = arith.extf %20 : vector<4x9xbf16> to vector<4x9xf32>
    %22 = arith.maximumf %18, %21 : vector<4x9xf32>
    %c0_18 = arith.constant 0 : index
    %c6 = arith.constant 6 : index
    %c0_19 = arith.constant 0 : index
    %c0_20 = arith.constant 0 : index
    %23 = vector.load %arg2[%c0_18, %c6, %c0_19, %c0_20] : memref<1x7x4x9xbf16, #tpu.memory_space<vmem>>, vector<1x1x4x9xbf16>
    %24 = vector.shape_cast %23 : vector<1x1x4x9xbf16> to vector<4x9xbf16>
    %25 = arith.extf %24 : vector<4x9xbf16> to vector<4x9xf32>
    %26 = arith.maximumf %22, %25 : vector<4x9xf32>
    %27 = arith.truncf %26 : vector<4x9xf32> to vector<4x9xbf16>
    %c0_21 = arith.constant 0 : index
    %c0_22 = arith.constant 0 : index
    %c0_23 = arith.constant 0 : index
    %28 = vector.load %arg3[%c0_21, %c0_22, %c0_23] : memref<1x4x9xbf16, #tpu.memory_space<vmem>>, vector<1x4x9xbf16>
    %29 = vector.shape_cast %28 : vector<1x4x9xbf16> to vector<4x9xbf16>
    %30 = vector.shape_cast %27 : vector<4x9xbf16> to vector<1x4x9xbf16>
    tpu.vector_store %arg3[%c0_21, %c0_22, %c0_23], %30 {strides = array<i32>} : memref<1x4x9xbf16, #tpu.memory_space<vmem>>, vector<1x4x9xbf16>,
    return
  }
  func.func @transform_0(%arg0: i32, %arg1: i32) -> (i32, i32, i32, i32) {
    %c0_i32 = arith.constant 0 : i32
    %c0_i32_0 = arith.constant 0 : i32
    %c0_i32_1 = arith.constant 0 : i32
    return %arg0, %c0_i32, %c0_i32_0, %arg1 : i32, i32, i32, i32
  }
  func.func @transform_1(%arg0: i32, %arg1: i32) -> (i32, i32, i32) {
    %c0_i32 = arith.constant 0 : i32
    %c0_i32_0 = arith.constant 0 : i32
    return %arg0, %c0_i32, %arg1 : i32, i32, i32
  }
}

module attributes {stable_mosaic.version = 11 : i64} {
  func.func @_wx_kernel(%arg0: i32, %arg1: i32, %arg2: memref<4x36xbf16, #tpu.memory_space<vmem>>, %arg3: memref<1x36x9xbf16, #tpu.memory_space<vmem>>, %arg4: memref<4x1xf32, #tpu.memory_space<vmem>>, %arg5: memref<1x4x9xbf16, #tpu.memory_space<vmem>>) attributes {dimension_semantics = [#tpu.dimension_semantics<parallel>, #tpu.dimension_semantics<parallel>], iteration_bounds = array<i64: 2, 1>, scalar_prefetch = 0 : i64, scratch_operands = 0 : i64, tpu.core_type = #tpu.core_type<tc>, window_params = [{pipeline_mode = #tpu.pipeline_mode<synchronous>, transform_indices = @transform_0, window_bounds = array<i64: 4, 36>}, {transform_indices = @transform_1, window_bounds = array<i64: 1, 36, 9>}, {pipeline_mode = #tpu.pipeline_mode<synchronous>, transform_indices = @transform_2, window_bounds = array<i64: 4, 1>}, {transform_indices = @transform_3, window_bounds = array<i64: 1, 4, 9>}]} {
    %c0 = arith.constant 0 : index
    %c0_0 = arith.constant 0 : index
    %c0_1 = arith.constant 0 : index
    %0 = vector.load %arg3[%c0, %c0_0, %c0_1] : memref<1x36x9xbf16, #tpu.memory_space<vmem>>, vector<1x36x9xbf16>
    %1 = vector.shape_cast %0 : vector<1x36x9xbf16> to vector<36x9xbf16>
    %c0_2 = arith.constant 0 : index
    %c0_3 = arith.constant 0 : index
    %2 = vector.load %arg2[%c0_2, %c0_3] : memref<4x36xbf16, #tpu.memory_space<vmem>>, vector<4x36xbf16>
    %cst = arith.constant dense<0.000000e+00> : vector<4x9xf32>
    %3 = tpu.matmul %2, %1, %cst {dimension_numbers = #tpu.dot_dimension_numbers<[1], [0], [0], [1], [0, 0, 1, 1], [], []>} : vector<4x36xbf16>, vector<36x9xbf16>, vector<4x9xf32> -> vector<4x9xf32>
    %c0_4 = arith.constant 0 : index
    %c0_5 = arith.constant 0 : index
    %4 = vector.load %arg4[%c0_4, %c0_5] : memref<4x1xf32, #tpu.memory_space<vmem>>, vector<4x1xf32>
    %5 = vector.broadcast %4 : vector<4x1xf32> to vector<4x9xf32>
    %6 = arith.addf %3, %5 : vector<4x9xf32>
    %cst_6 = arith.constant 0.000000e+00 : f32
    %7 = vector.broadcast %cst_6 : f32 to vector<4x9xf32>
    %8 = arith.maximumf %6, %7 : vector<4x9xf32>
    %9 = arith.truncf %8 : vector<4x9xf32> to vector<4x9xbf16>
    %c0_7 = arith.constant 0 : index
    %c0_8 = arith.constant 0 : index
    %c0_9 = arith.constant 0 : index
    %10 = vector.load %arg5[%c0_7, %c0_8, %c0_9] : memref<1x4x9xbf16, #tpu.memory_space<vmem>>, vector<1x4x9xbf16>
    %11 = vector.shape_cast %10 : vector<1x4x9xbf16> to vector<4x9xbf16>
    %12 = vector.shape_cast %9 : vector<4x9xbf16> to vector<1x4x9xbf16>
    tpu.vector_store %arg5[%c0_7, %c0_8, %c0_9], %12 {strides = array<i32>} : memref<1x4x9xbf16, #tpu.memory_space<vmem>>, vector<1x4x9xbf16>,
    return
  }
  func.func @transform_0(%arg0: i32, %arg1: i32) -> (i32, i32) {
    %c0_i32 = arith.constant 0 : i32
    %c0_i32_0 = arith.constant 0 : i32
    %c0_i32_1 = arith.constant 0 : i32
    return %c0_i32, %c0_i32_0 : i32, i32
  }
  func.func @transform_1(%arg0: i32, %arg1: i32) -> (i32, i32, i32) {
    %c0_i32 = arith.constant 0 : i32
    %c0_i32_0 = arith.constant 0 : i32
    return %arg0, %c0_i32, %arg1 : i32, i32, i32
  }
  func.func @transform_2(%arg0: i32, %arg1: i32) -> (i32, i32) {
    %c0_i32 = arith.constant 0 : i32
    %c0_i32_0 = arith.constant 0 : i32
    %c0_i32_1 = arith.constant 0 : i32
    return %c0_i32, %c0_i32_0 : i32, i32
  }
  func.func @transform_3(%arg0: i32, %arg1: i32) -> (i32, i32, i32) {
    %c0_i32 = arith.constant 0 : i32
    %c0_i32_0 = arith.constant 0 : i32
    return %arg0, %c0_i32, %arg1 : i32, i32, i32
  }
}

module attributes {stable_mosaic.version = 11 : i64} {
  func.func @_wx_kernel(%arg0: i32, %arg1: i32, %arg2: memref<4x36xbf16, #tpu.memory_space<vmem>>, %arg3: memref<1x36x9xbf16, #tpu.memory_space<vmem>>, %arg4: memref<4x1xf32, #tpu.memory_space<vmem>>, %arg5: memref<1x4x9xbf16, #tpu.memory_space<vmem>>) attributes {dimension_semantics = [#tpu.dimension_semantics<parallel>, #tpu.dimension_semantics<parallel>], iteration_bounds = array<i64: 2, 1>, scalar_prefetch = 0 : i64, scratch_operands = 0 : i64, tpu.core_type = #tpu.core_type<tc>, window_params = [{pipeline_mode = #tpu.pipeline_mode<synchronous>, transform_indices = @transform_0, window_bounds = array<i64: 4, 36>}, {transform_indices = @transform_1, window_bounds = array<i64: 1, 36, 9>}, {pipeline_mode = #tpu.pipeline_mode<synchronous>, transform_indices = @transform_2, window_bounds = array<i64: 4, 1>}, {transform_indices = @transform_3, window_bounds = array<i64: 1, 4, 9>}]} {
    %c0 = arith.constant 0 : index
    %c0_0 = arith.constant 0 : index
    %c0_1 = arith.constant 0 : index
    %0 = vector.load %arg3[%c0, %c0_0, %c0_1] : memref<1x36x9xbf16, #tpu.memory_space<vmem>>, vector<1x36x9xbf16>
    %1 = vector.shape_cast %0 : vector<1x36x9xbf16> to vector<36x9xbf16>
    %c0_2 = arith.constant 0 : index
    %c0_3 = arith.constant 0 : index
    %2 = vector.load %arg2[%c0_2, %c0_3] : memref<4x36xbf16, #tpu.memory_space<vmem>>, vector<4x36xbf16>
    %cst = arith.constant dense<0.000000e+00> : vector<4x9xf32>
    %3 = tpu.matmul %2, %1, %cst {dimension_numbers = #tpu.dot_dimension_numbers<[1], [0], [0], [1], [0, 0, 1, 1], [], []>} : vector<4x36xbf16>, vector<36x9xbf16>, vector<4x9xf32> -> vector<4x9xf32>
    %c0_4 = arith.constant 0 : index
    %c0_5 = arith.constant 0 : index
    %4 = vector.load %arg4[%c0_4, %c0_5] : memref<4x1xf32, #tpu.memory_space<vmem>>, vector<4x1xf32>
    %5 = vector.broadcast %4 : vector<4x1xf32> to vector<4x9xf32>
    %6 = arith.addf %3, %5 : vector<4x9xf32>
    %7 = arith.truncf %6 : vector<4x9xf32> to vector<4x9xbf16>
    %c0_6 = arith.constant 0 : index
    %c0_7 = arith.constant 0 : index
    %c0_8 = arith.constant 0 : index
    %8 = vector.load %arg5[%c0_6, %c0_7, %c0_8] : memref<1x4x9xbf16, #tpu.memory_space<vmem>>, vector<1x4x9xbf16>
    %9 = vector.shape_cast %8 : vector<1x4x9xbf16> to vector<4x9xbf16>
    %10 = vector.shape_cast %7 : vector<4x9xbf16> to vector<1x4x9xbf16>
    tpu.vector_store %arg5[%c0_6, %c0_7, %c0_8], %10 {strides = array<i32>} : memref<1x4x9xbf16, #tpu.memory_space<vmem>>, vector<1x4x9xbf16>,
    return
  }
  func.func @transform_0(%arg0: i32, %arg1: i32) -> (i32, i32) {
    %c0_i32 = arith.constant 0 : i32
    %c0_i32_0 = arith.constant 0 : i32
    %c0_i32_1 = arith.constant 0 : i32
    return %c0_i32, %c0_i32_0 : i32, i32
  }
  func.func @transform_1(%arg0: i32, %arg1: i32) -> (i32, i32, i32) {
    %c0_i32 = arith.constant 0 : i32
    %c0_i32_0 = arith.constant 0 : i32
    return %arg0, %c0_i32, %arg1 : i32, i32, i32
  }
  func.func @transform_2(%arg0: i32, %arg1: i32) -> (i32, i32) {
    %c0_i32 = arith.constant 0 : i32
    %c0_i32_0 = arith.constant 0 : i32
    %c0_i32_1 = arith.constant 0 : i32
    return %c0_i32, %c0_i32_0 : i32, i32
  }
  func.func @transform_3(%arg0: i32, %arg1: i32) -> (i32, i32, i32) {
    %c0_i32 = arith.constant 0 : i32
    %c0_i32_0 = arith.constant 0 : i32
    return %arg0, %c0_i32, %arg1 : i32, i32, i32
  }
}

module attributes {stable_mosaic.version = 11 : i64} {
  func.func @_wx_kernel(%arg0: i32, %arg1: i32, %arg2: memref<32x3xbf16, #tpu.memory_space<vmem>>, %arg3: memref<1x3x32xbf16, #tpu.memory_space<vmem>>, %arg4: memref<32x1xf32, #tpu.memory_space<vmem>>, %arg5: memref<1x32x32xbf16, #tpu.memory_space<vmem>>) attributes {dimension_semantics = [#tpu.dimension_semantics<parallel>, #tpu.dimension_semantics<parallel>], iteration_bounds = array<i64: 8, 1>, scalar_prefetch = 0 : i64, scratch_operands = 0 : i64, tpu.core_type = #tpu.core_type<tc>, window_params = [{pipeline_mode = #tpu.pipeline_mode<synchronous>, transform_indices = @transform_0, window_bounds = array<i64: 32, 3>}, {transform_indices = @transform_1, window_bounds = array<i64: 1, 3, 32>}, {pipeline_mode = #tpu.pipeline_mode<synchronous>, transform_indices = @transform_2, window_bounds = array<i64: 32, 1>}, {transform_indices = @transform_3, window_bounds = array<i64: 1, 32, 32>}]} {
    %c0 = arith.constant 0 : index
    %c0_0 = arith.constant 0 : index
    %c0_1 = arith.constant 0 : index
    %0 = vector.load %arg3[%c0, %c0_0, %c0_1] : memref<1x3x32xbf16, #tpu.memory_space<vmem>>, vector<1x3x32xbf16>
    %1 = vector.shape_cast %0 : vector<1x3x32xbf16> to vector<3x32xbf16>
    %c0_2 = arith.constant 0 : index
    %c0_3 = arith.constant 0 : index
    %2 = vector.load %arg2[%c0_2, %c0_3] : memref<32x3xbf16, #tpu.memory_space<vmem>>, vector<32x3xbf16>
    %cst = arith.constant dense<0.000000e+00> : vector<32x32xf32>
    %3 = tpu.matmul %2, %1, %cst {dimension_numbers = #tpu.dot_dimension_numbers<[1], [0], [0], [1], [0, 0, 1, 1], [], []>} : vector<32x3xbf16>, vector<3x32xbf16>, vector<32x32xf32> -> vector<32x32xf32>
    %c0_4 = arith.constant 0 : index
    %c0_5 = arith.constant 0 : index
    %4 = vector.load %arg4[%c0_4, %c0_5] : memref<32x1xf32, #tpu.memory_space<vmem>>, vector<32x1xf32>
    %5 = vector.broadcast %4 : vector<32x1xf32> to vector<32x32xf32>
    %6 = arith.addf %3, %5 : vector<32x32xf32>
    %7 = arith.truncf %6 : vector<32x32xf32> to vector<32x32xbf16>
    %c0_6 = arith.constant 0 : index
    %c0_7 = arith.constant 0 : index
    %c0_8 = arith.constant 0 : index
    %8 = vector.load %arg5[%c0_6, %c0_7, %c0_8] : memref<1x32x32xbf16, #tpu.memory_space<vmem>>, vector<1x32x32xbf16>
    %9 = vector.shape_cast %8 : vector<1x32x32xbf16> to vector<32x32xbf16>
    %10 = vector.shape_cast %7 : vector<32x32xbf16> to vector<1x32x32xbf16>
    tpu.vector_store %arg5[%c0_6, %c0_7, %c0_8], %10 {strides = array<i32>} : memref<1x32x32xbf16, #tpu.memory_space<vmem>>, vector<1x32x32xbf16>,
    return
  }
  func.func @transform_0(%arg0: i32, %arg1: i32) -> (i32, i32) {
    %c0_i32 = arith.constant 0 : i32
    %c0_i32_0 = arith.constant 0 : i32
    %c0_i32_1 = arith.constant 0 : i32
    return %c0_i32, %c0_i32_0 : i32, i32
  }
  func.func @transform_1(%arg0: i32, %arg1: i32) -> (i32, i32, i32) {
    %c0_i32 = arith.constant 0 : i32
    %c0_i32_0 = arith.constant 0 : i32
    return %arg0, %c0_i32, %arg1 : i32, i32, i32
  }
  func.func @transform_2(%arg0: i32, %arg1: i32) -> (i32, i32) {
    %c0_i32 = arith.constant 0 : i32
    %c0_i32_0 = arith.constant 0 : i32
    %c0_i32_1 = arith.constant 0 : i32
    return %c0_i32, %c0_i32_0 : i32, i32
  }
  func.func @transform_3(%arg0: i32, %arg1: i32) -> (i32, i32, i32) {
    %c0_i32 = arith.constant 0 : i32
    %c0_i32_0 = arith.constant 0 : i32
    return %arg0, %c0_i32, %arg1 : i32, i32, i32
  }
}

module attributes {stable_mosaic.version = 11 : i64} {
  func.func @_xw_kernel(%arg0: i32, %arg1: memref<1x12x3xbf16, #tpu.memory_space<vmem>>, %arg2: memref<3x32xbf16, #tpu.memory_space<vmem>>, %arg3: memref<1x12x32xbf16, #tpu.memory_space<vmem>>) attributes {dimension_semantics = [#tpu.dimension_semantics<parallel>], iteration_bounds = array<i64: 2>, scalar_prefetch = 0 : i64, scratch_operands = 0 : i64, tpu.core_type = #tpu.core_type<tc>, window_params = [{transform_indices = @transform_0, window_bounds = array<i64: 1, 12, 3>}, {pipeline_mode = #tpu.pipeline_mode<synchronous>, transform_indices = @transform_1, window_bounds = array<i64: 3, 32>}, {transform_indices = @transform_2, window_bounds = array<i64: 1, 12, 32>}]} {
    %c0 = arith.constant 0 : index
    %c0_0 = arith.constant 0 : index
    %c0_1 = arith.constant 0 : index
    %0 = vector.load %arg1[%c0, %c0_0, %c0_1] : memref<1x12x3xbf16, #tpu.memory_space<vmem>>, vector<1x12x3xbf16>
    %1 = vector.shape_cast %0 : vector<1x12x3xbf16> to vector<12x3xbf16>
    %c0_2 = arith.constant 0 : index
    %c0_3 = arith.constant 0 : index
    %2 = vector.load %arg2[%c0_2, %c0_3] : memref<3x32xbf16, #tpu.memory_space<vmem>>, vector<3x32xbf16>
    %cst = arith.constant dense<0.000000e+00> : vector<12x32xf32>
    %3 = tpu.matmul %1, %2, %cst {dimension_numbers = #tpu.dot_dimension_numbers<[1], [0], [0], [1], [0, 0, 1, 1], [], []>} : vector<12x3xbf16>, vector<3x32xbf16>, vector<12x32xf32> -> vector<12x32xf32>
    %4 = arith.truncf %3 : vector<12x32xf32> to vector<12x32xbf16>
    %c0_4 = arith.constant 0 : index
    %c0_5 = arith.constant 0 : index
    %c0_6 = arith.constant 0 : index
    %5 = vector.load %arg3[%c0_4, %c0_5, %c0_6] : memref<1x12x32xbf16, #tpu.memory_space<vmem>>, vector<1x12x32xbf16>
    %6 = vector.shape_cast %5 : vector<1x12x32xbf16> to vector<12x32xbf16>
    %7 = vector.shape_cast %4 : vector<12x32xbf16> to vector<1x12x32xbf16>
    tpu.vector_store %arg3[%c0_4, %c0_5, %c0_6], %7 {strides = array<i32>} : memref<1x12x32xbf16, #tpu.memory_space<vmem>>, vector<1x12x32xbf16>,
    return
  }
  func.func @transform_0(%arg0: i32) -> (i32, i32, i32) {
    %c0_i32 = arith.constant 0 : i32
    %c0_i32_0 = arith.constant 0 : i32
    %c0_i32_1 = arith.constant 0 : i32
    return %arg0, %c0_i32, %c0_i32_0 : i32, i32, i32
  }
  func.func @transform_1(%arg0: i32) -> (i32, i32) {
    %c0_i32 = arith.constant 0 : i32
    %c0_i32_0 = arith.constant 0 : i32
    %c0_i32_1 = arith.constant 0 : i32
    return %c0_i32, %c0_i32_0 : i32, i32
  }
  func.func @transform_2(%arg0: i32) -> (i32, i32, i32) {
    %c0_i32 = arith.constant 0 : i32
    %c0_i32_0 = arith.constant 0 : i32
    %c0_i32_1 = arith.constant 0 : i32
    return %arg0, %c0_i32, %c0_i32_0 : i32, i32, i32
  }
}

module attributes {stable_mosaic.version = 11 : i64} {
  func.func @_esa_gate_kernel(%arg0: i32, %arg1: i32, %arg2: memref<1x16x1024xf32, #tpu.memory_space<vmem>>, %arg3: memref<1x4x1024xbf16, #tpu.memory_space<vmem>>, %arg4: memref<16x4xbf16, #tpu.memory_space<vmem>>, %arg5: memref<16x16xbf16, #tpu.memory_space<vmem>>, %arg6: memref<16x1xf32, #tpu.memory_space<vmem>>, %arg7: memref<1x16x1024xf32, #tpu.memory_space<vmem>>) attributes {dimension_semantics = [#tpu.dimension_semantics<parallel>, #tpu.dimension_semantics<parallel>], iteration_bounds = array<i64: 2, 1>, scalar_prefetch = 0 : i64, scratch_operands = 0 : i64, tpu.core_type = #tpu.core_type<tc>, window_params = [{transform_indices = @transform_0, window_bounds = array<i64: 1, 16, 1024>}, {transform_indices = @transform_1, window_bounds = array<i64: 1, 4, 1024>}, {pipeline_mode = #tpu.pipeline_mode<synchronous>, transform_indices = @transform_2, window_bounds = array<i64: 16, 4>}, {pipeline_mode = #tpu.pipeline_mode<synchronous>, transform_indices = @transform_3, window_bounds = array<i64: 16, 16>}, {pipeline_mode = #tpu.pipeline_mode<synchronous>, transform_indices = @transform_4, window_bounds = array<i64: 16, 1>}, {transform_indices = @transform_5, window_bounds = array<i64: 1, 16, 1024>}]} {
    %c0 = arith.constant 0 : index
    %c0_0 = arith.constant 0 : index
    %c0_1 = arith.constant 0 : index
    %0 = vector.load %arg2[%c0, %c0_0, %c0_1] : memref<1x16x1024xf32, #tpu.memory_space<vmem>>, vector<1x16x1024xf32>
    %1 = vector.shape_cast %0 : vector<1x16x1024xf32> to vector<16x1024xf32>
    %c0_2 = arith.constant 0 : index
    %c0_3 = arith.constant 0 : index
    %2 = vector.load %arg4[%c0_2, %c0_3] : memref<16x4xbf16, #tpu.memory_space<vmem>>, vector<16x4xbf16>
    %c0_4 = arith.constant 0 : index
    %c0_5 = arith.constant 0 : index
    %c0_6 = arith.constant 0 : index
    %3 = vector.load %arg3[%c0_4, %c0_5, %c0_6] : memref<1x4x1024xbf16, #tpu.memory_space<vmem>>, vector<1x4x1024xbf16>
    %4 = vector.shape_cast %3 : vector<1x4x1024xbf16> to vector<4x1024xbf16>
    %cst = arith.constant dense<0.000000e+00> : vector<16x1024xf32>
    %5 = tpu.matmul %2, %4, %cst {dimension_numbers = #tpu.dot_dimension_numbers<[1], [0], [0], [1], [0, 0, 1, 1], [], []>} : vector<16x4xbf16>, vector<4x1024xbf16>, vector<16x1024xf32> -> vector<16x1024xf32>
    %c0_7 = arith.constant 0 : index
    %c0_8 = arith.constant 0 : index
    %6 = vector.load %arg5[%c0_7, %c0_8] : memref<16x16xbf16, #tpu.memory_space<vmem>>, vector<16x16xbf16>
    %7 = arith.truncf %1 : vector<16x1024xf32> to vector<16x1024xbf16>
    %cst_9 = arith.constant dense<0.000000e+00> : vector<16x1024xf32>
    %8 = tpu.matmul %6, %7, %cst_9 {dimension_numbers = #tpu.dot_dimension_numbers<[1], [0], [0], [1], [0, 0, 1, 1], [], []>} : vector<16x16xbf16>, vector<16x1024xbf16>, vector<16x1024xf32> -> vector<16x1024xf32>
    %9 = arith.addf %5, %8 : vector<16x1024xf32>
    %c0_10 = arith.constant 0 : index
    %c0_11 = arith.constant 0 : index
    %10 = vector.load %arg6[%c0_10, %c0_11] : memref<16x1xf32, #tpu.memory_space<vmem>>, vector<16x1xf32>
    %11 = vector.broadcast %10 : vector<16x1xf32> to vector<16x1024xf32>
    %12 = arith.addf %9, %11 : vector<16x1024xf32>
    %cst_12 = arith.constant 0.000000e+00 : f32
    %13 = vector.broadcast %cst_12 : f32 to vector<16x1024xf32>
    %14 = arith.subf %13, %12 : vector<16x1024xf32>
    %15 = math.exp %14 : vector<16x1024xf32>
    %cst_13 = arith.constant 1.000000e+00 : f32
    %16 = vector.broadcast %cst_13 : f32 to vector<16x1024xf32>
    %17 = arith.addf %16, %15 : vector<16x1024xf32>
    %cst_14 = arith.constant 1.000000e+00 : f32
    %18 = vector.broadcast %cst_14 : f32 to vector<16x1024xf32>
    %19 = arith.divf %18, %17 : vector<16x1024xf32>
    %20 = arith.mulf %1, %19 : vector<16x1024xf32>
    %c0_15 = arith.constant 0 : index
    %c0_16 = arith.constant 0 : index
    %c0_17 = arith.constant 0 : index
    %21 = vector.load %arg7[%c0_15, %c0_16, %c0_17] : memref<1x16x1024xf32, #tpu.memory_space<vmem>>, vector<1x16x1024xf32>
    %22 = vector.shape_cast %21 : vector<1x16x1024xf32> to vector<16x1024xf32>
    %23 = vector.shape_cast %20 : vector<16x1024xf32> to vector<1x16x1024xf32>
    tpu.vector_store %arg7[%c0_15, %c0_16, %c0_17], %23 {strides = array<i32>} : memref<1x16x1024xf32, #tpu.memory_space<vmem>>, vector<1x16x1024xf32>,
    return
  }
  func.func @transform_0(%arg0: i32, %arg1: i32) -> (i32, i32, i32) {
    %c0_i32 = arith.constant 0 : i32
    %c0_i32_0 = arith.constant 0 : i32
    return %arg0, %c0_i32, %arg1 : i32, i32, i32
  }
  func.func @transform_1(%arg0: i32, %arg1: i32) -> (i32, i32, i32) {
    %c0_i32 = arith.constant 0 : i32
    %c0_i32_0 = arith.constant 0 : i32
    return %arg0, %c0_i32, %arg1 : i32, i32, i32
  }
  func.func @transform_2(%arg0: i32, %arg1: i32) -> (i32, i32) {
    %c0_i32 = arith.constant 0 : i32
    %c0_i32_0 = arith.constant 0 : i32
    %c0_i32_1 = arith.constant 0 : i32
    return %c0_i32, %c0_i32_0 : i32, i32
  }
  func.func @transform_3(%arg0: i32, %arg1: i32) -> (i32, i32) {
    %c0_i32 = arith.constant 0 : i32
    %c0_i32_0 = arith.constant 0 : i32
    %c0_i32_1 = arith.constant 0 : i32
    return %c0_i32, %c0_i32_0 : i32, i32
  }
  func.func @transform_4(%arg0: i32, %arg1: i32) -> (i32, i32) {
    %c0_i32 = arith.constant 0 : i32
    %c0_i32_0 = arith.constant 0 : i32
    %c0_i32_1 = arith.constant 0 : i32
    return %c0_i32, %c0_i32_0 : i32, i32
  }
  func.func @transform_5(%arg0: i32, %arg1: i32) -> (i32, i32, i32) {
    %c0_i32 = arith.constant 0 : i32
    %c0_i32_0 = arith.constant 0 : i32
    return %arg0, %c0_i32, %arg1 : i32, i32, i32
  }
}

</mosaic_0001>

<llo_original>
// kernel: _lambda_.10
$region0: #{_lambda_.10}
  #allocation0 [shape = 'u32[]', space=smem, size = 0x4, offset = 0x4, fixed_abs, tag = 'smem constant byte address 0x4 - core index']
  #allocation1 [shape = 'u32[144,128]{1,0:T(1,128)}', space=vmem, size = 0x12000, scoped, tag = 'internal scratch']
  %s0 = inlined_call_operand.vmem [shape: bf16[4,16], index: 0, kind: input, shape index: {}]
  %s1 = inlined_call_operand.vmem [shape: f32[2,16,1024], index: 1, kind: input, shape index: {}]
  %s2 = inlined_call_operand.vmem [shape: f32[4,1], index: 2, kind: input, shape index: {}]
  %s3 = inlined_call_operand.vmem [shape: bf16[2,4,1024], index: 3, kind: output, shape index: {}]
  %s4 = sld [smem:[#allocation0]]
  $region45: #{_lambda_.10} parent=0
    _
  %s6 = ssub.s32 1, %s4
  %s7 = scalar_select 0, %s6, %s4
  loop: start=0, step=1, limit=4
  $region2: #{_lambda_.10} parent=0 // loop_pre_header
    _
  $region3: #{_lambda_.10} parent=0 // loop_header
    %s9 = sphi 0, %s13
    %p10 = scmp.ge.s32.totalorder %s9, 4
    %s16 = sphi 0, %s28
    %s17 = sphi 0, %s24
    %s18 = sphi 0, %s16
    %s19 = sphi 0, %s17
    %s20 = sphi 0, %s18
    %s21 = sphi 0, %s19
    %s29 = sphi 0, %s29
    %s31 = sphi 0, %s29
    %s32 = sphi 0, %s31
    %s46 = sphi 0, %s32
    %s54 = sphi 0, %s56
    %s57 = sphi 0, %s54
    %s58 = sphi 0, %s57
    %s74 = sphi 0, %s58
    %s78 = sphi 0, %s78
    %s80 = sphi 0, %s78
    %s81 = sphi 0, %s80
    %s95 = sphi 0, %s81
    %s103 = sphi 0, %s105
    %s106 = sphi 0, %s103
    %s107 = sphi 0, %s106
    %s123 = sphi 0, %s107
  $region4: #{_lambda_.10} parent=0 // loop_header_branch
    %12 = sbr.rel (%p10) target = $region8
  $region5: #{_lambda_.10} parent=0 // loop_body
    %s14 = ssub.s32 %s9, 1
    %s15 = ssub.s32 %s9, 2
    %s22 = sadd.s32 1, %s17
    %p23 = scmp.ge.s32.totalorder %s22, 1
    %s24 = scalar_select %p23, 0, %s22
    %s25 = sadd.s32 1, %s16
    %s26 = scalar_select %p23, %s25, %s16
    %p27 = scmp.ge.s32.totalorder %s26, 2
    %s28 = scalar_select %p27, 0, %s26
    %s30 = sadd.s32 %s29, 1
    %p33 = scmp.eq.s32.totalorder %s9, 1
    %p34 = scmp.ne.s32.totalorder %s29, %s31
    %p35 = scmp.eq.s32.totalorder %s9, 0
    %p36 = por %p34, %p35
    %p37 = scmp.ne.s32.totalorder %s29, %s31
    %p38 = scmp.eq.s32.totalorder %s14, 1
    %p39 = por %p37, %p38
    %p40 = scmp.ne.s32.totalorder %s31, %s32
    %p41 = scmp.eq.s32.totalorder %s14, 0
    %p42 = por %p40, %p41
    %p43 = scmp.ne.s32.totalorder %s31, %s32
    %p44 = scmp.eq.s32.totalorder %s15, 1
    %p45 = por %p43, %p44
    %p47 = scmp.ne.s32.totalorder %s32, %s46
    %p48 = scmp.eq.s32.totalorder %s15, 0
    %p49 = por %p47, %p48
    %s50 = ssub.s32 %s16, %s28
    %s51 = ssub.s32 %s17, %s24
    %s52 = sor.u32 %s50, %s51
    %p53 = scmp.eq.s32.totalorder %s52, 0
    %s55 = sadd.s32 %s54, 1
    %s56 = scalar_select %p53, %s54, %s55
    %p59 = pneg %p53
    %p60 = scmp.eq.s32.totalorder %s9, 1
    %p61 = por %p59, %p60
    %p62 = scmp.ne.s32.totalorder %s54, %s57
    %p63 = scmp.eq.s32.totalorder %s9, 0
    %p64 = por %p62, %p63
    %p65 = scmp.ne.s32.totalorder %s54, %s57
    %p66 = scmp.eq.s32.totalorder %s14, 1
    %p67 = por %p65, %p66
    %p68 = scmp.ne.s32.totalorder %s57, %s58
    %p69 = scmp.eq.s32.totalorder %s14, 0
    %p70 = por %p68, %p69
    %p71 = scmp.ne.s32.totalorder %s57, %s58
    %p72 = scmp.eq.s32.totalorder %s15, 1
    %p73 = por %p71, %p72
    %p75 = scmp.ne.s32.totalorder %s58, %s74
    %p76 = scmp.eq.s32.totalorder %s15, 0
    %p77 = por %p75, %p76
    %s79 = sadd.s32 %s78, 1
    %p82 = scmp.eq.s32.totalorder %s9, 1
    %p83 = scmp.ne.s32.totalorder %s78, %s80
    %p84 = scmp.eq.s32.totalorder %s9, 0
    %p85 = por %p83, %p84
    %p86 = scmp.ne.s32.totalorder %s78, %s80
    %p87 = scmp.eq.s32.totalorder %s14, 1
    %p88 = por %p86, %p87
    %p89 = scmp.ne.s32.totalorder %s80, %s81
    %p90 = scmp.eq.s32.totalorder %s14, 0
    %p91 = por %p89, %p90
    %p92 = scmp.ne.s32.totalorder %s80, %s81
    %p93 = scmp.eq.s32.totalorder %s15, 1
    %p94 = por %p92, %p93
    %p96 = scmp.ne.s32.totalorder %s81, %s95
    %p97 = scmp.eq.s32.totalorder %s15, 0
    %p98 = por %p96, %p97
    %s99 = ssub.s32 %s16, %s28
    %s100 = ssub.s32 %s17, %s24
    %s101 = sor.u32 %s99, %s100
    %p102 = scmp.eq.s32.totalorder %s101, 0
    %s104 = sadd.s32 %s103, 1
    %s105 = scalar_select %p102, %s103, %s104
    %p108 = pneg %p102
    %p109 = scmp.eq.s32.totalorder %s9, 1
    %p110 = por %p108, %p109
    %p111 = scmp.ne.s32.totalorder %s103, %s106
    %p112 = scmp.eq.s32.totalorder %s9, 0
    %p113 = por %p111, %p112
    %p114 = scmp.ne.s32.totalorder %s103, %s106
    %p115 = scmp.eq.s32.totalorder %s14, 1
    %p116 = por %p114, %p115
    %p117 = scmp.ne.s32.totalorder %s106, %s107
    %p118 = scmp.eq.s32.totalorder %s14, 0
    %p119 = por %p117, %p118
    %p120 = scmp.ne.s32.totalorder %s106, %s107
    %p121 = scmp.eq.s32.totalorder %s15, 1
    %p122 = por %p120, %p121
    %p124 = scmp.ne.s32.totalorder %s107, %s123
    %p125 = scmp.eq.s32.totalorder %s15, 0
    %p126 = por %p124, %p125
    %p127 = scmp.le.s32.totalorder 1, %s9
    %p128 = scmp.lt.s32.totalorder %s9, 3
    %p129 = pnand %p127, %p128
    %p130 = pneg %p129
    // Predicated region
    $region9: #{_lambda_.10} parent=5 // pred_check
      _
    $region10: #{_lambda_.10} parent=5 // pred_check_branch
      %132 = sbr.rel (%p129) target = $region12
    $region11: #{_lambda_.10} parent=5 // pred_region
      %s133 = ssub.s32 %s9, 1
      // Predicated region
      $region13: #{_lambda_.10} parent=11 // pred_check
        %p134 = pneg %p42
      $region14: #{_lambda_.10} parent=11 // pred_check_branch
        %136 = sbr.rel (%p134) target = $region16
      $region15: #{_lambda_.10} parent=11 // pred_region
        _
      $region16: #{_lambda_.10} parent=11 // pred_fallthru
        _
      // Predicated region
      $region17: #{_lambda_.10} parent=11 // pred_check
        %p137 = pneg %p91
      $region18: #{_lambda_.10} parent=11 // pred_check_branch
        %139 = sbr.rel (%p137) target = $region20
      $region19: #{_lambda_.10} parent=11 // pred_region
        _
      $region20: #{_lambda_.10} parent=11 // pred_fallthru
        _
    $region12: #{_lambda_.10} parent=5 // pred_fallthru
      _
    %p140 = scmp.lt.s32.totalorder %s9, 2
    // Predicated region
    $region21: #{_lambda_.10} parent=5 // pred_check
      %p141 = pneg %p140
    $region22: #{_lambda_.10} parent=5 // pred_check_branch
      %143 = sbr.rel (%p141) target = $region24
    $region23: #{_lambda_.10} parent=5 // pred_region
      // Predicated region
      $region25: #{_lambda_.10} parent=23 // pred_check
        %p144 = pneg %p64
      $region26: #{_lambda_.10} parent=23 // pred_check_branch
        %146 = sbr.rel (%p144) target = $region28
      $region27: #{_lambda_.10} parent=23 // pred_region
        %s147 = smul.u32 8, %s17
        %p148 = scmp.lt.s32.totalorder %s16, 1
        %s149 = scalar_select %p148, %s16, 1
        %p150 = scmp.lt.s32.totalorder %s147, 7
        %s151 = scalar_select %p150, %s147, 7
        %s152 = smul.addr %s149, 16
        %s153 = sadd.s32 %s151, %s152
        %s154 = smul.addr %s153, 8
        %s155 = scalar_lea.vmem %s1, %s154
        %s156 = smul.u32 8, %s17
      $region28: #{_lambda_.10} parent=23 // pred_fallthru
        _
    $region24: #{_lambda_.10} parent=5 // pred_fallthru
      _
    %p157 = scmp.le.s32.totalorder 1, %s9
    %p158 = scmp.lt.s32.totalorder %s9, 3
    %p159 = pnand %p157, %p158
    %p160 = pneg %p159
    // Predicated region
    $region29: #{_lambda_.10} parent=5 // pred_check
      _
    $region30: #{_lambda_.10} parent=5 // pred_check_branch
      %162 = sbr.rel (%p159) target = $region32
    $region31: #{_lambda_.10} parent=5 // pred_region
      %s163 = ssub.s32 %s9, 1
      %p164 = pneg %p42
      %p165 = pneg %p39
      %s166 = smul.u32 8, %s19
      %p167 = scmp.lt.s32.totalorder %s18, 1
      %s168 = scalar_select %p167, %s18, 1
      %p169 = scmp.lt.s32.totalorder %s166, 7
      %s170 = scalar_select %p169, %s166, 7
      %s171 = smul.addr %s168, 16
      %s172 = sadd.s32 %s170, %s171
      %s173 = smul.addr %s172, 8
      %s174 = scalar_lea.vmem %s1, %s173
      %p175 = pneg %p70
      %p176 = pneg %p67
      %p177 = pneg %p91
      %p178 = pneg %p88
      %p179 = pneg %p119
      %p180 = pneg %p116
      %s181 = smul.u32 8, %s19
      %p182 = scmp.lt.s32.totalorder %s18, 1
      %s183 = scalar_select %p182, %s18, 1
      %p184 = scmp.lt.s32.totalorder %s181, 7
      %s185 = scalar_select %p184, %s181, 7
      %s186 = smul.addr %s183, 8
      %s187 = sadd.s32 %s185, %s186
      %s188 = smul.addr %s187, 2
      %s189 = scalar_lea.vmem %s3, %s188
      %s190 = smul.u32 8, %s19
      %p191 = scmp.lt.s32.totalorder %s18, 1
      %s192 = scalar_select %p191, %s18, 1
      %p193 = scmp.lt.s32.totalorder %s190, 7
      %s194 = scalar_select %p193, %s190, 7
      %s195 = smul.addr %s192, 16
      %s196 = sadd.s32 %s194, %s195
      %s197 = smul.addr %s196, 8
      %s198 = scalar_lea.vmem %s1, %s197
      %s199 = smul.u32 8, %s19
      %s200 = smul.u32 8, %s19
      %p201 = scmp.lt.s32.totalorder %s18, 1
      %s202 = scalar_select %p201, %s18, 1
      %p203 = scmp.lt.s32.totalorder %s200, 7
      %s204 = scalar_select %p203, %s200, 7
      %s205 = smul.addr %s202, 8
      %s206 = sadd.s32 %s204, %s205
      %s207 = smul.addr %s206, 2
      %s208 = scalar_lea.vmem %s3, %s207
      %s209 = smul.u32 8, %s19
      %v211 = vld [vmem:[%s198] sm:$0xff]
      %v212 = vld [vmem:[%s198 + $0x8] sm:$0xff]
      %v213 = vld [vmem:[%s198 + $0x10] sm:$0xff]
      %v214 = vld [vmem:[%s198 + $0x18] sm:$0xff]
      %v215 = vld [vmem:[%s198 + $0x20] sm:$0xff]
      %v216 = vld [vmem:[%s198 + $0x28] sm:$0xff]
      %v217 = vld [vmem:[%s198 + $0x30] sm:$0xff]
      %v218 = vld [vmem:[%s198 + $0x38] sm:$0xff]
      %v219 = vld [vmem:[%s198 + $0x40] sm:$0xff]
      %v220 = vld [vmem:[%s198 + $0x48] sm:$0xff]
      %v221 = vld [vmem:[%s198 + $0x50] sm:$0xff]
      %v222 = vld [vmem:[%s198 + $0x58] sm:$0xff]
      %v223 = vld [vmem:[%s198 + $0x60] sm:$0xff]
      %v224 = vld [vmem:[%s198 + $0x68] sm:$0xff]
      %v225 = vld [vmem:[%s198 + $0x70] sm:$0xff]
      %v226 = vld [vmem:[%s198 + $0x78] sm:$0xff]
      %v227 = vpack.c.bf16 %v219, %v211
      %v228 = vpack.c.bf16 %v220, %v212
      %v229 = vpack.c.bf16 %v221, %v213
      %v230 = vpack.c.bf16 %v222, %v214
      %v231 = vpack.c.bf16 %v223, %v215
      %v232 = vpack.c.bf16 %v224, %v216
      %v233 = vpack.c.bf16 %v225, %v217
      %v234 = vpack.c.bf16 %v226, %v218
      %v235 = vld [vmem:[%s0] sm:$0x3]
      %v236 = vld [vmem:[%s2] sm:$0xf]
      %238 = vset.pattern.permute.xlu0 0
      %239 = vperm.xlu0 %238, %v236
      %v240 = vpop.permute.xlu0 %239
      %vm242 = vcmask 130048
      %v244 = vsel %vm242, %v235, 0
      %246 = vmatprep.subr.bf16.mxu0 0
      %247 = vmatpush1.bf16.msra.mxu0 0
      %248 = vmatprep.subr.bf16.mxu0 0
      %249 = vmatpush1.bf16.msra.mxu0 0
      %250 = vmatprep.subr.bf16.mxu0 0
      %251 = vmatpush1.bf16.msra.mxu0 0
      %252 = vmatprep.subr.bf16.mxu0 0
      %253 = vmatpush1.bf16.msra.mxu0 0
      %254 = vmatprep.subr.bf16.mxu0 0
      %255 = vmatpush1.bf16.msra.mxu0 0
      %256 = vmatprep.subr.bf16.mxu0 0
      %257 = vmatpush1.bf16.msra.mxu0 0
      %258 = vmatprep.subr.bf16.mxu0 0
      %259 = vmatpush1.bf16.msra.mxu0 0
      %260 = vmatprep.subr.bf16.mxu0 %v228
      %261 = vmatpush1.bf16.msra.mxu0 %v227
      %262 = vmatprep.subr.bf16.mxu0 0
      %263 = vmatpush2.bf16.msra.mxu0 0
      %264 = vmatprep.subr.bf16.mxu0 0
      %265 = vmatpush2.bf16.msra.mxu0 0
      %266 = vmatprep.subr.bf16.mxu0 0
      %267 = vmatpush2.bf16.msra.mxu0 0
      %268 = vmatprep.subr.bf16.mxu0 0
      %269 = vmatpush2.bf16.msra.mxu0 0
      %270 = vmatprep.subr.bf16.mxu0 0
      %271 = vmatpush2.bf16.msra.mxu0 0
      %272 = vmatprep.subr.bf16.mxu0 0
      %273 = vmatpush2.bf16.msra.mxu0 0
      %274 = vmatprep.subr.bf16.mxu0 0
      %275 = vmatpush2.bf16.msra.mxu0 0
      %276 = vmatprep.subr.bf16.mxu0 0
      %277 = vmatpush2.bf16.msra.mxu0 0
      %278 = vmatprep.mubr.bf16.mxu0 0
      %279 = vmatmul.mubr.bf16.gmra.mxu0 %v244
      %v280 = vpop.f32.mrf.mxu0
      %v281 = vadd.f32 %v240, %v280
      %v282 = vpop.f32.mrf.mxu0
      %v283 = vadd.f32 %v240, %v282
      %v284 = vpop.f32.mrf.mxu0
      %v285 = vpop.f32.mrf.mxu0
      %286 = vdwg.mxu0
      %287 = vmatprep.subr.bf16.mxu0 0
      %288 = vmatpush1.bf16.msra.mxu0 0
      %289 = vmatprep.subr.bf16.mxu0 0
      %290 = vmatpush1.bf16.msra.mxu0 0
      %291 = vmatprep.subr.bf16.mxu0 0
      %292 = vmatpush1.bf16.msra.mxu0 0
      %293 = vmatprep.subr.bf16.mxu0 0
      %294 = vmatpush1.bf16.msra.mxu0 0
      %295 = vmatprep.subr.bf16.mxu0 0
      %296 = vmatpush1.bf16.msra.mxu0 0
      %297 = vmatprep.subr.bf16.mxu0 0
      %298 = vmatpush1.bf16.msra.mxu0 0
      %299 = vmatprep.subr.bf16.mxu0 0
      %300 = vmatpush1.bf16.msra.mxu0 0
      %301 = vmatprep.subr.bf16.mxu0 %v230
      %302 = vmatpush1.bf16.msra.mxu0 %v229
      %303 = vmatprep.subr.bf16.mxu0 0
      %304 = vmatpush2.bf16.msra.mxu0 0
      %305 = vmatprep.subr.bf16.mxu0 0
      %306 = vmatpush2.bf16.msra.mxu0 0
      %307 = vmatprep.subr.bf16.mxu0 0
      %308 = vmatpush2.bf16.msra.mxu0 0
      %309 = vmatprep.subr.bf16.mxu0 0
      %310 = vmatpush2.bf16.msra.mxu0 0
      %311 = vmatprep.subr.bf16.mxu0 0
      %312 = vmatpush2.bf16.msra.mxu0 0
      %313 = vmatprep.subr.bf16.mxu0 0
      %314 = vmatpush2.bf16.msra.mxu0 0
      %315 = vmatprep.subr.bf16.mxu0 0
      %316 = vmatpush2.bf16.msra.mxu0 0
      %317 = vmatprep.subr.bf16.mxu0 0
      %318 = vmatpush2.bf16.msra.mxu0 0
      %319 = vmatprep.mubr.bf16.mxu0 0
      %320 = vmatmul.mubr.bf16.gmra.mxu0 %v244
      %v321 = vpop.f32.mrf.mxu0
      %v322 = vadd.f32 %v240, %v321
      %v323 = vpop.f32.mrf.mxu0
      %v324 = vadd.f32 %v240, %v323
      %v325 = vpop.f32.mrf.mxu0
      %v326 = vpop.f32.mrf.mxu0
      %327 = vdwg.mxu0
      %328 = vmatprep.subr.bf16.mxu0 0
      %329 = vmatpush1.bf16.msra.mxu0 0
      %330 = vmatprep.subr.bf16.mxu0 0
      %331 = vmatpush1.bf16.msra.mxu0 0
      %332 = vmatprep.subr.bf16.mxu0 0
      %333 = vmatpush1.bf16.msra.mxu0 0
      %334 = vmatprep.subr.bf16.mxu0 0
      %335 = vmatpush1.bf16.msra.mxu0 0
      %336 = vmatprep.subr.bf16.mxu0 0
      %337 = vmatpush1.bf16.msra.mxu0 0
      %338 = vmatprep.subr.bf16.mxu0 0
      %339 = vmatpush1.bf16.msra.mxu0 0
      %340 = vmatprep.subr.bf16.mxu0 0
      %341 = vmatpush1.bf16.msra.mxu0 0
      %342 = vmatprep.subr.bf16.mxu0 %v232
      %343 = vmatpush1.bf16.msra.mxu0 %v231
      %344 = vmatprep.subr.bf16.mxu0 0
      %345 = vmatpush2.bf16.msra.mxu0 0
      %346 = vmatprep.subr.bf16.mxu0 0
      %347 = vmatpush2.bf16.msra.mxu0 0
      %348 = vmatprep.subr.bf16.mxu0 0
      %349 = vmatpush2.bf16.msra.mxu0 0
      %350 = vmatprep.subr.bf16.mxu0 0
      %351 = vmatpush2.bf16.msra.mxu0 0
      %352 = vmatprep.subr.bf16.mxu0 0
      %353 = vmatpush2.bf16.msra.mxu0 0
      %354 = vmatprep.subr.bf16.mxu0 0
      %355 = vmatpush2.bf16.msra.mxu0 0
      %356 = vmatprep.subr.bf16.mxu0 0
      %357 = vmatpush2.bf16.msra.mxu0 0
      %358 = vmatprep.subr.bf16.mxu0 0
      %359 = vmatpush2.bf16.msra.mxu0 0
      %360 = vmatprep.mubr.bf16.mxu0 0
      %361 = vmatmul.mubr.bf16.gmra.mxu0 %v244
      %v362 = vpop.f32.mrf.mxu0
      %v363 = vadd.f32 %v240, %v362
      %v364 = vpop.f32.mrf.mxu0
      %v365 = vadd.f32 %v240, %v364
      %v366 = vpop.f32.mrf.mxu0
      %v367 = vpop.f32.mrf.mxu0
      %368 = vdwg.mxu0
      %369 = vmatprep.subr.bf16.mxu0 0
      %370 = vmatpush1.bf16.msra.mxu0 0
      %371 = vmatprep.subr.bf16.mxu0 0
      %372 = vmatpush1.bf16.msra.mxu0 0
      %373 = vmatprep.subr.bf16.mxu0 0
      %374 = vmatpush1.bf16.msra.mxu0 0
      %375 = vmatprep.subr.bf16.mxu0 0
      %376 = vmatpush1.bf16.msra.mxu0 0
      %377 = vmatprep.subr.bf16.mxu0 0
      %378 = vmatpush1.bf16.msra.mxu0 0
      %379 = vmatprep.subr.bf16.mxu0 0
      %380 = vmatpush1.bf16.msra.mxu0 0
      %381 = vmatprep.subr.bf16.mxu0 0
      %382 = vmatpush1.bf16.msra.mxu0 0
      %383 = vmatprep.subr.bf16.mxu0 %v234
      %384 = vmatpush1.bf16.msra.mxu0 %v233
      %385 = vmatprep.subr.bf16.mxu0 0
      %386 = vmatpush2.bf16.msra.mxu0 0
      %387 = vmatprep.subr.bf16.mxu0 0
      %388 = vmatpush2.bf16.msra.mxu0 0
      %389 = vmatprep.subr.bf16.mxu0 0
      %390 = vmatpush2.bf16.msra.mxu0 0
      %391 = vmatprep.subr.bf16.mxu0 0
      %392 = vmatpush2.bf16.msra.mxu0 0
      %393 = vmatprep.subr.bf16.mxu0 0
      %394 = vmatpush2.bf16.msra.mxu0 0
      %395 = vmatprep.subr.bf16.mxu0 0
      %396 = vmatpush2.bf16.msra.mxu0 0
      %397 = vmatprep.subr.bf16.mxu0 0
      %398 = vmatpush2.bf16.msra.mxu0 0
      %399 = vmatprep.subr.bf16.mxu0 0
      %400 = vmatpush2.bf16.msra.mxu0 0
      %401 = vmatprep.mubr.bf16.mxu0 0
      %402 = vmatmul.mubr.bf16.gmra.mxu0 %v244
      %v403 = vpop.f32.mrf.mxu0
      %v404 = vadd.f32 %v240, %v403
      %v405 = vpop.f32.mrf.mxu0
      %v406 = vadd.f32 %v240, %v405
      %v407 = vpop.f32.mrf.mxu0
      %v408 = vpop.f32.mrf.mxu0
      %409 = vdwg.mxu0
      %v410 = vpack.c.bf16 %v281, %v281
      %v411 = vpack.c.bf16 %v283, %v283
      %v412 = vpack.c.bf16 %v322, %v322
      %v413 = vpack.c.bf16 %v324, %v324
      %v414 = vpack.c.bf16 %v363, %v363
      %v415 = vpack.c.bf16 %v365, %v365
      %v416 = vpack.c.bf16 %v404, %v404
      %v417 = vpack.c.bf16 %v406, %v406
      %v426 = vcombine.low %v410, %v411
      %v427 = vcombine.low %v412, %v413
      %v429 = vunpack.c.l.s4 1983009808
      %v430 = vunpack.c.0.s8 %v429
      %v431 = vlaneseq
      %v432 = vshrl.u32 %v431, 7
      %v433 = vsub.s32 %v430, %v432
      %v434 = vrot.slane %v426, %v433
      %v436 = vunpack.c.l.s4 1983009808
      %v437 = vunpack.c.0.s8 %v436
      %v438 = vlaneseq
      %v439 = vshrl.u32 %v438, 7
      %v440 = vsub.s32 %v437, %v439
      %v441 = vrot.slane %v427, %v440
      %v442 = vcombine.low %v434, %v441
      %v443 = vcombine.low %v414, %v415
      %v444 = vcombine.low %v416, %v417
      %v446 = vunpack.c.l.s4 1983009808
      %v447 = vunpack.c.0.s8 %v446
      %v448 = vlaneseq
      %v449 = vshrl.u32 %v448, 7
      %v450 = vsub.s32 %v447, %v449
      %v451 = vrot.slane %v443, %v450
      %v453 = vunpack.c.l.s4 1983009808
      %v454 = vunpack.c.0.s8 %v453
      %v455 = vlaneseq
      %v456 = vshrl.u32 %v455, 7
      %v457 = vsub.s32 %v454, %v456
      %v458 = vrot.slane %v444, %v457
      %v459 = vcombine.low %v451, %v458
      %462 = vst [vmem:[%s208] sm:$0xff] %v442
      %463 = vst [vmem:[%s208 + $0x8] sm:$0xff] %v459
      %s464 = smul.u32 8, %s19
      %p465 = scmp.lt.s32.totalorder %s18, 1
      %s466 = scalar_select %p465, %s18, 1
      %p467 = scmp.lt.s32.totalorder %s464, 7
      %s468 = scalar_select %p467, %s464, 7
      %s469 = smul.addr %s466, 8
      %s470 = sadd.s32 %s468, %s469
      %s471 = smul.addr %s470, 2
      %s472 = scalar_lea.vmem %s3, %s471
      // Predicated region
      $region33: #{_lambda_.10} parent=31 // pred_check
        %p473 = pneg %p116
      $region34: #{_lambda_.10} parent=31 // pred_check_branch
        %475 = sbr.rel (%p473) target = $region36
      $region35: #{_lambda_.10} parent=31 // pred_region
        %s476 = smul.u32 8, %s19
      $region36: #{_lambda_.10} parent=31 // pred_fallthru
        _
    $region32: #{_lambda_.10} parent=5 // pred_fallthru
      _
    %p477 = scmp.le.s32.totalorder 2, %s9
    // Predicated region
    $region37: #{_lambda_.10} parent=5 // pred_check
      %p478 = pneg %p477
    $region38: #{_lambda_.10} parent=5 // pred_check_branch
      %480 = sbr.rel (%p478) target = $region40
    $region39: #{_lambda_.10} parent=5 // pred_region
      %s481 = ssub.s32 %s9, 2
      // Predicated region
      $region41: #{_lambda_.10} parent=39 // pred_check
        %p482 = pneg %p122
      $region42: #{_lambda_.10} parent=39 // pred_check_branch
        %484 = sbr.rel (%p482) target = $region44
      $region43: #{_lambda_.10} parent=39 // pred_region
        %s485 = smul.u32 8, %s21
        %p486 = scmp.lt.s32.totalorder %s20, 1
        %s487 = scalar_select %p486, %s20, 1
        %p488 = scmp.lt.s32.totalorder %s485, 7
        %s489 = scalar_select %p488, %s485, 7
        %s490 = smul.addr %s487, 8
        %s491 = sadd.s32 %s489, %s490
        %s492 = smul.addr %s491, 2
        %s493 = scalar_lea.vmem %s3, %s492
      $region44: #{_lambda_.10} parent=39 // pred_fallthru
        _
    $region40: #{_lambda_.10} parent=5 // pred_fallthru
      _
  $region6: #{_lambda_.10} parent=0 // loop_footer
    %s13 = sadd.s32 1, %s9
  $region7: #{_lambda_.10} parent=0 // loop_footer_branch
    %8 = sbr.rel target = $region3
  $region8: #{_lambda_.10} parent=0 // loop_exit
    _

// kernel: _lambda_.11
$region0: #{_lambda_.11}
  #allocation0 [shape = 'u32[]', space=smem, size = 0x4, offset = 0x4, fixed_abs, tag = 'smem constant byte address 0x4 - core index']
  #allocation1 [shape = 'u32[144,128]{1,0:T(1,128)}', space=vmem, size = 0x12000, scoped, tag = 'internal scratch']
  %s0 = inlined_call_operand.vmem [shape: bf16[4,36], index: 0, kind: input, shape index: {}]
  %s1 = inlined_call_operand.vmem [shape: bf16[2,36,225], index: 1, kind: input, shape index: {}]
  %s2 = inlined_call_operand.vmem [shape: f32[4,1], index: 2, kind: input, shape index: {}]
  %s3 = inlined_call_operand.vmem [shape: bf16[2,4,225], index: 3, kind: output, shape index: {}]
  %s4 = sld [smem:[#allocation0]]
  $region45: #{_lambda_.11} parent=0
    _
  %s6 = ssub.s32 1, %s4
  %s7 = scalar_select 0, %s6, %s4
  loop: start=0, step=1, limit=4
  $region2: #{_lambda_.11} parent=0 // loop_pre_header
    _
  $region3: #{_lambda_.11} parent=0 // loop_header
    %s9 = sphi 0, %s13
    %p10 = scmp.ge.s32.totalorder %s9, 4
    %s16 = sphi 0, %s28
    %s17 = sphi 0, %s24
    %s18 = sphi 0, %s16
    %s19 = sphi 0, %s17
    %s20 = sphi 0, %s18
    %s21 = sphi 0, %s19
    %s29 = sphi 0, %s29
    %s31 = sphi 0, %s29
    %s32 = sphi 0, %s31
    %s46 = sphi 0, %s32
    %s54 = sphi 0, %s56
    %s57 = sphi 0, %s54
    %s58 = sphi 0, %s57
    %s74 = sphi 0, %s58
    %s78 = sphi 0, %s78
    %s80 = sphi 0, %s78
    %s81 = sphi 0, %s80
    %s95 = sphi 0, %s81
    %s103 = sphi 0, %s105
    %s106 = sphi 0, %s103
    %s107 = sphi 0, %s106
    %s123 = sphi 0, %s107
  $region4: #{_lambda_.11} parent=0 // loop_header_branch
    %12 = sbr.rel (%p10) target = $region8
  $region5: #{_lambda_.11} parent=0 // loop_body
    %s14 = ssub.s32 %s9, 1
    %s15 = ssub.s32 %s9, 2
    %s22 = sadd.s32 1, %s17
    %p23 = scmp.ge.s32.totalorder %s22, 1
    %s24 = scalar_select %p23, 0, %s22
    %s25 = sadd.s32 1, %s16
    %s26 = scalar_select %p23, %s25, %s16
    %p27 = scmp.ge.s32.totalorder %s26, 2
    %s28 = scalar_select %p27, 0, %s26
    %s30 = sadd.s32 %s29, 1
    %p33 = scmp.eq.s32.totalorder %s9, 1
    %p34 = scmp.ne.s32.totalorder %s29, %s31
    %p35 = scmp.eq.s32.totalorder %s9, 0
    %p36 = por %p34, %p35
    %p37 = scmp.ne.s32.totalorder %s29, %s31
    %p38 = scmp.eq.s32.totalorder %s14, 1
    %p39 = por %p37, %p38
    %p40 = scmp.ne.s32.totalorder %s31, %s32
    %p41 = scmp.eq.s32.totalorder %s14, 0
    %p42 = por %p40, %p41
    %p43 = scmp.ne.s32.totalorder %s31, %s32
    %p44 = scmp.eq.s32.totalorder %s15, 1
    %p45 = por %p43, %p44
    %p47 = scmp.ne.s32.totalorder %s32, %s46
    %p48 = scmp.eq.s32.totalorder %s15, 0
    %p49 = por %p47, %p48
    %s50 = ssub.s32 %s16, %s28
    %s51 = ssub.s32 %s17, %s24
    %s52 = sor.u32 %s50, %s51
    %p53 = scmp.eq.s32.totalorder %s52, 0
    %s55 = sadd.s32 %s54, 1
    %s56 = scalar_select %p53, %s54, %s55
    %p59 = pneg %p53
    %p60 = scmp.eq.s32.totalorder %s9, 1
    %p61 = por %p59, %p60
    %p62 = scmp.ne.s32.totalorder %s54, %s57
    %p63 = scmp.eq.s32.totalorder %s9, 0
    %p64 = por %p62, %p63
    %p65 = scmp.ne.s32.totalorder %s54, %s57
    %p66 = scmp.eq.s32.totalorder %s14, 1
    %p67 = por %p65, %p66
    %p68 = scmp.ne.s32.totalorder %s57, %s58
    %p69 = scmp.eq.s32.totalorder %s14, 0
    %p70 = por %p68, %p69
    %p71 = scmp.ne.s32.totalorder %s57, %s58
    %p72 = scmp.eq.s32.totalorder %s15, 1
    %p73 = por %p71, %p72
    %p75 = scmp.ne.s32.totalorder %s58, %s74
    %p76 = scmp.eq.s32.totalorder %s15, 0
    %p77 = por %p75, %p76
    %s79 = sadd.s32 %s78, 1
    %p82 = scmp.eq.s32.totalorder %s9, 1
    %p83 = scmp.ne.s32.totalorder %s78, %s80
    %p84 = scmp.eq.s32.totalorder %s9, 0
    %p85 = por %p83, %p84
    %p86 = scmp.ne.s32.totalorder %s78, %s80
    %p87 = scmp.eq.s32.totalorder %s14, 1
    %p88 = por %p86, %p87
    %p89 = scmp.ne.s32.totalorder %s80, %s81
    %p90 = scmp.eq.s32.totalorder %s14, 0
    %p91 = por %p89, %p90
    %p92 = scmp.ne.s32.totalorder %s80, %s81
    %p93 = scmp.eq.s32.totalorder %s15, 1
    %p94 = por %p92, %p93
    %p96 = scmp.ne.s32.totalorder %s81, %s95
    %p97 = scmp.eq.s32.totalorder %s15, 0
    %p98 = por %p96, %p97
    %s99 = ssub.s32 %s16, %s28
    %s100 = ssub.s32 %s17, %s24
    %s101 = sor.u32 %s99, %s100
    %p102 = scmp.eq.s32.totalorder %s101, 0
    %s104 = sadd.s32 %s103, 1
    %s105 = scalar_select %p102, %s103, %s104
    %p108 = pneg %p102
    %p109 = scmp.eq.s32.totalorder %s9, 1
    %p110 = por %p108, %p109
    %p111 = scmp.ne.s32.totalorder %s103, %s106
    %p112 = scmp.eq.s32.totalorder %s9, 0
    %p113 = por %p111, %p112
    %p114 = scmp.ne.s32.totalorder %s103, %s106
    %p115 = scmp.eq.s32.totalorder %s14, 1
    %p116 = por %p114, %p115
    %p117 = scmp.ne.s32.totalorder %s106, %s107
    %p118 = scmp.eq.s32.totalorder %s14, 0
    %p119 = por %p117, %p118
    %p120 = scmp.ne.s32.totalorder %s106, %s107
    %p121 = scmp.eq.s32.totalorder %s15, 1
    %p122 = por %p120, %p121
    %p124 = scmp.ne.s32.totalorder %s107, %s123
    %p125 = scmp.eq.s32.totalorder %s15, 0
    %p126 = por %p124, %p125
    %p127 = scmp.le.s32.totalorder 1, %s9
    %p128 = scmp.lt.s32.totalorder %s9, 3
    %p129 = pnand %p127, %p128
    %p130 = pneg %p129
    // Predicated region
    $region9: #{_lambda_.11} parent=5 // pred_check
      _
    $region10: #{_lambda_.11} parent=5 // pred_check_branch
      %132 = sbr.rel (%p129) target = $region12
    $region11: #{_lambda_.11} parent=5 // pred_region
      %s133 = ssub.s32 %s9, 1
      // Predicated region
      $region13: #{_lambda_.11} parent=11 // pred_check
        %p134 = pneg %p42
      $region14: #{_lambda_.11} parent=11 // pred_check_branch
        %136 = sbr.rel (%p134) target = $region16
      $region15: #{_lambda_.11} parent=11 // pred_region
        _
      $region16: #{_lambda_.11} parent=11 // pred_fallthru
        _
      // Predicated region
      $region17: #{_lambda_.11} parent=11 // pred_check
        %p137 = pneg %p91
      $region18: #{_lambda_.11} parent=11 // pred_check_branch
        %139 = sbr.rel (%p137) target = $region20
      $region19: #{_lambda_.11} parent=11 // pred_region
        _
      $region20: #{_lambda_.11} parent=11 // pred_fallthru
        _
    $region12: #{_lambda_.11} parent=5 // pred_fallthru
      _
    %p140 = scmp.lt.s32.totalorder %s9, 2
    // Predicated region
    $region21: #{_lambda_.11} parent=5 // pred_check
      %p141 = pneg %p140
    $region22: #{_lambda_.11} parent=5 // pred_check_branch
      %143 = sbr.rel (%p141) target = $region24
    $region23: #{_lambda_.11} parent=5 // pred_region
      // Predicated region
      $region25: #{_lambda_.11} parent=23 // pred_check
        %p144 = pneg %p64
      $region26: #{_lambda_.11} parent=23 // pred_check_branch
        %146 = sbr.rel (%p144) target = $region28
      $region27: #{_lambda_.11} parent=23 // pred_region
        %s147 = smul.u32 2, %s17
        %p148 = scmp.lt.s32.totalorder %s16, 1
        %s149 = scalar_select %p148, %s16, 1
        %p150 = scmp.lt.s32.totalorder %s147, 1
        %s151 = scalar_select %p150, %s147, 1
        %s152 = smul.addr %s149, 10
        %s153 = sadd.s32 %s151, %s152
        %s154 = smul.addr %s153, 4
        %s155 = scalar_lea.vmem %s1, %s154
        %s156 = smul.u32 2, %s17
      $region28: #{_lambda_.11} parent=23 // pred_fallthru
        _
    $region24: #{_lambda_.11} parent=5 // pred_fallthru
      _
    %p157 = scmp.le.s32.totalorder 1, %s9
    %p158 = scmp.lt.s32.totalorder %s9, 3
    %p159 = pnand %p157, %p158
    %p160 = pneg %p159
    // Predicated region
    $region29: #{_lambda_.11} parent=5 // pred_check
      _
    $region30: #{_lambda_.11} parent=5 // pred_check_branch
      %162 = sbr.rel (%p159) target = $region32
    $region31: #{_lambda_.11} parent=5 // pred_region
      %s163 = ssub.s32 %s9, 1
      %p164 = pneg %p42
      %p165 = pneg %p39
      %s166 = smul.u32 2, %s19
      %p167 = scmp.lt.s32.totalorder %s18, 1
      %s168 = scalar_select %p167, %s18, 1
      %p169 = scmp.lt.s32.totalorder %s166, 1
      %s170 = scalar_select %p169, %s166, 1
      %s171 = smul.addr %s168, 10
      %s172 = sadd.s32 %s170, %s171
      %s173 = smul.addr %s172, 4
      %s174 = scalar_lea.vmem %s1, %s173
      %p175 = pneg %p70
      %p176 = pneg %p67
      %p177 = pneg %p91
      %p178 = pneg %p88
      %p179 = pneg %p119
      %p180 = pneg %p116
      %s181 = smul.u32 2, %s19
      %p182 = scmp.lt.s32.totalorder %s18, 1
      %s183 = scalar_select %p182, %s18, 1
      %p184 = scmp.lt.s32.totalorder %s181, 1
      %s185 = scalar_select %p184, %s181, 1
      %s186 = smul.addr %s183, 2
      %s187 = sadd.s32 %s185, %s186
      %s188 = smul.addr %s187, 2
      %s189 = scalar_lea.vmem %s3, %s188
      %s190 = smul.u32 2, %s19
      %p191 = scmp.lt.s32.totalorder %s18, 1
      %s192 = scalar_select %p191, %s18, 1
      %p193 = scmp.lt.s32.totalorder %s190, 1
      %s194 = scalar_select %p193, %s190, 1
      %s195 = smul.addr %s192, 10
      %s196 = sadd.s32 %s194, %s195
      %s197 = smul.addr %s196, 4
      %s198 = scalar_lea.vmem %s1, %s197
      %s199 = smul.u32 2, %s19
      %s200 = smul.u32 2, %s19
      %p201 = scmp.lt.s32.totalorder %s18, 1
      %s202 = scalar_select %p201, %s18, 1
      %p203 = scmp.lt.s32.totalorder %s200, 1
      %s204 = scalar_select %p203, %s200, 1
      %s205 = smul.addr %s202, 2
      %s206 = sadd.s32 %s204, %s205
      %s207 = smul.addr %s206, 2
      %s208 = scalar_lea.vmem %s3, %s207
      %s209 = smul.u32 2, %s19
      %v211 = vld [vmem:[%s198] sm:$0xff]
      %v212 = vld [vmem:[%s198 + $0x8] sm:$0xff]
      %v213 = vld [vmem:[%s198 + $0x10] sm:$0xff]
      %v214 = vld [vmem:[%s198 + $0x18] sm:$0xff]
      %v215 = vld [vmem:[%s198 + $0x20] sm:$0x33]
      %v216 = vld [vmem:[%s0] sm:$0x3]
      %v217 = vld [vmem:[%s2] sm:$0xf]
      %219 = vset.pattern.permute.xlu0 0
      %220 = vperm.xlu0 %219, %v217
      %v221 = vpop.permute.xlu0 %220
      %v228 = vunpack.c.l.b16 %v211
      %v229 = vunpack.c.h.b16 %v211
      %v230 = vunpack.c.l.b16 %v212
      %v231 = vunpack.c.h.b16 %v212
      %v232 = vunpack.c.l.b16 %v213
      %v233 = vunpack.c.h.b16 %v213
      %v234 = vunpack.c.l.b16 %v214
      %v235 = vunpack.c.h.b16 %v214
      %v236 = vunpack.c.l.b16 %v215
      %v237 = vunpack.c.h.b16 %v215
      %v238 = vpack.c.b16 %v230, %v228
      %v239 = vpack.c.b16 %v231, %v229
      %v240 = vpack.c.b16 %v234, %v232
      %v241 = vpack.c.b16 %v235, %v233
      %v242 = vpack.c.b16 %v236, %v236
      %v243 = vpack.c.b16 %v237, %v237
      %vm248 = vcmask 293888
      %v250 = vsel %vm248, %v216, 0
      %vm252 = vcmask 1041408
      %v254 = vsel %vm252, %v242, 0
      %v257 = vsel %vm252, %v243, 0
      %259 = vmatprep.subr.bf16.mxu0 0
      %260 = vmatpush1.bf16.msra.mxu0 0
      %261 = vmatprep.subr.bf16.mxu0 0
      %262 = vmatpush1.bf16.msra.mxu0 0
      %263 = vmatprep.subr.bf16.mxu0 0
      %264 = vmatpush1.bf16.msra.mxu0 0
      %265 = vmatprep.subr.bf16.mxu0 0
      %266 = vmatpush1.bf16.msra.mxu0 0
      %267 = vmatprep.subr.bf16.mxu0 0
      %268 = vmatpush1.bf16.msra.mxu0 0
      %269 = vmatprep.subr.bf16.mxu0 %v257
      %270 = vmatpush1.bf16.msra.mxu0 %v254
      %271 = vmatprep.subr.bf16.mxu0 %v241
      %272 = vmatpush1.bf16.msra.mxu0 %v240
      %273 = vmatprep.subr.bf16.mxu0 %v239
      %274 = vmatpush1.bf16.msra.mxu0 %v238
      %275 = vmatprep.subr.bf16.mxu0 0
      %276 = vmatpush2.bf16.msra.mxu0 0
      %277 = vmatprep.subr.bf16.mxu0 0
      %278 = vmatpush2.bf16.msra.mxu0 0
      %279 = vmatprep.subr.bf16.mxu0 0
      %280 = vmatpush2.bf16.msra.mxu0 0
      %281 = vmatprep.subr.bf16.mxu0 0
      %282 = vmatpush2.bf16.msra.mxu0 0
      %283 = vmatprep.subr.bf16.mxu0 0
      %284 = vmatpush2.bf16.msra.mxu0 0
      %285 = vmatprep.subr.bf16.mxu0 0
      %286 = vmatpush2.bf16.msra.mxu0 0
      %287 = vmatprep.subr.bf16.mxu0 0
      %288 = vmatpush2.bf16.msra.mxu0 0
      %289 = vmatprep.subr.bf16.mxu0 0
      %290 = vmatpush2.bf16.msra.mxu0 0
      %291 = vmatprep.mubr.bf16.mxu0 0
      %292 = vmatmul.mubr.bf16.gmra.mxu0 %v250
      %v293 = vpop.f32.mrf.mxu0
      %v294 = vadd.f32 %v221, %v293
      %v295 = vpop.f32.mrf.mxu0
      %v296 = vadd.f32 %v221, %v295
      %v297 = vpop.f32.mrf.mxu0
      %v298 = vpop.f32.mrf.mxu0
      %299 = vdwg.mxu0
      %v300 = vpack.c.bf16 %v294, %v294
      %v301 = vpack.c.bf16 %v296, %v296
      %v304 = vcombine.low %v300, %v301
      %v306 = vunpack.c.l.s4 1983009808
      %v307 = vunpack.c.0.s8 %v306
      %v308 = vlaneseq
      %v309 = vshrl.u32 %v308, 7
      %v310 = vsub.s32 %v307, %v309
      %v311 = vrot.slane %v304, %v310
      %vm313 = vcmask 789506
      %vm314 = vmor %vm313, %vm252
      %315 = vst.msk [vmem:[%s208] sm:$0xf] %vm314, %v311
      %s316 = smul.u32 2, %s19
      %p317 = scmp.lt.s32.totalorder %s18, 1
      %s318 = scalar_select %p317, %s18, 1
      %p319 = scmp.lt.s32.totalorder %s316, 1
      %s320 = scalar_select %p319, %s316, 1
      %s321 = smul.addr %s318, 2
      %s322 = sadd.s32 %s320, %s321
      %s323 = smul.addr %s322, 2
      %s324 = scalar_lea.vmem %s3, %s323
      // Predicated region
      $region33: #{_lambda_.11} parent=31 // pred_check
        %p325 = pneg %p116
      $region34: #{_lambda_.11} parent=31 // pred_check_branch
        %327 = sbr.rel (%p325) target = $region36
      $region35: #{_lambda_.11} parent=31 // pred_region
        %s328 = smul.u32 2, %s19
      $region36: #{_lambda_.11} parent=31 // pred_fallthru
        _
    $region32: #{_lambda_.11} parent=5 // pred_fallthru
      _
    %p329 = scmp.le.s32.totalorder 2, %s9
    // Predicated region
    $region37: #{_lambda_.11} parent=5 // pred_check
      %p330 = pneg %p329
    $region38: #{_lambda_.11} parent=5 // pred_check_branch
      %332 = sbr.rel (%p330) target = $region40
    $region39: #{_lambda_.11} parent=5 // pred_region
      %s333 = ssub.s32 %s9, 2
      // Predicated region
      $region41: #{_lambda_.11} parent=39 // pred_check
        %p334 = pneg %p122
      $region42: #{_lambda_.11} parent=39 // pred_check_branch
        %336 = sbr.rel (%p334) target = $region44
      $region43: #{_lambda_.11} parent=39 // pred_region
        %s337 = smul.u32 2, %s21
        %p338 = scmp.lt.s32.totalorder %s20, 1
        %s339 = scalar_select %p338, %s20, 1
        %p340 = scmp.lt.s32.totalorder %s337, 1
        %s341 = scalar_select %p340, %s337, 1
        %s342 = smul.addr %s339, 2
        %s343 = sadd.s32 %s341, %s342
        %s344 = smul.addr %s343, 2
        %s345 = scalar_lea.vmem %s3, %s344
      $region44: #{_lambda_.11} parent=39 // pred_fallthru
        _
    $region40: #{_lambda_.11} parent=5 // pred_fallthru
      _
  $region6: #{_lambda_.11} parent=0 // loop_footer
    %s13 = sadd.s32 1, %s9
  $region7: #{_lambda_.11} parent=0 // loop_footer_branch
    %8 = sbr.rel target = $region3
  $region8: #{_lambda_.11} parent=0 // loop_exit
    _

// kernel: _lambda_.12
$region0: #{_lambda_.12}
  #allocation0 [shape = 'u32[]', space=smem, size = 0x4, offset = 0x4, fixed_abs, tag = 'smem constant byte address 0x4 - core index']
  #allocation1 [shape = 'u32[144,128]{1,0:T(1,128)}', space=vmem, size = 0x12000, scoped, tag = 'internal scratch']
  %s0 = inlined_call_operand.vmem [shape: bf16[2,7,4,45], index: 0, kind: input, shape index: {}]
  %s1 = inlined_call_operand.vmem [shape: bf16[2,4,45], index: 1, kind: output, shape index: {}]
  %s2 = sld [smem:[#allocation0]]
  $region37: #{_lambda_.12} parent=0
    _
  %s4 = ssub.s32 1, %s2
  %s5 = scalar_select 0, %s4, %s2
  loop: start=0, step=1, limit=4
  $region2: #{_lambda_.12} parent=0 // loop_pre_header
    _
  $region3: #{_lambda_.12} parent=0 // loop_header
    %s7 = sphi 0, %s11
    %p8 = scmp.ge.s32.totalorder %s7, 4
    %s14 = sphi 0, %s26
    %s15 = sphi 0, %s22
    %s16 = sphi 0, %s14
    %s17 = sphi 0, %s15
    %s18 = sphi 0, %s16
    %s19 = sphi 0, %s17
    %s31 = sphi 0, %s33
    %s34 = sphi 0, %s31
    %s35 = sphi 0, %s34
    %s51 = sphi 0, %s35
    %s59 = sphi 0, %s61
    %s62 = sphi 0, %s59
    %s63 = sphi 0, %s62
    %s79 = sphi 0, %s63
  $region4: #{_lambda_.12} parent=0 // loop_header_branch
    %10 = sbr.rel (%p8) target = $region8
  $region5: #{_lambda_.12} parent=0 // loop_body
    %s12 = ssub.s32 %s7, 1
    %s13 = ssub.s32 %s7, 2
    %s20 = sadd.s32 1, %s15
    %p21 = scmp.ge.s32.totalorder %s20, 1
    %s22 = scalar_select %p21, 0, %s20
    %s23 = sadd.s32 1, %s14
    %s24 = scalar_select %p21, %s23, %s14
    %p25 = scmp.ge.s32.totalorder %s24, 2
    %s26 = scalar_select %p25, 0, %s24
    %s27 = ssub.s32 %s14, %s26
    %s28 = ssub.s32 %s15, %s22
    %s29 = sor.u32 %s27, %s28
    %p30 = scmp.eq.s32.totalorder %s29, 0
    %s32 = sadd.s32 %s31, 1
    %s33 = scalar_select %p30, %s31, %s32
    %p36 = pneg %p30
    %p37 = scmp.eq.s32.totalorder %s7, 1
    %p38 = por %p36, %p37
    %p39 = scmp.ne.s32.totalorder %s31, %s34
    %p40 = scmp.eq.s32.totalorder %s7, 0
    %p41 = por %p39, %p40
    %p42 = scmp.ne.s32.totalorder %s31, %s34
    %p43 = scmp.eq.s32.totalorder %s12, 1
    %p44 = por %p42, %p43
    %p45 = scmp.ne.s32.totalorder %s34, %s35
    %p46 = scmp.eq.s32.totalorder %s12, 0
    %p47 = por %p45, %p46
    %p48 = scmp.ne.s32.totalorder %s34, %s35
    %p49 = scmp.eq.s32.totalorder %s13, 1
    %p50 = por %p48, %p49
    %p52 = scmp.ne.s32.totalorder %s35, %s51
    %p53 = scmp.eq.s32.totalorder %s13, 0
    %p54 = por %p52, %p53
    %s55 = ssub.s32 %s14, %s26
    %s56 = ssub.s32 %s15, %s22
    %s57 = sor.u32 %s55, %s56
    %p58 = scmp.eq.s32.totalorder %s57, 0
    %s60 = sadd.s32 %s59, 1
    %s61 = scalar_select %p58, %s59, %s60
    %p64 = pneg %p58
    %p65 = scmp.eq.s32.totalorder %s7, 1
    %p66 = por %p64, %p65
    %p67 = scmp.ne.s32.totalorder %s59, %s62
    %p68 = scmp.eq.s32.totalorder %s7, 0
    %p69 = por %p67, %p68
    %p70 = scmp.ne.s32.totalorder %s59, %s62
    %p71 = scmp.eq.s32.totalorder %s12, 1
    %p72 = por %p70, %p71
    %p73 = scmp.ne.s32.totalorder %s62, %s63
    %p74 = scmp.eq.s32.totalorder %s12, 0
    %p75 = por %p73, %p74
    %p76 = scmp.ne.s32.totalorder %s62, %s63
    %p77 = scmp.eq.s32.totalorder %s13, 1
    %p78 = por %p76, %p77
    %p80 = scmp.ne.s32.totalorder %s63, %s79
    %p81 = scmp.eq.s32.totalorder %s13, 0
    %p82 = por %p80, %p81
    %p83 = scmp.le.s32.totalorder 1, %s7
    %p84 = scmp.lt.s32.totalorder %s7, 3
    %p85 = pnand %p83, %p84
    %p86 = pneg %p85
    // Predicated region
    $region9: #{_lambda_.12} parent=5 // pred_check
      _
    $region10: #{_lambda_.12} parent=5 // pred_check_branch
      %88 = sbr.rel (%p85) target = $region12
    $region11: #{_lambda_.12} parent=5 // pred_region
      %s89 = ssub.s32 %s7, 1
    $region12: #{_lambda_.12} parent=5 // pred_fallthru
      _
    %p90 = scmp.lt.s32.totalorder %s7, 2
    // Predicated region
    $region13: #{_lambda_.12} parent=5 // pred_check
      %p91 = pneg %p90
    $region14: #{_lambda_.12} parent=5 // pred_check_branch
      %93 = sbr.rel (%p91) target = $region16
    $region15: #{_lambda_.12} parent=5 // pred_region
      // Predicated region
      $region17: #{_lambda_.12} parent=15 // pred_check
        %p94 = pneg %p41
      $region18: #{_lambda_.12} parent=15 // pred_check_branch
        %96 = sbr.rel (%p94) target = $region20
      $region19: #{_lambda_.12} parent=15 // pred_region
        %p97 = scmp.lt.s32.totalorder %s14, 1
        %s98 = scalar_select %p97, %s14, 1
        %p99 = scmp.lt.s32.totalorder %s15, 0
        %s100 = scalar_select %p99, %s15, 0
        %s101 = smul.addr %s98, 7
        %s102 = sadd.s32 %s100, %s101
        %s103 = smul.addr %s102, 2
        %s104 = scalar_lea.vmem %s0, %s103
      $region20: #{_lambda_.12} parent=15 // pred_fallthru
        _
    $region16: #{_lambda_.12} parent=5 // pred_fallthru
      _
    %p105 = scmp.le.s32.totalorder 1, %s7
    %p106 = scmp.lt.s32.totalorder %s7, 3
    %p107 = pnand %p105, %p106
    %p108 = pneg %p107
    // Predicated region
    $region21: #{_lambda_.12} parent=5 // pred_check
      _
    $region22: #{_lambda_.12} parent=5 // pred_check_branch
      %110 = sbr.rel (%p107) target = $region24
    $region23: #{_lambda_.12} parent=5 // pred_region
      %s111 = ssub.s32 %s7, 1
      %p112 = scmp.lt.s32.totalorder %s16, 1
      %s113 = scalar_select %p112, %s16, 1
      %p114 = scmp.lt.s32.totalorder %s17, 0
      %s115 = scalar_select %p114, %s17, 0
      %s116 = smul.addr %s113, 7
      %s117 = sadd.s32 %s115, %s116
      %s118 = smul.addr %s117, 2
      %s119 = scalar_lea.vmem %s0, %s118
      %p120 = pneg %p47
      %p121 = pneg %p44
      %p122 = pneg %p75
      %p123 = pneg %p72
      %p124 = scmp.lt.s32.totalorder %s16, 1
      %s125 = scalar_select %p124, %s16, 1
      %p126 = scmp.lt.s32.totalorder %s17, 0
      %s127 = scalar_select %p126, %s17, 0
      %s128 = sadd.s32 %s127, %s125
      %s129 = smul.addr %s128, 2
      %s130 = scalar_lea.vmem %s1, %s129
      %p131 = scmp.lt.s32.totalorder %s16, 1
      %s132 = scalar_select %p131, %s16, 1
      %p133 = scmp.lt.s32.totalorder %s17, 0
      %s134 = scalar_select %p133, %s17, 0
      %s135 = smul.addr %s132, 7
      %s136 = sadd.s32 %s134, %s135
      %s137 = smul.addr %s136, 2
      %s138 = scalar_lea.vmem %s0, %s137
      %p139 = scmp.lt.s32.totalorder %s16, 1
      %s140 = scalar_select %p139, %s16, 1
      %p141 = scmp.lt.s32.totalorder %s17, 0
      %s142 = scalar_select %p141, %s17, 0
      %s143 = sadd.s32 %s142, %s140
      %s144 = smul.addr %s143, 2
      %s145 = scalar_lea.vmem %s1, %s144
      %v146 = vld [vmem:[%s138] sm:$0x3]
      %v147 = vunpack.c.l.bf16 %v146
      %s148 = scalar_lea.vmem %s138, 2
      %v149 = vld [vmem:[%s148] sm:$0x3]
      %v150 = vunpack.c.l.bf16 %v149
      %v151 = vmax.f32 %v147, %v150
      %s152 = scalar_lea.vmem %s138, 4
      %v153 = vld [vmem:[%s152] sm:$0x3]
      %v154 = vunpack.c.l.bf16 %v153
      %v155 = vmax.f32 %v151, %v154
      %s156 = scalar_lea.vmem %s138, 6
      %v157 = vld [vmem:[%s156] sm:$0x3]
      %v158 = vunpack.c.l.bf16 %v157
      %v159 = vmax.f32 %v155, %v158
      %s160 = scalar_lea.vmem %s138, 8
      %v161 = vld [vmem:[%s160] sm:$0x3]
      %v162 = vunpack.c.l.bf16 %v161
      %v163 = vmax.f32 %v159, %v162
      %s164 = scalar_lea.vmem %s138, 10
      %v165 = vld [vmem:[%s164] sm:$0x3]
      %v166 = vunpack.c.l.bf16 %v165
      %v167 = vmax.f32 %v163, %v166
      %s168 = scalar_lea.vmem %s138, 12
      %v169 = vld [vmem:[%s168] sm:$0x3]
      %v170 = vunpack.c.l.bf16 %v169
      %v171 = vmax.f32 %v167, %v170
      %v172 = vpack.c.bf16 %v171, %v171
      %vm173 = vcmask 361472
      %174 = vst.msk [vmem:[%s145] sm:$0x3] %vm173, %v172
      %p175 = scmp.lt.s32.totalorder %s16, 1
      %s176 = scalar_select %p175, %s16, 1
      %p177 = scmp.lt.s32.totalorder %s17, 0
      %s178 = scalar_select %p177, %s17, 0
      %s179 = sadd.s32 %s178, %s176
      %s180 = smul.addr %s179, 2
      %s181 = scalar_lea.vmem %s1, %s180
      // Predicated region
      $region25: #{_lambda_.12} parent=23 // pred_check
        %p182 = pneg %p72
      $region26: #{_lambda_.12} parent=23 // pred_check_branch
        %184 = sbr.rel (%p182) target = $region28
      $region27: #{_lambda_.12} parent=23 // pred_region
        _
      $region28: #{_lambda_.12} parent=23 // pred_fallthru
        _
    $region24: #{_lambda_.12} parent=5 // pred_fallthru
      _
    %p185 = scmp.le.s32.totalorder 2, %s7
    // Predicated region
    $region29: #{_lambda_.12} parent=5 // pred_check
      %p186 = pneg %p185
    $region30: #{_lambda_.12} parent=5 // pred_check_branch
      %188 = sbr.rel (%p186) target = $region32
    $region31: #{_lambda_.12} parent=5 // pred_region
      %s189 = ssub.s32 %s7, 2
      // Predicated region
      $region33: #{_lambda_.12} parent=31 // pred_check
        %p190 = pneg %p78
      $region34: #{_lambda_.12} parent=31 // pred_check_branch
        %192 = sbr.rel (%p190) target = $region36
      $region35: #{_lambda_.12} parent=31 // pred_region
        %p193 = scmp.lt.s32.totalorder %s18, 1
        %s194 = scalar_select %p193, %s18, 1
        %p195 = scmp.lt.s32.totalorder %s19, 0
        %s196 = scalar_select %p195, %s19, 0
        %s197 = sadd.s32 %s196, %s194
        %s198 = smul.addr %s197, 2
        %s199 = scalar_lea.vmem %s1, %s198
      $region36: #{_lambda_.12} parent=31 // pred_fallthru
        _
    $region32: #{_lambda_.12} parent=5 // pred_fallthru
      _
  $region6: #{_lambda_.12} parent=0 // loop_footer
    %s11 = sadd.s32 1, %s7
  $region7: #{_lambda_.12} parent=0 // loop_footer_branch
    %6 = sbr.rel target = $region3
  $region8: #{_lambda_.12} parent=0 // loop_exit
    _

// kernel: _lambda_.13
$region0: #{_lambda_.13}
  #allocation0 [shape = 'u32[]', space=smem, size = 0x4, offset = 0x4, fixed_abs, tag = 'smem constant byte address 0x4 - core index']
  #allocation1 [shape = 'u32[144,128]{1,0:T(1,128)}', space=vmem, size = 0x12000, scoped, tag = 'internal scratch']
  %s0 = inlined_call_operand.vmem [shape: bf16[2,7,4,9], index: 0, kind: input, shape index: {}]
  %s1 = inlined_call_operand.vmem [shape: bf16[2,4,9], index: 1, kind: output, shape index: {}]
  %s2 = sld [smem:[#allocation0]]
  $region37: #{_lambda_.13} parent=0
    _
  %s4 = ssub.s32 1, %s2
  %s5 = scalar_select 0, %s4, %s2
  loop: start=0, step=1, limit=4
  $region2: #{_lambda_.13} parent=0 // loop_pre_header
    _
  $region3: #{_lambda_.13} parent=0 // loop_header
    %s7 = sphi 0, %s11
    %p8 = scmp.ge.s32.totalorder %s7, 4
    %s14 = sphi 0, %s26
    %s15 = sphi 0, %s22
    %s16 = sphi 0, %s14
    %s17 = sphi 0, %s15
    %s18 = sphi 0, %s16
    %s19 = sphi 0, %s17
    %s31 = sphi 0, %s33
    %s34 = sphi 0, %s31
    %s35 = sphi 0, %s34
    %s51 = sphi 0, %s35
    %s59 = sphi 0, %s61
    %s62 = sphi 0, %s59
    %s63 = sphi 0, %s62
    %s79 = sphi 0, %s63
  $region4: #{_lambda_.13} parent=0 // loop_header_branch
    %10 = sbr.rel (%p8) target = $region8
  $region5: #{_lambda_.13} parent=0 // loop_body
    %s12 = ssub.s32 %s7, 1
    %s13 = ssub.s32 %s7, 2
    %s20 = sadd.s32 1, %s15
    %p21 = scmp.ge.s32.totalorder %s20, 1
    %s22 = scalar_select %p21, 0, %s20
    %s23 = sadd.s32 1, %s14
    %s24 = scalar_select %p21, %s23, %s14
    %p25 = scmp.ge.s32.totalorder %s24, 2
    %s26 = scalar_select %p25, 0, %s24
    %s27 = ssub.s32 %s14, %s26
    %s28 = ssub.s32 %s15, %s22
    %s29 = sor.u32 %s27, %s28
    %p30 = scmp.eq.s32.totalorder %s29, 0
    %s32 = sadd.s32 %s31, 1
    %s33 = scalar_select %p30, %s31, %s32
    %p36 = pneg %p30
    %p37 = scmp.eq.s32.totalorder %s7, 1
    %p38 = por %p36, %p37
    %p39 = scmp.ne.s32.totalorder %s31, %s34
    %p40 = scmp.eq.s32.totalorder %s7, 0
    %p41 = por %p39, %p40
    %p42 = scmp.ne.s32.totalorder %s31, %s34
    %p43 = scmp.eq.s32.totalorder %s12, 1
    %p44 = por %p42, %p43
    %p45 = scmp.ne.s32.totalorder %s34, %s35
    %p46 = scmp.eq.s32.totalorder %s12, 0
    %p47 = por %p45, %p46
    %p48 = scmp.ne.s32.totalorder %s34, %s35
    %p49 = scmp.eq.s32.totalorder %s13, 1
    %p50 = por %p48, %p49
    %p52 = scmp.ne.s32.totalorder %s35, %s51
    %p53 = scmp.eq.s32.totalorder %s13, 0
    %p54 = por %p52, %p53
    %s55 = ssub.s32 %s14, %s26
    %s56 = ssub.s32 %s15, %s22
    %s57 = sor.u32 %s55, %s56
    %p58 = scmp.eq.s32.totalorder %s57, 0
    %s60 = sadd.s32 %s59, 1
    %s61 = scalar_select %p58, %s59, %s60
    %p64 = pneg %p58
    %p65 = scmp.eq.s32.totalorder %s7, 1
    %p66 = por %p64, %p65
    %p67 = scmp.ne.s32.totalorder %s59, %s62
    %p68 = scmp.eq.s32.totalorder %s7, 0
    %p69 = por %p67, %p68
    %p70 = scmp.ne.s32.totalorder %s59, %s62
    %p71 = scmp.eq.s32.totalorder %s12, 1
    %p72 = por %p70, %p71
    %p73 = scmp.ne.s32.totalorder %s62, %s63
    %p74 = scmp.eq.s32.totalorder %s12, 0
    %p75 = por %p73, %p74
    %p76 = scmp.ne.s32.totalorder %s62, %s63
    %p77 = scmp.eq.s32.totalorder %s13, 1
    %p78 = por %p76, %p77
    %p80 = scmp.ne.s32.totalorder %s63, %s79
    %p81 = scmp.eq.s32.totalorder %s13, 0
    %p82 = por %p80, %p81
    %p83 = scmp.le.s32.totalorder 1, %s7
    %p84 = scmp.lt.s32.totalorder %s7, 3
    %p85 = pnand %p83, %p84
    %p86 = pneg %p85
    // Predicated region
    $region9: #{_lambda_.13} parent=5 // pred_check
      _
    $region10: #{_lambda_.13} parent=5 // pred_check_branch
      %88 = sbr.rel (%p85) target = $region12
    $region11: #{_lambda_.13} parent=5 // pred_region
      %s89 = ssub.s32 %s7, 1
    $region12: #{_lambda_.13} parent=5 // pred_fallthru
      _
    %p90 = scmp.lt.s32.totalorder %s7, 2
    // Predicated region
    $region13: #{_lambda_.13} parent=5 // pred_check
      %p91 = pneg %p90
    $region14: #{_lambda_.13} parent=5 // pred_check_branch
      %93 = sbr.rel (%p91) target = $region16
    $region15: #{_lambda_.13} parent=5 // pred_region
      // Predicated region
      $region17: #{_lambda_.13} parent=15 // pred_check
        %p94 = pneg %p41
      $region18: #{_lambda_.13} parent=15 // pred_check_branch
        %96 = sbr.rel (%p94) target = $region20
      $region19: #{_lambda_.13} parent=15 // pred_region
        %p97 = scmp.lt.s32.totalorder %s14, 1
        %s98 = scalar_select %p97, %s14, 1
        %p99 = scmp.lt.s32.totalorder %s15, 0
        %s100 = scalar_select %p99, %s15, 0
        %s101 = smul.addr %s98, 7
        %s102 = sadd.s32 %s100, %s101
        %s103 = smul.addr %s102, 2
        %s104 = scalar_lea.vmem %s0, %s103
      $region20: #{_lambda_.13} parent=15 // pred_fallthru
        _
    $region16: #{_lambda_.13} parent=5 // pred_fallthru
      _
    %p105 = scmp.le.s32.totalorder 1, %s7
    %p106 = scmp.lt.s32.totalorder %s7, 3
    %p107 = pnand %p105, %p106
    %p108 = pneg %p107
    // Predicated region
    $region21: #{_lambda_.13} parent=5 // pred_check
      _
    $region22: #{_lambda_.13} parent=5 // pred_check_branch
      %110 = sbr.rel (%p107) target = $region24
    $region23: #{_lambda_.13} parent=5 // pred_region
      %s111 = ssub.s32 %s7, 1
      %p112 = scmp.lt.s32.totalorder %s16, 1
      %s113 = scalar_select %p112, %s16, 1
      %p114 = scmp.lt.s32.totalorder %s17, 0
      %s115 = scalar_select %p114, %s17, 0
      %s116 = smul.addr %s113, 7
      %s117 = sadd.s32 %s115, %s116
      %s118 = smul.addr %s117, 2
      %s119 = scalar_lea.vmem %s0, %s118
      %p120 = pneg %p47
      %p121 = pneg %p44
      %p122 = pneg %p75
      %p123 = pneg %p72
      %p124 = scmp.lt.s32.totalorder %s16, 1
      %s125 = scalar_select %p124, %s16, 1
      %p126 = scmp.lt.s32.totalorder %s17, 0
      %s127 = scalar_select %p126, %s17, 0
      %s128 = sadd.s32 %s127, %s125
      %s129 = smul.addr %s128, 2
      %s130 = scalar_lea.vmem %s1, %s129
      %p131 = scmp.lt.s32.totalorder %s16, 1
      %s132 = scalar_select %p131, %s16, 1
      %p133 = scmp.lt.s32.totalorder %s17, 0
      %s134 = scalar_select %p133, %s17, 0
      %s135 = smul.addr %s132, 7
      %s136 = sadd.s32 %s134, %s135
      %s137 = smul.addr %s136, 2
      %s138 = scalar_lea.vmem %s0, %s137
      %p139 = scmp.lt.s32.totalorder %s16, 1
      %s140 = scalar_select %p139, %s16, 1
      %p141 = scmp.lt.s32.totalorder %s17, 0
      %s142 = scalar_select %p141, %s17, 0
      %s143 = sadd.s32 %s142, %s140
      %s144 = smul.addr %s143, 2
      %s145 = scalar_lea.vmem %s1, %s144
      %v146 = vld [vmem:[%s138] sm:$0x3]
      %v147 = vunpack.c.l.bf16 %v146
      %s148 = scalar_lea.vmem %s138, 2
      %v149 = vld [vmem:[%s148] sm:$0x3]
      %v150 = vunpack.c.l.bf16 %v149
      %v151 = vmax.f32 %v147, %v150
      %s152 = scalar_lea.vmem %s138, 4
      %v153 = vld [vmem:[%s152] sm:$0x3]
      %v154 = vunpack.c.l.bf16 %v153
      %v155 = vmax.f32 %v151, %v154
      %s156 = scalar_lea.vmem %s138, 6
      %v157 = vld [vmem:[%s156] sm:$0x3]
      %v158 = vunpack.c.l.bf16 %v157
      %v159 = vmax.f32 %v155, %v158
      %s160 = scalar_lea.vmem %s138, 8
      %v161 = vld [vmem:[%s160] sm:$0x3]
      %v162 = vunpack.c.l.bf16 %v161
      %v163 = vmax.f32 %v159, %v162
      %s164 = scalar_lea.vmem %s138, 10
      %v165 = vld [vmem:[%s164] sm:$0x3]
      %v166 = vunpack.c.l.bf16 %v165
      %v167 = vmax.f32 %v163, %v166
      %s168 = scalar_lea.vmem %s138, 12
      %v169 = vld [vmem:[%s168] sm:$0x3]
      %v170 = vunpack.c.l.bf16 %v169
      %v171 = vmax.f32 %v167, %v170
      %v172 = vpack.c.bf16 %v171, %v171
      %vm173 = vcmask 66560
      %174 = vst.msk [vmem:[%s145] sm:$0x3] %vm173, %v172
      %p175 = scmp.lt.s32.totalorder %s16, 1
      %s176 = scalar_select %p175, %s16, 1
      %p177 = scmp.lt.s32.totalorder %s17, 0
      %s178 = scalar_select %p177, %s17, 0
      %s179 = sadd.s32 %s178, %s176
      %s180 = smul.addr %s179, 2
      %s181 = scalar_lea.vmem %s1, %s180
      // Predicated region
      $region25: #{_lambda_.13} parent=23 // pred_check
        %p182 = pneg %p72
      $region26: #{_lambda_.13} parent=23 // pred_check_branch
        %184 = sbr.rel (%p182) target = $region28
      $region27: #{_lambda_.13} parent=23 // pred_region
        _
      $region28: #{_lambda_.13} parent=23 // pred_fallthru
        _
    $region24: #{_lambda_.13} parent=5 // pred_fallthru
      _
    %p185 = scmp.le.s32.totalorder 2, %s7
    // Predicated region
    $region29: #{_lambda_.13} parent=5 // pred_check
      %p186 = pneg %p185
    $region30: #{_lambda_.13} parent=5 // pred_check_branch
      %188 = sbr.rel (%p186) target = $region32
    $region31: #{_lambda_.13} parent=5 // pred_region
      %s189 = ssub.s32 %s7, 2
      // Predicated region
      $region33: #{_lambda_.13} parent=31 // pred_check
        %p190 = pneg %p78
      $region34: #{_lambda_.13} parent=31 // pred_check_branch
        %192 = sbr.rel (%p190) target = $region36
      $region35: #{_lambda_.13} parent=31 // pred_region
        %p193 = scmp.lt.s32.totalorder %s18, 1
        %s194 = scalar_select %p193, %s18, 1
        %p195 = scmp.lt.s32.totalorder %s19, 0
        %s196 = scalar_select %p195, %s19, 0
        %s197 = sadd.s32 %s196, %s194
        %s198 = smul.addr %s197, 2
        %s199 = scalar_lea.vmem %s1, %s198
      $region36: #{_lambda_.13} parent=31 // pred_fallthru
        _
    $region32: #{_lambda_.13} parent=5 // pred_fallthru
      _
  $region6: #{_lambda_.13} parent=0 // loop_footer
    %s11 = sadd.s32 1, %s7
  $region7: #{_lambda_.13} parent=0 // loop_footer_branch
    %6 = sbr.rel target = $region3
  $region8: #{_lambda_.13} parent=0 // loop_exit
    _

// kernel: _lambda_.14
$region0: #{_lambda_.14}
  #allocation0 [shape = 'u32[]', space=smem, size = 0x4, offset = 0x4, fixed_abs, tag = 'smem constant byte address 0x4 - core index']
  #allocation1 [shape = 'u32[144,128]{1,0:T(1,128)}', space=vmem, size = 0x12000, scoped, tag = 'internal scratch']
  %s0 = inlined_call_operand.vmem [shape: bf16[4,36], index: 0, kind: input, shape index: {}]
  %s1 = inlined_call_operand.vmem [shape: bf16[2,36,9], index: 1, kind: input, shape index: {}]
  %s2 = inlined_call_operand.vmem [shape: f32[4,1], index: 2, kind: input, shape index: {}]
  %s3 = inlined_call_operand.vmem [shape: bf16[2,4,9], index: 3, kind: output, shape index: {}]
  %s4 = sld [smem:[#allocation0]]
  $region45: #{_lambda_.14} parent=0
    _
  %s6 = ssub.s32 1, %s4
  %s7 = scalar_select 0, %s6, %s4
  loop: start=0, step=1, limit=4
  $region2: #{_lambda_.14} parent=0 // loop_pre_header
    _
  $region3: #{_lambda_.14} parent=0 // loop_header
    %s9 = sphi 0, %s13
    %p10 = scmp.ge.s32.totalorder %s9, 4
    %s16 = sphi 0, %s28
    %s17 = sphi 0, %s24
    %s18 = sphi 0, %s16
    %s19 = sphi 0, %s17
    %s20 = sphi 0, %s18
    %s21 = sphi 0, %s19
    %s29 = sphi 0, %s29
    %s31 = sphi 0, %s29
    %s32 = sphi 0, %s31
    %s46 = sphi 0, %s32
    %s54 = sphi 0, %s56
    %s57 = sphi 0, %s54
    %s58 = sphi 0, %s57
    %s74 = sphi 0, %s58
    %s78 = sphi 0, %s78
    %s80 = sphi 0, %s78
    %s81 = sphi 0, %s80
    %s95 = sphi 0, %s81
    %s103 = sphi 0, %s105
    %s106 = sphi 0, %s103
    %s107 = sphi 0, %s106
    %s123 = sphi 0, %s107
  $region4: #{_lambda_.14} parent=0 // loop_header_branch
    %12 = sbr.rel (%p10) target = $region8
  $region5: #{_lambda_.14} parent=0 // loop_body
    %s14 = ssub.s32 %s9, 1
    %s15 = ssub.s32 %s9, 2
    %s22 = sadd.s32 1, %s17
    %p23 = scmp.ge.s32.totalorder %s22, 1
    %s24 = scalar_select %p23, 0, %s22
    %s25 = sadd.s32 1, %s16
    %s26 = scalar_select %p23, %s25, %s16
    %p27 = scmp.ge.s32.totalorder %s26, 2
    %s28 = scalar_select %p27, 0, %s26
    %s30 = sadd.s32 %s29, 1
    %p33 = scmp.eq.s32.totalorder %s9, 1
    %p34 = scmp.ne.s32.totalorder %s29, %s31
    %p35 = scmp.eq.s32.totalorder %s9, 0
    %p36 = por %p34, %p35
    %p37 = scmp.ne.s32.totalorder %s29, %s31
    %p38 = scmp.eq.s32.totalorder %s14, 1
    %p39 = por %p37, %p38
    %p40 = scmp.ne.s32.totalorder %s31, %s32
    %p41 = scmp.eq.s32.totalorder %s14, 0
    %p42 = por %p40, %p41
    %p43 = scmp.ne.s32.totalorder %s31, %s32
    %p44 = scmp.eq.s32.totalorder %s15, 1
    %p45 = por %p43, %p44
    %p47 = scmp.ne.s32.totalorder %s32, %s46
    %p48 = scmp.eq.s32.totalorder %s15, 0
    %p49 = por %p47, %p48
    %s50 = ssub.s32 %s16, %s28
    %s51 = ssub.s32 %s17, %s24
    %s52 = sor.u32 %s50, %s51
    %p53 = scmp.eq.s32.totalorder %s52, 0
    %s55 = sadd.s32 %s54, 1
    %s56 = scalar_select %p53, %s54, %s55
    %p59 = pneg %p53
    %p60 = scmp.eq.s32.totalorder %s9, 1
    %p61 = por %p59, %p60
    %p62 = scmp.ne.s32.totalorder %s54, %s57
    %p63 = scmp.eq.s32.totalorder %s9, 0
    %p64 = por %p62, %p63
    %p65 = scmp.ne.s32.totalorder %s54, %s57
    %p66 = scmp.eq.s32.totalorder %s14, 1
    %p67 = por %p65, %p66
    %p68 = scmp.ne.s32.totalorder %s57, %s58
    %p69 = scmp.eq.s32.totalorder %s14, 0
    %p70 = por %p68, %p69
    %p71 = scmp.ne.s32.totalorder %s57, %s58
    %p72 = scmp.eq.s32.totalorder %s15, 1
    %p73 = por %p71, %p72
    %p75 = scmp.ne.s32.totalorder %s58, %s74
    %p76 = scmp.eq.s32.totalorder %s15, 0
    %p77 = por %p75, %p76
    %s79 = sadd.s32 %s78, 1
    %p82 = scmp.eq.s32.totalorder %s9, 1
    %p83 = scmp.ne.s32.totalorder %s78, %s80
    %p84 = scmp.eq.s32.totalorder %s9, 0
    %p85 = por %p83, %p84
    %p86 = scmp.ne.s32.totalorder %s78, %s80
    %p87 = scmp.eq.s32.totalorder %s14, 1
    %p88 = por %p86, %p87
    %p89 = scmp.ne.s32.totalorder %s80, %s81
    %p90 = scmp.eq.s32.totalorder %s14, 0
    %p91 = por %p89, %p90
    %p92 = scmp.ne.s32.totalorder %s80, %s81
    %p93 = scmp.eq.s32.totalorder %s15, 1
    %p94 = por %p92, %p93
    %p96 = scmp.ne.s32.totalorder %s81, %s95
    %p97 = scmp.eq.s32.totalorder %s15, 0
    %p98 = por %p96, %p97
    %s99 = ssub.s32 %s16, %s28
    %s100 = ssub.s32 %s17, %s24
    %s101 = sor.u32 %s99, %s100
    %p102 = scmp.eq.s32.totalorder %s101, 0
    %s104 = sadd.s32 %s103, 1
    %s105 = scalar_select %p102, %s103, %s104
    %p108 = pneg %p102
    %p109 = scmp.eq.s32.totalorder %s9, 1
    %p110 = por %p108, %p109
    %p111 = scmp.ne.s32.totalorder %s103, %s106
    %p112 = scmp.eq.s32.totalorder %s9, 0
    %p113 = por %p111, %p112
    %p114 = scmp.ne.s32.totalorder %s103, %s106
    %p115 = scmp.eq.s32.totalorder %s14, 1
    %p116 = por %p114, %p115
    %p117 = scmp.ne.s32.totalorder %s106, %s107
    %p118 = scmp.eq.s32.totalorder %s14, 0
    %p119 = por %p117, %p118
    %p120 = scmp.ne.s32.totalorder %s106, %s107
    %p121 = scmp.eq.s32.totalorder %s15, 1
    %p122 = por %p120, %p121
    %p124 = scmp.ne.s32.totalorder %s107, %s123
    %p125 = scmp.eq.s32.totalorder %s15, 0
    %p126 = por %p124, %p125
    %p127 = scmp.le.s32.totalorder 1, %s9
    %p128 = scmp.lt.s32.totalorder %s9, 3
    %p129 = pnand %p127, %p128
    %p130 = pneg %p129
    // Predicated region
    $region9: #{_lambda_.14} parent=5 // pred_check
      _
    $region10: #{_lambda_.14} parent=5 // pred_check_branch
      %132 = sbr.rel (%p129) target = $region12
    $region11: #{_lambda_.14} parent=5 // pred_region
      %s133 = ssub.s32 %s9, 1
      // Predicated region
      $region13: #{_lambda_.14} parent=11 // pred_check
        %p134 = pneg %p42
      $region14: #{_lambda_.14} parent=11 // pred_check_branch
        %136 = sbr.rel (%p134) target = $region16
      $region15: #{_lambda_.14} parent=11 // pred_region
        _
      $region16: #{_lambda_.14} parent=11 // pred_fallthru
        _
      // Predicated region
      $region17: #{_lambda_.14} parent=11 // pred_check
        %p137 = pneg %p91
      $region18: #{_lambda_.14} parent=11 // pred_check_branch
        %139 = sbr.rel (%p137) target = $region20
      $region19: #{_lambda_.14} parent=11 // pred_region
        _
      $region20: #{_lambda_.14} parent=11 // pred_fallthru
        _
    $region12: #{_lambda_.14} parent=5 // pred_fallthru
      _
    %p140 = scmp.lt.s32.totalorder %s9, 2
    // Predicated region
    $region21: #{_lambda_.14} parent=5 // pred_check
      %p141 = pneg %p140
    $region22: #{_lambda_.14} parent=5 // pred_check_branch
      %143 = sbr.rel (%p141) target = $region24
    $region23: #{_lambda_.14} parent=5 // pred_region
      // Predicated region
      $region25: #{_lambda_.14} parent=23 // pred_check
        %p144 = pneg %p64
      $region26: #{_lambda_.14} parent=23 // pred_check_branch
        %146 = sbr.rel (%p144) target = $region28
      $region27: #{_lambda_.14} parent=23 // pred_region
        %p147 = scmp.lt.s32.totalorder %s16, 1
        %s148 = scalar_select %p147, %s16, 1
        %p149 = scmp.lt.s32.totalorder %s17, 0
        %s150 = scalar_select %p149, %s17, 0
        %s151 = smul.addr %s148, 5
        %s152 = sadd.s32 %s150, %s151
        %s153 = smul.addr %s152, 4
        %s154 = scalar_lea.vmem %s1, %s153
      $region28: #{_lambda_.14} parent=23 // pred_fallthru
        _
    $region24: #{_lambda_.14} parent=5 // pred_fallthru
      _
    %p155 = scmp.le.s32.totalorder 1, %s9
    %p156 = scmp.lt.s32.totalorder %s9, 3
    %p157 = pnand %p155, %p156
    %p158 = pneg %p157
    // Predicated region
    $region29: #{_lambda_.14} parent=5 // pred_check
      _
    $region30: #{_lambda_.14} parent=5 // pred_check_branch
      %160 = sbr.rel (%p157) target = $region32
    $region31: #{_lambda_.14} parent=5 // pred_region
      %s161 = ssub.s32 %s9, 1
      %p162 = pneg %p42
      %p163 = pneg %p39
      %p164 = scmp.lt.s32.totalorder %s18, 1
      %s165 = scalar_select %p164, %s18, 1
      %p166 = scmp.lt.s32.totalorder %s19, 0
      %s167 = scalar_select %p166, %s19, 0
      %s168 = smul.addr %s165, 5
      %s169 = sadd.s32 %s167, %s168
      %s170 = smul.addr %s169, 4
      %s171 = scalar_lea.vmem %s1, %s170
      %p172 = pneg %p70
      %p173 = pneg %p67
      %p174 = pneg %p91
      %p175 = pneg %p88
      %p176 = pneg %p119
      %p177 = pneg %p116
      %p178 = scmp.lt.s32.totalorder %s18, 1
      %s179 = scalar_select %p178, %s18, 1
      %p180 = scmp.lt.s32.totalorder %s19, 0
      %s181 = scalar_select %p180, %s19, 0
      %s182 = sadd.s32 %s181, %s179
      %s183 = smul.addr %s182, 2
      %s184 = scalar_lea.vmem %s3, %s183
      %p185 = scmp.lt.s32.totalorder %s18, 1
      %s186 = scalar_select %p185, %s18, 1
      %p187 = scmp.lt.s32.totalorder %s19, 0
      %s188 = scalar_select %p187, %s19, 0
      %s189 = smul.addr %s186, 5
      %s190 = sadd.s32 %s188, %s189
      %s191 = smul.addr %s190, 4
      %s192 = scalar_lea.vmem %s1, %s191
      %p193 = scmp.lt.s32.totalorder %s18, 1
      %s194 = scalar_select %p193, %s18, 1
      %p195 = scmp.lt.s32.totalorder %s19, 0
      %s196 = scalar_select %p195, %s19, 0
      %s197 = sadd.s32 %s196, %s194
      %s198 = smul.addr %s197, 2
      %s199 = scalar_lea.vmem %s3, %s198
      %v201 = vld [vmem:[%s192] sm:$0xf]
      %v202 = vld [vmem:[%s192 + $0x4] sm:$0xf]
      %v203 = vld [vmem:[%s192 + $0x8] sm:$0xf]
      %v204 = vld [vmem:[%s192 + $0xc] sm:$0xf]
      %v205 = vld [vmem:[%s192 + $0x10] sm:$0x3]
      %v206 = vld [vmem:[%s0] sm:$0x3]
      %v207 = vld [vmem:[%s2] sm:$0xf]
      %209 = vset.pattern.permute.xlu0 0
      %210 = vperm.xlu0 %209, %v207
      %v211 = vpop.permute.xlu0 %210
      %v218 = vunpack.c.l.b16 %v201
      %v219 = vunpack.c.l.b16 %v202
      %v220 = vunpack.c.l.b16 %v203
      %v221 = vunpack.c.l.b16 %v204
      %v222 = vunpack.c.l.b16 %v205
      %v223 = vpack.c.b16 %v219, %v218
      %v224 = vpack.c.b16 %v221, %v220
      %v225 = vpack.c.b16 %v222, %v222
      %vm228 = vcmask 293888
      %v230 = vsel %vm228, %v206, 0
      %vm232 = vcmask 1041408
      %v234 = vsel %vm232, %v225, 0
      %236 = vmatprep.subr.bf16.mxu0 0
      %237 = vmatpush1.bf16.msra.mxu0 0
      %238 = vmatprep.subr.bf16.mxu0 0
      %239 = vmatpush1.bf16.msra.mxu0 0
      %240 = vmatprep.subr.bf16.mxu0 0
      %241 = vmatpush1.bf16.msra.mxu0 0
      %242 = vmatprep.subr.bf16.mxu0 0
      %243 = vmatpush1.bf16.msra.mxu0 0
      %244 = vmatprep.subr.bf16.mxu0 0
      %245 = vmatpush1.bf16.msra.mxu0 0
      %246 = vmatprep.subr.bf16.mxu0 0
      %247 = vmatpush1.bf16.msra.mxu0 %v234
      %248 = vmatprep.subr.bf16.mxu0 0
      %249 = vmatpush1.bf16.msra.mxu0 %v224
      %250 = vmatprep.subr.bf16.mxu0 0
      %251 = vmatpush1.bf16.msra.mxu0 %v223
      %252 = vmatprep.subr.bf16.mxu0 0
      %253 = vmatpush2.bf16.msra.mxu0 0
      %254 = vmatprep.subr.bf16.mxu0 0
      %255 = vmatpush2.bf16.msra.mxu0 0
      %256 = vmatprep.subr.bf16.mxu0 0
      %257 = vmatpush2.bf16.msra.mxu0 0
      %258 = vmatprep.subr.bf16.mxu0 0
      %259 = vmatpush2.bf16.msra.mxu0 0
      %260 = vmatprep.subr.bf16.mxu0 0
      %261 = vmatpush2.bf16.msra.mxu0 0
      %262 = vmatprep.subr.bf16.mxu0 0
      %263 = vmatpush2.bf16.msra.mxu0 0
      %264 = vmatprep.subr.bf16.mxu0 0
      %265 = vmatpush2.bf16.msra.mxu0 0
      %266 = vmatprep.subr.bf16.mxu0 0
      %267 = vmatpush2.bf16.msra.mxu0 0
      %268 = vmatprep.mubr.bf16.mxu0 0
      %269 = vmatmul.mubr.bf16.gmra.mxu0 %v230
      %v270 = vpop.f32.mrf.mxu0
      %v271 = vadd.f32 %v211, %v270
      %v272 = vpop.f32.mrf.mxu0
      %v273 = vpop.f32.mrf.mxu0
      %v274 = vpop.f32.mrf.mxu0
      %275 = vdwg.mxu0
      %v276 = vmax.f32 %v271, 0.0
      %v277 = vpack.c.bf16 %v276, %v276
      %vm278 = vcmask 66560
      %279 = vst.msk [vmem:[%s199] sm:$0x3] %vm278, %v277
      %p280 = scmp.lt.s32.totalorder %s18, 1
      %s281 = scalar_select %p280, %s18, 1
      %p282 = scmp.lt.s32.totalorder %s19, 0
      %s283 = scalar_select %p282, %s19, 0
      %s284 = sadd.s32 %s283, %s281
      %s285 = smul.addr %s284, 2
      %s286 = scalar_lea.vmem %s3, %s285
      // Predicated region
      $region33: #{_lambda_.14} parent=31 // pred_check
        %p287 = pneg %p116
      $region34: #{_lambda_.14} parent=31 // pred_check_branch
        %289 = sbr.rel (%p287) target = $region36
      $region35: #{_lambda_.14} parent=31 // pred_region
        _
      $region36: #{_lambda_.14} parent=31 // pred_fallthru
        _
    $region32: #{_lambda_.14} parent=5 // pred_fallthru
      _
    %p290 = scmp.le.s32.totalorder 2, %s9
    // Predicated region
    $region37: #{_lambda_.14} parent=5 // pred_check
      %p291 = pneg %p290
    $region38: #{_lambda_.14} parent=5 // pred_check_branch
      %293 = sbr.rel (%p291) target = $region40
    $region39: #{_lambda_.14} parent=5 // pred_region
      %s294 = ssub.s32 %s9, 2
      // Predicated region
      $region41: #{_lambda_.14} parent=39 // pred_check
        %p295 = pneg %p122
      $region42: #{_lambda_.14} parent=39 // pred_check_branch
        %297 = sbr.rel (%p295) target = $region44
      $region43: #{_lambda_.14} parent=39 // pred_region
        %p298 = scmp.lt.s32.totalorder %s20, 1
        %s299 = scalar_select %p298, %s20, 1
        %p300 = scmp.lt.s32.totalorder %s21, 0
        %s301 = scalar_select %p300, %s21, 0
        %s302 = sadd.s32 %s301, %s299
        %s303 = smul.addr %s302, 2
        %s304 = scalar_lea.vmem %s3, %s303
      $region44: #{_lambda_.14} parent=39 // pred_fallthru
        _
    $region40: #{_lambda_.14} parent=5 // pred_fallthru
      _
  $region6: #{_lambda_.14} parent=0 // loop_footer
    %s13 = sadd.s32 1, %s9
  $region7: #{_lambda_.14} parent=0 // loop_footer_branch
    %8 = sbr.rel target = $region3
  $region8: #{_lambda_.14} parent=0 // loop_exit
    _

// kernel: _lambda_.16
$region0: #{_lambda_.16}
  #allocation0 [shape = 'u32[]', space=smem, size = 0x4, offset = 0x4, fixed_abs, tag = 'smem constant byte address 0x4 - core index']
  #allocation1 [shape = 'u32[144,128]{1,0:T(1,128)}', space=vmem, size = 0x12000, scoped, tag = 'internal scratch']
  %s0 = inlined_call_operand.vmem [shape: bf16[4,36], index: 0, kind: input, shape index: {}]
  %s1 = inlined_call_operand.vmem [shape: bf16[2,36,9], index: 1, kind: input, shape index: {}]
  %s2 = inlined_call_operand.vmem [shape: f32[4,1], index: 2, kind: input, shape index: {}]
  %s3 = inlined_call_operand.vmem [shape: bf16[2,4,9], index: 3, kind: output, shape index: {}]
  %s4 = sld [smem:[#allocation0]]
  $region45: #{_lambda_.16} parent=0
    _
  %s6 = ssub.s32 1, %s4
  %s7 = scalar_select 0, %s6, %s4
  loop: start=0, step=1, limit=4
  $region2: #{_lambda_.16} parent=0 // loop_pre_header
    _
  $region3: #{_lambda_.16} parent=0 // loop_header
    %s9 = sphi 0, %s13
    %p10 = scmp.ge.s32.totalorder %s9, 4
    %s16 = sphi 0, %s28
    %s17 = sphi 0, %s24
    %s18 = sphi 0, %s16
    %s19 = sphi 0, %s17
    %s20 = sphi 0, %s18
    %s21 = sphi 0, %s19
    %s29 = sphi 0, %s29
    %s31 = sphi 0, %s29
    %s32 = sphi 0, %s31
    %s46 = sphi 0, %s32
    %s54 = sphi 0, %s56
    %s57 = sphi 0, %s54
    %s58 = sphi 0, %s57
    %s74 = sphi 0, %s58
    %s78 = sphi 0, %s78
    %s80 = sphi 0, %s78
    %s81 = sphi 0, %s80
    %s95 = sphi 0, %s81
    %s103 = sphi 0, %s105
    %s106 = sphi 0, %s103
    %s107 = sphi 0, %s106
    %s123 = sphi 0, %s107
  $region4: #{_lambda_.16} parent=0 // loop_header_branch
    %12 = sbr.rel (%p10) target = $region8
  $region5: #{_lambda_.16} parent=0 // loop_body
    %s14 = ssub.s32 %s9, 1
    %s15 = ssub.s32 %s9, 2
    %s22 = sadd.s32 1, %s17
    %p23 = scmp.ge.s32.totalorder %s22, 1
    %s24 = scalar_select %p23, 0, %s22
    %s25 = sadd.s32 1, %s16
    %s26 = scalar_select %p23, %s25, %s16
    %p27 = scmp.ge.s32.totalorder %s26, 2
    %s28 = scalar_select %p27, 0, %s26
    %s30 = sadd.s32 %s29, 1
    %p33 = scmp.eq.s32.totalorder %s9, 1
    %p34 = scmp.ne.s32.totalorder %s29, %s31
    %p35 = scmp.eq.s32.totalorder %s9, 0
    %p36 = por %p34, %p35
    %p37 = scmp.ne.s32.totalorder %s29, %s31
    %p38 = scmp.eq.s32.totalorder %s14, 1
    %p39 = por %p37, %p38
    %p40 = scmp.ne.s32.totalorder %s31, %s32
    %p41 = scmp.eq.s32.totalorder %s14, 0
    %p42 = por %p40, %p41
    %p43 = scmp.ne.s32.totalorder %s31, %s32
    %p44 = scmp.eq.s32.totalorder %s15, 1
    %p45 = por %p43, %p44
    %p47 = scmp.ne.s32.totalorder %s32, %s46
    %p48 = scmp.eq.s32.totalorder %s15, 0
    %p49 = por %p47, %p48
    %s50 = ssub.s32 %s16, %s28
    %s51 = ssub.s32 %s17, %s24
    %s52 = sor.u32 %s50, %s51
    %p53 = scmp.eq.s32.totalorder %s52, 0
    %s55 = sadd.s32 %s54, 1
    %s56 = scalar_select %p53, %s54, %s55
    %p59 = pneg %p53
    %p60 = scmp.eq.s32.totalorder %s9, 1
    %p61 = por %p59, %p60
    %p62 = scmp.ne.s32.totalorder %s54, %s57
    %p63 = scmp.eq.s32.totalorder %s9, 0
    %p64 = por %p62, %p63
    %p65 = scmp.ne.s32.totalorder %s54, %s57
    %p66 = scmp.eq.s32.totalorder %s14, 1
    %p67 = por %p65, %p66
    %p68 = scmp.ne.s32.totalorder %s57, %s58
    %p69 = scmp.eq.s32.totalorder %s14, 0
    %p70 = por %p68, %p69
    %p71 = scmp.ne.s32.totalorder %s57, %s58
    %p72 = scmp.eq.s32.totalorder %s15, 1
    %p73 = por %p71, %p72
    %p75 = scmp.ne.s32.totalorder %s58, %s74
    %p76 = scmp.eq.s32.totalorder %s15, 0
    %p77 = por %p75, %p76
    %s79 = sadd.s32 %s78, 1
    %p82 = scmp.eq.s32.totalorder %s9, 1
    %p83 = scmp.ne.s32.totalorder %s78, %s80
    %p84 = scmp.eq.s32.totalorder %s9, 0
    %p85 = por %p83, %p84
    %p86 = scmp.ne.s32.totalorder %s78, %s80
    %p87 = scmp.eq.s32.totalorder %s14, 1
    %p88 = por %p86, %p87
    %p89 = scmp.ne.s32.totalorder %s80, %s81
    %p90 = scmp.eq.s32.totalorder %s14, 0
    %p91 = por %p89, %p90
    %p92 = scmp.ne.s32.totalorder %s80, %s81
    %p93 = scmp.eq.s32.totalorder %s15, 1
    %p94 = por %p92, %p93
    %p96 = scmp.ne.s32.totalorder %s81, %s95
    %p97 = scmp.eq.s32.totalorder %s15, 0
    %p98 = por %p96, %p97
    %s99 = ssub.s32 %s16, %s28
    %s100 = ssub.s32 %s17, %s24
    %s101 = sor.u32 %s99, %s100
    %p102 = scmp.eq.s32.totalorder %s101, 0
    %s104 = sadd.s32 %s103, 1
    %s105 = scalar_select %p102, %s103, %s104
    %p108 = pneg %p102
    %p109 = scmp.eq.s32.totalorder %s9, 1
    %p110 = por %p108, %p109
    %p111 = scmp.ne.s32.totalorder %s103, %s106
    %p112 = scmp.eq.s32.totalorder %s9, 0
    %p113 = por %p111, %p112
    %p114 = scmp.ne.s32.totalorder %s103, %s106
    %p115 = scmp.eq.s32.totalorder %s14, 1
    %p116 = por %p114, %p115
    %p117 = scmp.ne.s32.totalorder %s106, %s107
    %p118 = scmp.eq.s32.totalorder %s14, 0
    %p119 = por %p117, %p118
    %p120 = scmp.ne.s32.totalorder %s106, %s107
    %p121 = scmp.eq.s32.totalorder %s15, 1
    %p122 = por %p120, %p121
    %p124 = scmp.ne.s32.totalorder %s107, %s123
    %p125 = scmp.eq.s32.totalorder %s15, 0
    %p126 = por %p124, %p125
    %p127 = scmp.le.s32.totalorder 1, %s9
    %p128 = scmp.lt.s32.totalorder %s9, 3
    %p129 = pnand %p127, %p128
    %p130 = pneg %p129
    // Predicated region
    $region9: #{_lambda_.16} parent=5 // pred_check
      _
    $region10: #{_lambda_.16} parent=5 // pred_check_branch
      %132 = sbr.rel (%p129) target = $region12
    $region11: #{_lambda_.16} parent=5 // pred_region
      %s133 = ssub.s32 %s9, 1
      // Predicated region
      $region13: #{_lambda_.16} parent=11 // pred_check
        %p134 = pneg %p42
      $region14: #{_lambda_.16} parent=11 // pred_check_branch
        %136 = sbr.rel (%p134) target = $region16
      $region15: #{_lambda_.16} parent=11 // pred_region
        _
      $region16: #{_lambda_.16} parent=11 // pred_fallthru
        _
      // Predicated region
      $region17: #{_lambda_.16} parent=11 // pred_check
        %p137 = pneg %p91
      $region18: #{_lambda_.16} parent=11 // pred_check_branch
        %139 = sbr.rel (%p137) target = $region20
      $region19: #{_lambda_.16} parent=11 // pred_region
        _
      $region20: #{_lambda_.16} parent=11 // pred_fallthru
        _
    $region12: #{_lambda_.16} parent=5 // pred_fallthru
      _
    %p140 = scmp.lt.s32.totalorder %s9, 2
    // Predicated region
    $region21: #{_lambda_.16} parent=5 // pred_check
      %p141 = pneg %p140
    $region22: #{_lambda_.16} parent=5 // pred_check_branch
      %143 = sbr.rel (%p141) target = $region24
    $region23: #{_lambda_.16} parent=5 // pred_region
      // Predicated region
      $region25: #{_lambda_.16} parent=23 // pred_check
        %p144 = pneg %p64
      $region26: #{_lambda_.16} parent=23 // pred_check_branch
        %146 = sbr.rel (%p144) target = $region28
      $region27: #{_lambda_.16} parent=23 // pred_region
        %p147 = scmp.lt.s32.totalorder %s16, 1
        %s148 = scalar_select %p147, %s16, 1
        %p149 = scmp.lt.s32.totalorder %s17, 0
        %s150 = scalar_select %p149, %s17, 0
        %s151 = smul.addr %s148, 5
        %s152 = sadd.s32 %s150, %s151
        %s153 = smul.addr %s152, 4
        %s154 = scalar_lea.vmem %s1, %s153
      $region28: #{_lambda_.16} parent=23 // pred_fallthru
        _
    $region24: #{_lambda_.16} parent=5 // pred_fallthru
      _
    %p155 = scmp.le.s32.totalorder 1, %s9
    %p156 = scmp.lt.s32.totalorder %s9, 3
    %p157 = pnand %p155, %p156
    %p158 = pneg %p157
    // Predicated region
    $region29: #{_lambda_.16} parent=5 // pred_check
      _
    $region30: #{_lambda_.16} parent=5 // pred_check_branch
      %160 = sbr.rel (%p157) target = $region32
    $region31: #{_lambda_.16} parent=5 // pred_region
      %s161 = ssub.s32 %s9, 1
      %p162 = pneg %p42
      %p163 = pneg %p39
      %p164 = scmp.lt.s32.totalorder %s18, 1
      %s165 = scalar_select %p164, %s18, 1
      %p166 = scmp.lt.s32.totalorder %s19, 0
      %s167 = scalar_select %p166, %s19, 0
      %s168 = smul.addr %s165, 5
      %s169 = sadd.s32 %s167, %s168
      %s170 = smul.addr %s169, 4
      %s171 = scalar_lea.vmem %s1, %s170
      %p172 = pneg %p70
      %p173 = pneg %p67
      %p174 = pneg %p91
      %p175 = pneg %p88
      %p176 = pneg %p119
      %p177 = pneg %p116
      %p178 = scmp.lt.s32.totalorder %s18, 1
      %s179 = scalar_select %p178, %s18, 1
      %p180 = scmp.lt.s32.totalorder %s19, 0
      %s181 = scalar_select %p180, %s19, 0
      %s182 = sadd.s32 %s181, %s179
      %s183 = smul.addr %s182, 2
      %s184 = scalar_lea.vmem %s3, %s183
      %p185 = scmp.lt.s32.totalorder %s18, 1
      %s186 = scalar_select %p185, %s18, 1
      %p187 = scmp.lt.s32.totalorder %s19, 0
      %s188 = scalar_select %p187, %s19, 0
      %s189 = smul.addr %s186, 5
      %s190 = sadd.s32 %s188, %s189
      %s191 = smul.addr %s190, 4
      %s192 = scalar_lea.vmem %s1, %s191
      %p193 = scmp.lt.s32.totalorder %s18, 1
      %s194 = scalar_select %p193, %s18, 1
      %p195 = scmp.lt.s32.totalorder %s19, 0
      %s196 = scalar_select %p195, %s19, 0
      %s197 = sadd.s32 %s196, %s194
      %s198 = smul.addr %s197, 2
      %s199 = scalar_lea.vmem %s3, %s198
      %v201 = vld [vmem:[%s192] sm:$0xf]
      %v202 = vld [vmem:[%s192 + $0x4] sm:$0xf]
      %v203 = vld [vmem:[%s192 + $0x8] sm:$0xf]
      %v204 = vld [vmem:[%s192 + $0xc] sm:$0xf]
      %v205 = vld [vmem:[%s192 + $0x10] sm:$0x3]
      %v206 = vld [vmem:[%s0] sm:$0x3]
      %v207 = vld [vmem:[%s2] sm:$0xf]
      %209 = vset.pattern.permute.xlu0 0
      %210 = vperm.xlu0 %209, %v207
      %v211 = vpop.permute.xlu0 %210
      %v218 = vunpack.c.l.b16 %v201
      %v219 = vunpack.c.l.b16 %v202
      %v220 = vunpack.c.l.b16 %v203
      %v221 = vunpack.c.l.b16 %v204
      %v222 = vunpack.c.l.b16 %v205
      %v223 = vpack.c.b16 %v219, %v218
      %v224 = vpack.c.b16 %v221, %v220
      %v225 = vpack.c.b16 %v222, %v222
      %vm228 = vcmask 293888
      %v230 = vsel %vm228, %v206, 0
      %vm232 = vcmask 1041408
      %v234 = vsel %vm232, %v225, 0
      %236 = vmatprep.subr.bf16.mxu0 0
      %237 = vmatpush1.bf16.msra.mxu0 0
      %238 = vmatprep.subr.bf16.mxu0 0
      %239 = vmatpush1.bf16.msra.mxu0 0
      %240 = vmatprep.subr.bf16.mxu0 0
      %241 = vmatpush1.bf16.msra.mxu0 0
      %242 = vmatprep.subr.bf16.mxu0 0
      %243 = vmatpush1.bf16.msra.mxu0 0
      %244 = vmatprep.subr.bf16.mxu0 0
      %245 = vmatpush1.bf16.msra.mxu0 0
      %246 = vmatprep.subr.bf16.mxu0 0
      %247 = vmatpush1.bf16.msra.mxu0 %v234
      %248 = vmatprep.subr.bf16.mxu0 0
      %249 = vmatpush1.bf16.msra.mxu0 %v224
      %250 = vmatprep.subr.bf16.mxu0 0
      %251 = vmatpush1.bf16.msra.mxu0 %v223
      %252 = vmatprep.subr.bf16.mxu0 0
      %253 = vmatpush2.bf16.msra.mxu0 0
      %254 = vmatprep.subr.bf16.mxu0 0
      %255 = vmatpush2.bf16.msra.mxu0 0
      %256 = vmatprep.subr.bf16.mxu0 0
      %257 = vmatpush2.bf16.msra.mxu0 0
      %258 = vmatprep.subr.bf16.mxu0 0
      %259 = vmatpush2.bf16.msra.mxu0 0
      %260 = vmatprep.subr.bf16.mxu0 0
      %261 = vmatpush2.bf16.msra.mxu0 0
      %262 = vmatprep.subr.bf16.mxu0 0
      %263 = vmatpush2.bf16.msra.mxu0 0
      %264 = vmatprep.subr.bf16.mxu0 0
      %265 = vmatpush2.bf16.msra.mxu0 0
      %266 = vmatprep.subr.bf16.mxu0 0
      %267 = vmatpush2.bf16.msra.mxu0 0
      %268 = vmatprep.mubr.bf16.mxu0 0
      %269 = vmatmul.mubr.bf16.gmra.mxu0 %v230
      %v270 = vpop.f32.mrf.mxu0
      %v271 = vadd.f32 %v211, %v270
      %v272 = vpop.f32.mrf.mxu0
      %v273 = vpop.f32.mrf.mxu0
      %v274 = vpop.f32.mrf.mxu0
      %275 = vdwg.mxu0
      %v276 = vpack.c.bf16 %v271, %v271
      %vm277 = vcmask 66560
      %278 = vst.msk [vmem:[%s199] sm:$0x3] %vm277, %v276
      %p279 = scmp.lt.s32.totalorder %s18, 1
      %s280 = scalar_select %p279, %s18, 1
      %p281 = scmp.lt.s32.totalorder %s19, 0
      %s282 = scalar_select %p281, %s19, 0
      %s283 = sadd.s32 %s282, %s280
      %s284 = smul.addr %s283, 2
      %s285 = scalar_lea.vmem %s3, %s284
      // Predicated region
      $region33: #{_lambda_.16} parent=31 // pred_check
        %p286 = pneg %p116
      $region34: #{_lambda_.16} parent=31 // pred_check_branch
        %288 = sbr.rel (%p286) target = $region36
      $region35: #{_lambda_.16} parent=31 // pred_region
        _
      $region36: #{_lambda_.16} parent=31 // pred_fallthru
        _
    $region32: #{_lambda_.16} parent=5 // pred_fallthru
      _
    %p289 = scmp.le.s32.totalorder 2, %s9
    // Predicated region
    $region37: #{_lambda_.16} parent=5 // pred_check
      %p290 = pneg %p289
    $region38: #{_lambda_.16} parent=5 // pred_check_branch
      %292 = sbr.rel (%p290) target = $region40
    $region39: #{_lambda_.16} parent=5 // pred_region
      %s293 = ssub.s32 %s9, 2
      // Predicated region
      $region41: #{_lambda_.16} parent=39 // pred_check
        %p294 = pneg %p122
      $region42: #{_lambda_.16} parent=39 // pred_check_branch
        %296 = sbr.rel (%p294) target = $region44
      $region43: #{_lambda_.16} parent=39 // pred_region
        %p297 = scmp.lt.s32.totalorder %s20, 1
        %s298 = scalar_select %p297, %s20, 1
        %p299 = scmp.lt.s32.totalorder %s21, 0
        %s300 = scalar_select %p299, %s21, 0
        %s301 = sadd.s32 %s300, %s298
        %s302 = smul.addr %s301, 2
        %s303 = scalar_lea.vmem %s3, %s302
      $region44: #{_lambda_.16} parent=39 // pred_fallthru
        _
    $region40: #{_lambda_.16} parent=5 // pred_fallthru
      _
  $region6: #{_lambda_.16} parent=0 // loop_footer
    %s13 = sadd.s32 1, %s9
  $region7: #{_lambda_.16} parent=0 // loop_footer_branch
    %8 = sbr.rel target = $region3
  $region8: #{_lambda_.16} parent=0 // loop_exit
    _

// kernel: _lambda_.18
$region0: #{_lambda_.18}
  #allocation0 [shape = 'u32[]', space=smem, size = 0x4, offset = 0x4, fixed_abs, tag = 'smem constant byte address 0x4 - core index']
  #allocation1 [shape = 'u32[144,128]{1,0:T(1,128)}', space=vmem, size = 0x12000, scoped, tag = 'internal scratch']
  %s0 = inlined_call_operand.vmem [shape: bf16[32,3], index: 0, kind: input, shape index: {}]
  %s1 = inlined_call_operand.vmem [shape: bf16[8,3,32], index: 1, kind: input, shape index: {}]
  %s2 = inlined_call_operand.vmem [shape: f32[32,1], index: 2, kind: input, shape index: {}]
  %s3 = inlined_call_operand.vmem [shape: bf16[8,32,32], index: 3, kind: output, shape index: {}]
  %s4 = sld [smem:[#allocation0]]
  $region45: #{_lambda_.18} parent=0
    _
  %s6 = ssub.s32 1, %s4
  %s7 = scalar_select 0, %s6, %s4
  loop: start=0, step=1, limit=10
  $region2: #{_lambda_.18} parent=0 // loop_pre_header
    _
  $region3: #{_lambda_.18} parent=0 // loop_header
    %s9 = sphi 0, %s13
    %p10 = scmp.ge.s32.totalorder %s9, 10
    %s16 = sphi 0, %s28
    %s17 = sphi 0, %s24
    %s18 = sphi 0, %s16
    %s19 = sphi 0, %s17
    %s20 = sphi 0, %s18
    %s21 = sphi 0, %s19
    %s29 = sphi 0, %s29
    %s31 = sphi 0, %s29
    %s32 = sphi 0, %s31
    %s46 = sphi 0, %s32
    %s54 = sphi 0, %s56
    %s57 = sphi 0, %s54
    %s58 = sphi 0, %s57
    %s74 = sphi 0, %s58
    %s78 = sphi 0, %s78
    %s80 = sphi 0, %s78
    %s81 = sphi 0, %s80
    %s95 = sphi 0, %s81
    %s103 = sphi 0, %s105
    %s106 = sphi 0, %s103
    %s107 = sphi 0, %s106
    %s123 = sphi 0, %s107
  $region4: #{_lambda_.18} parent=0 // loop_header_branch
    %12 = sbr.rel (%p10) target = $region8
  $region5: #{_lambda_.18} parent=0 // loop_body
    %s14 = ssub.s32 %s9, 1
    %s15 = ssub.s32 %s9, 2
    %s22 = sadd.s32 1, %s17
    %p23 = scmp.ge.s32.totalorder %s22, 1
    %s24 = scalar_select %p23, 0, %s22
    %s25 = sadd.s32 1, %s16
    %s26 = scalar_select %p23, %s25, %s16
    %p27 = scmp.ge.s32.totalorder %s26, 8
    %s28 = scalar_select %p27, 0, %s26
    %s30 = sadd.s32 %s29, 1
    %p33 = scmp.eq.s32.totalorder %s9, 7
    %p34 = scmp.ne.s32.totalorder %s29, %s31
    %p35 = scmp.eq.s32.totalorder %s9, 0
    %p36 = por %p34, %p35
    %p37 = scmp.ne.s32.totalorder %s29, %s31
    %p38 = scmp.eq.s32.totalorder %s14, 7
    %p39 = por %p37, %p38
    %p40 = scmp.ne.s32.totalorder %s31, %s32
    %p41 = scmp.eq.s32.totalorder %s14, 0
    %p42 = por %p40, %p41
    %p43 = scmp.ne.s32.totalorder %s31, %s32
    %p44 = scmp.eq.s32.totalorder %s15, 7
    %p45 = por %p43, %p44
    %p47 = scmp.ne.s32.totalorder %s32, %s46
    %p48 = scmp.eq.s32.totalorder %s15, 0
    %p49 = por %p47, %p48
    %s50 = ssub.s32 %s16, %s28
    %s51 = ssub.s32 %s17, %s24
    %s52 = sor.u32 %s50, %s51
    %p53 = scmp.eq.s32.totalorder %s52, 0
    %s55 = sadd.s32 %s54, 1
    %s56 = scalar_select %p53, %s54, %s55
    %p59 = pneg %p53
    %p60 = scmp.eq.s32.totalorder %s9, 7
    %p61 = por %p59, %p60
    %p62 = scmp.ne.s32.totalorder %s54, %s57
    %p63 = scmp.eq.s32.totalorder %s9, 0
    %p64 = por %p62, %p63
    %p65 = scmp.ne.s32.totalorder %s54, %s57
    %p66 = scmp.eq.s32.totalorder %s14, 7
    %p67 = por %p65, %p66
    %p68 = scmp.ne.s32.totalorder %s57, %s58
    %p69 = scmp.eq.s32.totalorder %s14, 0
    %p70 = por %p68, %p69
    %p71 = scmp.ne.s32.totalorder %s57, %s58
    %p72 = scmp.eq.s32.totalorder %s15, 7
    %p73 = por %p71, %p72
    %p75 = scmp.ne.s32.totalorder %s58, %s74
    %p76 = scmp.eq.s32.totalorder %s15, 0
    %p77 = por %p75, %p76
    %s79 = sadd.s32 %s78, 1
    %p82 = scmp.eq.s32.totalorder %s9, 7
    %p83 = scmp.ne.s32.totalorder %s78, %s80
    %p84 = scmp.eq.s32.totalorder %s9, 0
    %p85 = por %p83, %p84
    %p86 = scmp.ne.s32.totalorder %s78, %s80
    %p87 = scmp.eq.s32.totalorder %s14, 7
    %p88 = por %p86, %p87
    %p89 = scmp.ne.s32.totalorder %s80, %s81
    %p90 = scmp.eq.s32.totalorder %s14, 0
    %p91 = por %p89, %p90
    %p92 = scmp.ne.s32.totalorder %s80, %s81
    %p93 = scmp.eq.s32.totalorder %s15, 7
    %p94 = por %p92, %p93
    %p96 = scmp.ne.s32.totalorder %s81, %s95
    %p97 = scmp.eq.s32.totalorder %s15, 0
    %p98 = por %p96, %p97
    %s99 = ssub.s32 %s16, %s28
    %s100 = ssub.s32 %s17, %s24
    %s101 = sor.u32 %s99, %s100
    %p102 = scmp.eq.s32.totalorder %s101, 0
    %s104 = sadd.s32 %s103, 1
    %s105 = scalar_select %p102, %s103, %s104
    %p108 = pneg %p102
    %p109 = scmp.eq.s32.totalorder %s9, 7
    %p110 = por %p108, %p109
    %p111 = scmp.ne.s32.totalorder %s103, %s106
    %p112 = scmp.eq.s32.totalorder %s9, 0
    %p113 = por %p111, %p112
    %p114 = scmp.ne.s32.totalorder %s103, %s106
    %p115 = scmp.eq.s32.totalorder %s14, 7
    %p116 = por %p114, %p115
    %p117 = scmp.ne.s32.totalorder %s106, %s107
    %p118 = scmp.eq.s32.totalorder %s14, 0
    %p119 = por %p117, %p118
    %p120 = scmp.ne.s32.totalorder %s106, %s107
    %p121 = scmp.eq.s32.totalorder %s15, 7
    %p122 = por %p120, %p121
    %p124 = scmp.ne.s32.totalorder %s107, %s123
    %p125 = scmp.eq.s32.totalorder %s15, 0
    %p126 = por %p124, %p125
    %p127 = scmp.le.s32.totalorder 1, %s9
    %p128 = scmp.lt.s32.totalorder %s9, 9
    %p129 = pnand %p127, %p128
    %p130 = pneg %p129
    // Predicated region
    $region9: #{_lambda_.18} parent=5 // pred_check
      _
    $region10: #{_lambda_.18} parent=5 // pred_check_branch
      %132 = sbr.rel (%p129) target = $region12
    $region11: #{_lambda_.18} parent=5 // pred_region
      %s133 = ssub.s32 %s9, 1
      // Predicated region
      $region13: #{_lambda_.18} parent=11 // pred_check
        %p134 = pneg %p42
      $region14: #{_lambda_.18} parent=11 // pred_check_branch
        %136 = sbr.rel (%p134) target = $region16
      $region15: #{_lambda_.18} parent=11 // pred_region
        _
      $region16: #{_lambda_.18} parent=11 // pred_fallthru
        _
      // Predicated region
      $region17: #{_lambda_.18} parent=11 // pred_check
        %p137 = pneg %p91
      $region18: #{_lambda_.18} parent=11 // pred_check_branch
        %139 = sbr.rel (%p137) target = $region20
      $region19: #{_lambda_.18} parent=11 // pred_region
        _
      $region20: #{_lambda_.18} parent=11 // pred_fallthru
        _
    $region12: #{_lambda_.18} parent=5 // pred_fallthru
      _
    %p140 = scmp.lt.s32.totalorder %s9, 8
    // Predicated region
    $region21: #{_lambda_.18} parent=5 // pred_check
      %p141 = pneg %p140
    $region22: #{_lambda_.18} parent=5 // pred_check_branch
      %143 = sbr.rel (%p141) target = $region24
    $region23: #{_lambda_.18} parent=5 // pred_region
      // Predicated region
      $region25: #{_lambda_.18} parent=23 // pred_check
        %p144 = pneg %p64
      $region26: #{_lambda_.18} parent=23 // pred_check_branch
        %146 = sbr.rel (%p144) target = $region28
      $region27: #{_lambda_.18} parent=23 // pred_region
        %p147 = scmp.lt.s32.totalorder %s16, 7
        %s148 = scalar_select %p147, %s16, 7
        %p149 = scmp.lt.s32.totalorder %s17, 0
        %s150 = scalar_select %p149, %s17, 0
        %s151 = sadd.s32 %s150, %s148
        %s152 = smul.addr %s151, 2
        %s153 = scalar_lea.vmem %s1, %s152
      $region28: #{_lambda_.18} parent=23 // pred_fallthru
        _
    $region24: #{_lambda_.18} parent=5 // pred_fallthru
      _
    %p154 = scmp.le.s32.totalorder 1, %s9
    %p155 = scmp.lt.s32.totalorder %s9, 9
    %p156 = pnand %p154, %p155
    %p157 = pneg %p156
    // Predicated region
    $region29: #{_lambda_.18} parent=5 // pred_check
      _
    $region30: #{_lambda_.18} parent=5 // pred_check_branch
      %159 = sbr.rel (%p156) target = $region32
    $region31: #{_lambda_.18} parent=5 // pred_region
      %s160 = ssub.s32 %s9, 1
      %p161 = pneg %p42
      %p162 = pneg %p39
      %p163 = scmp.lt.s32.totalorder %s18, 7
      %s164 = scalar_select %p163, %s18, 7
      %p165 = scmp.lt.s32.totalorder %s19, 0
      %s166 = scalar_select %p165, %s19, 0
      %s167 = sadd.s32 %s166, %s164
      %s168 = smul.addr %s167, 2
      %s169 = scalar_lea.vmem %s1, %s168
      %p170 = pneg %p70
      %p171 = pneg %p67
      %p172 = pneg %p91
      %p173 = pneg %p88
      %p174 = pneg %p119
      %p175 = pneg %p116
      %p176 = scmp.lt.s32.totalorder %s18, 7
      %s177 = scalar_select %p176, %s18, 7
      %p178 = scmp.lt.s32.totalorder %s19, 0
      %s179 = scalar_select %p178, %s19, 0
      %s180 = smul.addr %s177, 4
      %s181 = sadd.s32 %s179, %s180
      %s182 = smul.addr %s181, 4
      %s183 = scalar_lea.vmem %s3, %s182
      %p184 = scmp.lt.s32.totalorder %s18, 7
      %s185 = scalar_select %p184, %s18, 7
      %p186 = scmp.lt.s32.totalorder %s19, 0
      %s187 = scalar_select %p186, %s19, 0
      %s188 = sadd.s32 %s187, %s185
      %s189 = smul.addr %s188, 2
      %s190 = scalar_lea.vmem %s1, %s189
      %p191 = scmp.lt.s32.totalorder %s18, 7
      %s192 = scalar_select %p191, %s18, 7
      %p193 = scmp.lt.s32.totalorder %s19, 0
      %s194 = scalar_select %p193, %s19, 0
      %s195 = smul.addr %s192, 4
      %s196 = sadd.s32 %s194, %s195
      %s197 = smul.addr %s196, 4
      %s198 = scalar_lea.vmem %s3, %s197
      %v200 = vld [vmem:[%s190] sm:$0x3]
      %v201 = vld [vmem:[%s0] sm:$0xf]
      %v202 = vld [vmem:[%s0 + $0x4] sm:$0xf]
      %v203 = vld [vmem:[%s0 + $0x8] sm:$0xf]
      %v204 = vld [vmem:[%s0 + $0xc] sm:$0xf]
      %v205 = vld [vmem:[%s2] sm:$0xff]
      %v206 = vld [vmem:[%s2 + $0x8] sm:$0xff]
      %v207 = vld [vmem:[%s2 + $0x10] sm:$0xff]
      %v208 = vld [vmem:[%s2 + $0x18] sm:$0xff]
      %210 = vset.pattern.permute.xlu0 0
      %211 = vperm.xlu0 %210, %v205
      %v212 = vpop.permute.xlu0 %211
      %215 = vset.pattern.permute.xlu0 0
      %216 = vperm.xlu0 %215, %v206
      %v217 = vpop.permute.xlu0 %216
      %220 = vset.pattern.permute.xlu0 0
      %221 = vperm.xlu0 %220, %v207
      %v222 = vpop.permute.xlu0 %221
      %225 = vset.pattern.permute.xlu0 0
      %226 = vperm.xlu0 %225, %v208
      %v227 = vpop.permute.xlu0 %226
      %v233 = vunpack.c.l.b16 %v201
      %v234 = vunpack.c.l.b16 %v202
      %v235 = vunpack.c.l.b16 %v203
      %v236 = vunpack.c.l.b16 %v204
      %v237 = vpack.c.b16 %v234, %v233
      %v238 = vpack.c.b16 %v236, %v235
      %vm239 = vcmask 23552
      %v241 = vsel %vm239, %v237, 0
      %v244 = vsel %vm239, %v238, 0
      %vm246 = vcmask 1040384
      %vm247 = vcmask 1041408
      %v248 = vsel %vm246, 4294967295, 65535
      %v249 = vsel %vm247, %v248, 0
      %v251 = vand.u32 %v200, %v249
      %253 = vmatprep.subr.bf16.mxu0 0
      %254 = vmatpush1.bf16.msra.mxu0 0
      %255 = vmatprep.subr.bf16.mxu0 0
      %256 = vmatpush1.bf16.msra.mxu0 0
      %257 = vmatprep.subr.bf16.mxu0 0
      %258 = vmatpush1.bf16.msra.mxu0 0
      %259 = vmatprep.subr.bf16.mxu0 0
      %260 = vmatpush1.bf16.msra.mxu0 0
      %261 = vmatprep.subr.bf16.mxu0 0
      %262 = vmatpush1.bf16.msra.mxu0 0
      %263 = vmatprep.subr.bf16.mxu0 0
      %264 = vmatpush1.bf16.msra.mxu0 0
      %265 = vmatprep.subr.bf16.mxu0 0
      %266 = vmatpush1.bf16.msra.mxu0 0
      %267 = vmatprep.subr.bf16.mxu0 0
      %268 = vmatpush1.bf16.msra.mxu0 %v251
      %269 = vmatprep.subr.bf16.mxu0 0
      %270 = vmatpush2.bf16.msra.mxu0 0
      %271 = vmatprep.subr.bf16.mxu0 0
      %272 = vmatpush2.bf16.msra.mxu0 0
      %273 = vmatprep.subr.bf16.mxu0 0
      %274 = vmatpush2.bf16.msra.mxu0 0
      %275 = vmatprep.subr.bf16.mxu0 0
      %276 = vmatpush2.bf16.msra.mxu0 0
      %277 = vmatprep.subr.bf16.mxu0 0
      %278 = vmatpush2.bf16.msra.mxu0 0
      %279 = vmatprep.subr.bf16.mxu0 0
      %280 = vmatpush2.bf16.msra.mxu0 0
      %281 = vmatprep.subr.bf16.mxu0 0
      %282 = vmatpush2.bf16.msra.mxu0 0
      %283 = vmatprep.subr.bf16.mxu0 0
      %284 = vmatpush2.bf16.msra.mxu0 0
      %285 = vmatprep.mubr.bf16.mxu0 0
      %286 = vmatmul.mubr.bf16.gmra.mxu0 %v241
      %v287 = vpop.f32.mrf.mxu0
      %v288 = vadd.f32 %v212, %v287
      %v289 = vpop.f32.mrf.mxu0
      %v290 = vpop.f32.mrf.mxu0
      %v291 = vadd.f32 %v217, %v290
      %v292 = vpop.f32.mrf.mxu0
      %293 = vmatprep.mubr.bf16.mxu0 0
      %294 = vmatmul.mubr.bf16.gmra.mxu0 %v244
      %v295 = vpop.f32.mrf.mxu0
      %v296 = vadd.f32 %v222, %v295
      %v297 = vpop.f32.mrf.mxu0
      %v298 = vpop.f32.mrf.mxu0
      %v299 = vadd.f32 %v227, %v298
      %v300 = vpop.f32.mrf.mxu0
      %301 = vdwg.mxu0
      %v302 = vpack.c.bf16 %v291, %v288
      %v303 = vpack.c.bf16 %v299, %v296
      %v306 = vunpack.c.l.b16 %v302
      %v307 = vunpack.c.h.b16 %v302
      %v308 = vunpack.c.l.b16 %v303
      %v309 = vunpack.c.h.b16 %v303
      %v310 = vpack.c.b16 %v306, %v306
      %v311 = vpack.c.b16 %v307, %v307
      %v312 = vpack.c.b16 %v308, %v308
      %v313 = vpack.c.b16 %v309, %v309
      %vm318 = vcmask 257024
      %319 = vst.msk [vmem:[%s198] sm:$0xf] %vm318, %v310
      %320 = vst.msk [vmem:[%s198 + $0x4] sm:$0xf] %vm318, %v311
      %321 = vst.msk [vmem:[%s198 + $0x8] sm:$0xf] %vm318, %v312
      %322 = vst.msk [vmem:[%s198 + $0xc] sm:$0xf] %vm318, %v313
      %p323 = scmp.lt.s32.totalorder %s18, 7
      %s324 = scalar_select %p323, %s18, 7
      %p325 = scmp.lt.s32.totalorder %s19, 0
      %s326 = scalar_select %p325, %s19, 0
      %s327 = smul.addr %s324, 4
      %s328 = sadd.s32 %s326, %s327
      %s329 = smul.addr %s328, 4
      %s330 = scalar_lea.vmem %s3, %s329
      // Predicated region
      $region33: #{_lambda_.18} parent=31 // pred_check
        %p331 = pneg %p116
      $region34: #{_lambda_.18} parent=31 // pred_check_branch
        %333 = sbr.rel (%p331) target = $region36
      $region35: #{_lambda_.18} parent=31 // pred_region
        _
      $region36: #{_lambda_.18} parent=31 // pred_fallthru
        _
    $region32: #{_lambda_.18} parent=5 // pred_fallthru
      _
    %p334 = scmp.le.s32.totalorder 2, %s9
    // Predicated region
    $region37: #{_lambda_.18} parent=5 // pred_check
      %p335 = pneg %p334
    $region38: #{_lambda_.18} parent=5 // pred_check_branch
      %337 = sbr.rel (%p335) target = $region40
    $region39: #{_lambda_.18} parent=5 // pred_region
      %s338 = ssub.s32 %s9, 2
      // Predicated region
      $region41: #{_lambda_.18} parent=39 // pred_check
        %p339 = pneg %p122
      $region42: #{_lambda_.18} parent=39 // pred_check_branch
        %341 = sbr.rel (%p339) target = $region44
      $region43: #{_lambda_.18} parent=39 // pred_region
        %p342 = scmp.lt.s32.totalorder %s20, 7
        %s343 = scalar_select %p342, %s20, 7
        %p344 = scmp.lt.s32.totalorder %s21, 0
        %s345 = scalar_select %p344, %s21, 0
        %s346 = smul.addr %s343, 4
        %s347 = sadd.s32 %s345, %s346
        %s348 = smul.addr %s347, 4
        %s349 = scalar_lea.vmem %s3, %s348
      $region44: #{_lambda_.18} parent=39 // pred_fallthru
        _
    $region40: #{_lambda_.18} parent=5 // pred_fallthru
      _
  $region6: #{_lambda_.18} parent=0 // loop_footer
    %s13 = sadd.s32 1, %s9
  $region7: #{_lambda_.18} parent=0 // loop_footer_branch
    %8 = sbr.rel target = $region3
  $region8: #{_lambda_.18} parent=0 // loop_exit
    _

// kernel: _lambda_.17
$region0: #{_lambda_.17}
  #allocation0 [shape = 'u32[]', space=smem, size = 0x4, offset = 0x4, fixed_abs, tag = 'smem constant byte address 0x4 - core index']
  #allocation1 [shape = 'u32[144,128]{1,0:T(1,128)}', space=vmem, size = 0x12000, scoped, tag = 'internal scratch']
  %s0 = inlined_call_operand.vmem [shape: bf16[2,12,3], index: 0, kind: input, shape index: {}]
  %s1 = inlined_call_operand.vmem [shape: bf16[3,32], index: 1, kind: input, shape index: {}]
  %s2 = inlined_call_operand.vmem [shape: bf16[2,12,32], index: 2, kind: output, shape index: {}]
  %s3 = sld [smem:[#allocation0]]
  $region41: #{_lambda_.17} parent=0
    _
  %s5 = ssub.s32 1, %s3
  %s6 = scalar_select 0, %s5, %s3
  loop: start=0, step=1, limit=4
  $region2: #{_lambda_.17} parent=0 // loop_pre_header
    _
  $region3: #{_lambda_.17} parent=0 // loop_header
    %s8 = sphi 0, %s12
    %p9 = scmp.ge.s32.totalorder %s8, 4
    %s18 = sphi 0, %s20
    %s21 = sphi 0, %s18
    %s22 = sphi 0, %s21
    %s38 = sphi 0, %s22
    %s42 = sphi 0, %s42
    %s44 = sphi 0, %s42
    %s45 = sphi 0, %s44
    %s59 = sphi 0, %s45
    %s65 = sphi 0, %s67
    %s68 = sphi 0, %s65
    %s69 = sphi 0, %s68
    %s85 = sphi 0, %s69
  $region4: #{_lambda_.17} parent=0 // loop_header_branch
    %11 = sbr.rel (%p9) target = $region8
  $region5: #{_lambda_.17} parent=0 // loop_body
    %s13 = ssub.s32 %s8, 1
    %s14 = ssub.s32 %s8, 2
    %s15 = sadd.s32 %s8, 1
    %s16 = ssub.s32 %s8, %s15
    %p17 = scmp.eq.s32.totalorder %s16, 0
    %s19 = sadd.s32 %s18, 1
    %s20 = scalar_select %p17, %s18, %s19
    %p23 = pneg %p17
    %p24 = scmp.eq.s32.totalorder %s8, 1
    %p25 = por %p23, %p24
    %p26 = scmp.ne.s32.totalorder %s18, %s21
    %p27 = scmp.eq.s32.totalorder %s8, 0
    %p28 = por %p26, %p27
    %p29 = scmp.ne.s32.totalorder %s18, %s21
    %p30 = scmp.eq.s32.totalorder %s13, 1
    %p31 = por %p29, %p30
    %p32 = scmp.ne.s32.totalorder %s21, %s22
    %p33 = scmp.eq.s32.totalorder %s13, 0
    %p34 = por %p32, %p33
    %p35 = scmp.ne.s32.totalorder %s21, %s22
    %p36 = scmp.eq.s32.totalorder %s14, 1
    %p37 = por %p35, %p36
    %p39 = scmp.ne.s32.totalorder %s22, %s38
    %p40 = scmp.eq.s32.totalorder %s14, 0
    %p41 = por %p39, %p40
    %s43 = sadd.s32 %s42, 1
    %p46 = scmp.eq.s32.totalorder %s8, 1
    %p47 = scmp.ne.s32.totalorder %s42, %s44
    %p48 = scmp.eq.s32.totalorder %s8, 0
    %p49 = por %p47, %p48
    %p50 = scmp.ne.s32.totalorder %s42, %s44
    %p51 = scmp.eq.s32.totalorder %s13, 1
    %p52 = por %p50, %p51
    %p53 = scmp.ne.s32.totalorder %s44, %s45
    %p54 = scmp.eq.s32.totalorder %s13, 0
    %p55 = por %p53, %p54
    %p56 = scmp.ne.s32.totalorder %s44, %s45
    %p57 = scmp.eq.s32.totalorder %s14, 1
    %p58 = por %p56, %p57
    %p60 = scmp.ne.s32.totalorder %s45, %s59
    %p61 = scmp.eq.s32.totalorder %s14, 0
    %p62 = por %p60, %p61
    %s63 = ssub.s32 %s8, %s15
    %p64 = scmp.eq.s32.totalorder %s63, 0
    %s66 = sadd.s32 %s65, 1
    %s67 = scalar_select %p64, %s65, %s66
    %p70 = pneg %p64
    %p71 = scmp.eq.s32.totalorder %s8, 1
    %p72 = por %p70, %p71
    %p73 = scmp.ne.s32.totalorder %s65, %s68
    %p74 = scmp.eq.s32.totalorder %s8, 0
    %p75 = por %p73, %p74
    %p76 = scmp.ne.s32.totalorder %s65, %s68
    %p77 = scmp.eq.s32.totalorder %s13, 1
    %p78 = por %p76, %p77
    %p79 = scmp.ne.s32.totalorder %s68, %s69
    %p80 = scmp.eq.s32.totalorder %s13, 0
    %p81 = por %p79, %p80
    %p82 = scmp.ne.s32.totalorder %s68, %s69
    %p83 = scmp.eq.s32.totalorder %s14, 1
    %p84 = por %p82, %p83
    %p86 = scmp.ne.s32.totalorder %s69, %s85
    %p87 = scmp.eq.s32.totalorder %s14, 0
    %p88 = por %p86, %p87
    %p89 = scmp.le.s32.totalorder 1, %s8
    %p90 = scmp.lt.s32.totalorder %s8, 3
    %p91 = pnand %p89, %p90
    %p92 = pneg %p91
    // Predicated region
    $region9: #{_lambda_.17} parent=5 // pred_check
      _
    $region10: #{_lambda_.17} parent=5 // pred_check_branch
      %94 = sbr.rel (%p91) target = $region12
    $region11: #{_lambda_.17} parent=5 // pred_region
      %s95 = ssub.s32 %s8, 1
      // Predicated region
      $region13: #{_lambda_.17} parent=11 // pred_check
        %p96 = pneg %p55
      $region14: #{_lambda_.17} parent=11 // pred_check_branch
        %98 = sbr.rel (%p96) target = $region16
      $region15: #{_lambda_.17} parent=11 // pred_region
        _
      $region16: #{_lambda_.17} parent=11 // pred_fallthru
        _
    $region12: #{_lambda_.17} parent=5 // pred_fallthru
      _
    %p99 = scmp.lt.s32.totalorder %s8, 2
    // Predicated region
    $region17: #{_lambda_.17} parent=5 // pred_check
      %p100 = pneg %p99
    $region18: #{_lambda_.17} parent=5 // pred_check_branch
      %102 = sbr.rel (%p100) target = $region20
    $region19: #{_lambda_.17} parent=5 // pred_region
      // Predicated region
      $region21: #{_lambda_.17} parent=19 // pred_check
        %p103 = pneg %p28
      $region22: #{_lambda_.17} parent=19 // pred_check_branch
        %105 = sbr.rel (%p103) target = $region24
      $region23: #{_lambda_.17} parent=19 // pred_region
        %p106 = scmp.lt.s32.totalorder %s8, 1
        %s107 = scalar_select %p106, %s8, 1
        %s108 = smul.addr %s107, 2
        %s109 = smul.addr %s108, 4
        %s110 = scalar_lea.vmem %s0, %s109
      $region24: #{_lambda_.17} parent=19 // pred_fallthru
        _
    $region20: #{_lambda_.17} parent=5 // pred_fallthru
      _
    %p111 = scmp.le.s32.totalorder 1, %s8
    %p112 = scmp.lt.s32.totalorder %s8, 3
    %p113 = pnand %p111, %p112
    %p114 = pneg %p113
    // Predicated region
    $region25: #{_lambda_.17} parent=5 // pred_check
      _
    $region26: #{_lambda_.17} parent=5 // pred_check_branch
      %116 = sbr.rel (%p113) target = $region28
    $region27: #{_lambda_.17} parent=5 // pred_region
      %s117 = ssub.s32 %s8, 1
      %p118 = scmp.lt.s32.totalorder %s13, 1
      %s119 = scalar_select %p118, %s13, 1
      %s120 = smul.addr %s119, 2
      %s121 = smul.addr %s120, 4
      %s122 = scalar_lea.vmem %s0, %s121
      %p123 = pneg %p34
      %p124 = pneg %p31
      %p125 = pneg %p55
      %p126 = pneg %p52
      %p127 = pneg %p81
      %p128 = pneg %p78
      %p129 = scmp.lt.s32.totalorder %s13, 1
      %s130 = scalar_select %p129, %s13, 1
      %s131 = smul.addr %s130, 2
      %s132 = smul.addr %s131, 4
      %s133 = scalar_lea.vmem %s2, %s132
      %p134 = scmp.lt.s32.totalorder %s13, 1
      %s135 = scalar_select %p134, %s13, 1
      %s136 = smul.addr %s135, 2
      %s137 = smul.addr %s136, 4
      %s138 = scalar_lea.vmem %s0, %s137
      %p139 = scmp.lt.s32.totalorder %s13, 1
      %s140 = scalar_select %p139, %s13, 1
      %s141 = smul.addr %s140, 2
      %s142 = smul.addr %s141, 4
      %s143 = scalar_lea.vmem %s2, %s142
      %v145 = vld [vmem:[%s138] sm:$0xf]
      %v146 = vld [vmem:[%s138 + $0x4] sm:$0x3]
      %v147 = vld [vmem:[%s1] sm:$0x3]
      %v150 = vunpack.c.l.b16 %v145
      %v151 = vunpack.c.l.b16 %v146
      %v152 = vpack.c.b16 %v151, %v150
      %vm153 = vcmask 23552
      %v155 = vsel %vm153, %v152, 0
      %vm157 = vcmask 1040384
      %vm158 = vcmask 1041408
      %v159 = vsel %vm157, 4294967295, 65535
      %v160 = vsel %vm158, %v159, 0
      %v162 = vand.u32 %v147, %v160
      %164 = vmatprep.subr.bf16.mxu0 0
      %165 = vmatpush1.bf16.msra.mxu0 0
      %166 = vmatprep.subr.bf16.mxu0 0
      %167 = vmatpush1.bf16.msra.mxu0 0
      %168 = vmatprep.subr.bf16.mxu0 0
      %169 = vmatpush1.bf16.msra.mxu0 0
      %170 = vmatprep.subr.bf16.mxu0 0
      %171 = vmatpush1.bf16.msra.mxu0 0
      %172 = vmatprep.subr.bf16.mxu0 0
      %173 = vmatpush1.bf16.msra.mxu0 0
      %174 = vmatprep.subr.bf16.mxu0 0
      %175 = vmatpush1.bf16.msra.mxu0 0
      %176 = vmatprep.subr.bf16.mxu0 0
      %177 = vmatpush1.bf16.msra.mxu0 0
      %178 = vmatprep.subr.bf16.mxu0 0
      %179 = vmatpush1.bf16.msra.mxu0 %v162
      %180 = vmatprep.subr.bf16.mxu0 0
      %181 = vmatpush2.bf16.msra.mxu0 0
      %182 = vmatprep.subr.bf16.mxu0 0
      %183 = vmatpush2.bf16.msra.mxu0 0
      %184 = vmatprep.subr.bf16.mxu0 0
      %185 = vmatpush2.bf16.msra.mxu0 0
      %186 = vmatprep.subr.bf16.mxu0 0
      %187 = vmatpush2.bf16.msra.mxu0 0
      %188 = vmatprep.subr.bf16.mxu0 0
      %189 = vmatpush2.bf16.msra.mxu0 0
      %190 = vmatprep.subr.bf16.mxu0 0
      %191 = vmatpush2.bf16.msra.mxu0 0
      %192 = vmatprep.subr.bf16.mxu0 0
      %193 = vmatpush2.bf16.msra.mxu0 0
      %194 = vmatprep.subr.bf16.mxu0 0
      %195 = vmatpush2.bf16.msra.mxu0 0
      %196 = vmatprep.mubr.bf16.mxu0 0
      %197 = vmatmul.mubr.bf16.gmra.mxu0 %v155
      %v198 = vpop.f32.mrf.mxu0
      %v199 = vadd.f32 0.0, %v198
      %v200 = vpop.f32.mrf.mxu0
      %v201 = vpop.f32.mrf.mxu0
      %v202 = vadd.f32 0.0, %v201
      %v203 = vpop.f32.mrf.mxu0
      %204 = vdwg.mxu0
      %v205 = vpack.c.bf16 %v202, %v199
      %v207 = vunpack.c.l.b16 %v205
      %v208 = vunpack.c.h.b16 %v205
      %v209 = vpack.c.b16 %v207, %v207
      %v210 = vpack.c.b16 %v208, %v208
      %vm213 = vcmask 257024
      %214 = vst.msk [vmem:[%s143] sm:$0xf] %vm213, %v209
      %vm215 = vcmask 254976
      %216 = vst.msk [vmem:[%s143 + $0x4] sm:$0x3] %vm215, %v210
      %p217 = scmp.lt.s32.totalorder %s13, 1
      %s218 = scalar_select %p217, %s13, 1
      %s219 = smul.addr %s218, 2
      %s220 = smul.addr %s219, 4
      %s221 = scalar_lea.vmem %s2, %s220
      // Predicated region
      $region29: #{_lambda_.17} parent=27 // pred_check
        %p222 = pneg %p78
      $region30: #{_lambda_.17} parent=27 // pred_check_branch
        %224 = sbr.rel (%p222) target = $region32
      $region31: #{_lambda_.17} parent=27 // pred_region
        _
      $region32: #{_lambda_.17} parent=27 // pred_fallthru
        _
    $region28: #{_lambda_.17} parent=5 // pred_fallthru
      _
    %p225 = scmp.le.s32.totalorder 2, %s8
    // Predicated region
    $region33: #{_lambda_.17} parent=5 // pred_check
      %p226 = pneg %p225
    $region34: #{_lambda_.17} parent=5 // pred_check_branch
      %228 = sbr.rel (%p226) target = $region36
    $region35: #{_lambda_.17} parent=5 // pred_region
      %s229 = ssub.s32 %s8, 2
      // Predicated region
      $region37: #{_lambda_.17} parent=35 // pred_check
        %p230 = pneg %p84
      $region38: #{_lambda_.17} parent=35 // pred_check_branch
        %232 = sbr.rel (%p230) target = $region40
      $region39: #{_lambda_.17} parent=35 // pred_region
        %p233 = scmp.lt.s32.totalorder %s14, 1
        %s234 = scalar_select %p233, %s14, 1
        %s235 = smul.addr %s234, 2
        %s236 = smul.addr %s235, 4
        %s237 = scalar_lea.vmem %s2, %s236
      $region40: #{_lambda_.17} parent=35 // pred_fallthru
        _
    $region36: #{_lambda_.17} parent=5 // pred_fallthru
      _
  $region6: #{_lambda_.17} parent=0 // loop_footer
    %s12 = sadd.s32 1, %s8
  $region7: #{_lambda_.17} parent=0 // loop_footer_branch
    %7 = sbr.rel target = $region3
  $region8: #{_lambda_.17} parent=0 // loop_exit
    _

// kernel: _lambda_.19
$region0: #{_lambda_.19}
  #allocation0 [shape = 'u32[]', space=smem, size = 0x4, offset = 0x4, fixed_abs, tag = 'smem constant byte address 0x4 - core index']
  #allocation1 [shape = 'u32[144,128]{1,0:T(1,128)}', space=vmem, size = 0x12000, scoped, tag = 'internal scratch']
  %s0 = inlined_call_operand.vmem [shape: f32[2,16,1024], index: 0, kind: input, shape index: {}]
  %s1 = inlined_call_operand.vmem [shape: bf16[2,4,1024], index: 1, kind: input, shape index: {}]
  %s2 = inlined_call_operand.vmem [shape: bf16[16,4], index: 2, kind: input, shape index: {}]
  %s3 = inlined_call_operand.vmem [shape: bf16[16,16], index: 3, kind: input, shape index: {}]
  %s4 = inlined_call_operand.vmem [shape: f32[16,1], index: 4, kind: input, shape index: {}]
  %s5 = inlined_call_operand.vmem [shape: f32[2,16,1024], index: 5, kind: output, shape index: {}]
  %s6 = sld [smem:[#allocation0]]
  $region53: #{_lambda_.19} parent=0
    _
  %s8 = ssub.s32 1, %s6
  %s9 = scalar_select 0, %s8, %s6
  loop: start=0, step=1, limit=4
  $region2: #{_lambda_.19} parent=0 // loop_pre_header
    _
  $region3: #{_lambda_.19} parent=0 // loop_header
    %s11 = sphi 0, %s15
    %p12 = scmp.ge.s32.totalorder %s11, 4
    %s18 = sphi 0, %s30
    %s19 = sphi 0, %s26
    %s20 = sphi 0, %s18
    %s21 = sphi 0, %s19
    %s22 = sphi 0, %s20
    %s23 = sphi 0, %s21
    %s35 = sphi 0, %s37
    %s38 = sphi 0, %s35
    %s39 = sphi 0, %s38
    %s55 = sphi 0, %s39
    %s63 = sphi 0, %s65
    %s66 = sphi 0, %s63
    %s67 = sphi 0, %s66
    %s83 = sphi 0, %s67
    %s87 = sphi 0, %s87
    %s89 = sphi 0, %s87
    %s90 = sphi 0, %s89
    %s104 = sphi 0, %s90
    %s108 = sphi 0, %s108
    %s110 = sphi 0, %s108
    %s111 = sphi 0, %s110
    %s125 = sphi 0, %s111
    %s129 = sphi 0, %s129
    %s131 = sphi 0, %s129
    %s132 = sphi 0, %s131
    %s146 = sphi 0, %s132
    %s154 = sphi 0, %s156
    %s157 = sphi 0, %s154
    %s158 = sphi 0, %s157
    %s174 = sphi 0, %s158
  $region4: #{_lambda_.19} parent=0 // loop_header_branch
    %14 = sbr.rel (%p12) target = $region8
  $region5: #{_lambda_.19} parent=0 // loop_body
    %s16 = ssub.s32 %s11, 1
    %s17 = ssub.s32 %s11, 2
    %s24 = sadd.s32 1, %s19
    %p25 = scmp.ge.s32.totalorder %s24, 1
    %s26 = scalar_select %p25, 0, %s24
    %s27 = sadd.s32 1, %s18
    %s28 = scalar_select %p25, %s27, %s18
    %p29 = scmp.ge.s32.totalorder %s28, 2
    %s30 = scalar_select %p29, 0, %s28
    %s31 = ssub.s32 %s18, %s30
    %s32 = ssub.s32 %s19, %s26
    %s33 = sor.u32 %s31, %s32
    %p34 = scmp.eq.s32.totalorder %s33, 0
    %s36 = sadd.s32 %s35, 1
    %s37 = scalar_select %p34, %s35, %s36
    %p40 = pneg %p34
    %p41 = scmp.eq.s32.totalorder %s11, 1
    %p42 = por %p40, %p41
    %p43 = scmp.ne.s32.totalorder %s35, %s38
    %p44 = scmp.eq.s32.totalorder %s11, 0
    %p45 = por %p43, %p44
    %p46 = scmp.ne.s32.totalorder %s35, %s38
    %p47 = scmp.eq.s32.totalorder %s16, 1
    %p48 = por %p46, %p47
    %p49 = scmp.ne.s32.totalorder %s38, %s39
    %p50 = scmp.eq.s32.totalorder %s16, 0
    %p51 = por %p49, %p50
    %p52 = scmp.ne.s32.totalorder %s38, %s39
    %p53 = scmp.eq.s32.totalorder %s17, 1
    %p54 = por %p52, %p53
    %p56 = scmp.ne.s32.totalorder %s39, %s55
    %p57 = scmp.eq.s32.totalorder %s17, 0
    %p58 = por %p56, %p57
    %s59 = ssub.s32 %s18, %s30
    %s60 = ssub.s32 %s19, %s26
    %s61 = sor.u32 %s59, %s60
    %p62 = scmp.eq.s32.totalorder %s61, 0
    %s64 = sadd.s32 %s63, 1
    %s65 = scalar_select %p62, %s63, %s64
    %p68 = pneg %p62
    %p69 = scmp.eq.s32.totalorder %s11, 1
    %p70 = por %p68, %p69
    %p71 = scmp.ne.s32.totalorder %s63, %s66
    %p72 = scmp.eq.s32.totalorder %s11, 0
    %p73 = por %p71, %p72
    %p74 = scmp.ne.s32.totalorder %s63, %s66
    %p75 = scmp.eq.s32.totalorder %s16, 1
    %p76 = por %p74, %p75
    %p77 = scmp.ne.s32.totalorder %s66, %s67
    %p78 = scmp.eq.s32.totalorder %s16, 0
    %p79 = por %p77, %p78
    %p80 = scmp.ne.s32.totalorder %s66, %s67
    %p81 = scmp.eq.s32.totalorder %s17, 1
    %p82 = por %p80, %p81
    %p84 = scmp.ne.s32.totalorder %s67, %s83
    %p85 = scmp.eq.s32.totalorder %s17, 0
    %p86 = por %p84, %p85
    %s88 = sadd.s32 %s87, 1
    %p91 = scmp.eq.s32.totalorder %s11, 1
    %p92 = scmp.ne.s32.totalorder %s87, %s89
    %p93 = scmp.eq.s32.totalorder %s11, 0
    %p94 = por %p92, %p93
    %p95 = scmp.ne.s32.totalorder %s87, %s89
    %p96 = scmp.eq.s32.totalorder %s16, 1
    %p97 = por %p95, %p96
    %p98 = scmp.ne.s32.totalorder %s89, %s90
    %p99 = scmp.eq.s32.totalorder %s16, 0
    %p100 = por %p98, %p99
    %p101 = scmp.ne.s32.totalorder %s89, %s90
    %p102 = scmp.eq.s32.totalorder %s17, 1
    %p103 = por %p101, %p102
    %p105 = scmp.ne.s32.totalorder %s90, %s104
    %p106 = scmp.eq.s32.totalorder %s17, 0
    %p107 = por %p105, %p106
    %s109 = sadd.s32 %s108, 1
    %p112 = scmp.eq.s32.totalorder %s11, 1
    %p113 = scmp.ne.s32.totalorder %s108, %s110
    %p114 = scmp.eq.s32.totalorder %s11, 0
    %p115 = por %p113, %p114
    %p116 = scmp.ne.s32.totalorder %s108, %s110
    %p117 = scmp.eq.s32.totalorder %s16, 1
    %p118 = por %p116, %p117
    %p119 = scmp.ne.s32.totalorder %s110, %s111
    %p120 = scmp.eq.s32.totalorder %s16, 0
    %p121 = por %p119, %p120
    %p122 = scmp.ne.s32.totalorder %s110, %s111
    %p123 = scmp.eq.s32.totalorder %s17, 1
    %p124 = por %p122, %p123
    %p126 = scmp.ne.s32.totalorder %s111, %s125
    %p127 = scmp.eq.s32.totalorder %s17, 0
    %p128 = por %p126, %p127
    %s130 = sadd.s32 %s129, 1
    %p133 = scmp.eq.s32.totalorder %s11, 1
    %p134 = scmp.ne.s32.totalorder %s129, %s131
    %p135 = scmp.eq.s32.totalorder %s11, 0
    %p136 = por %p134, %p135
    %p137 = scmp.ne.s32.totalorder %s129, %s131
    %p138 = scmp.eq.s32.totalorder %s16, 1
    %p139 = por %p137, %p138
    %p140 = scmp.ne.s32.totalorder %s131, %s132
    %p141 = scmp.eq.s32.totalorder %s16, 0
    %p142 = por %p140, %p141
    %p143 = scmp.ne.s32.totalorder %s131, %s132
    %p144 = scmp.eq.s32.totalorder %s17, 1
    %p145 = por %p143, %p144
    %p147 = scmp.ne.s32.totalorder %s132, %s146
    %p148 = scmp.eq.s32.totalorder %s17, 0
    %p149 = por %p147, %p148
    %s150 = ssub.s32 %s18, %s30
    %s151 = ssub.s32 %s19, %s26
    %s152 = sor.u32 %s150, %s151
    %p153 = scmp.eq.s32.totalorder %s152, 0
    %s155 = sadd.s32 %s154, 1
    %s156 = scalar_select %p153, %s154, %s155
    %p159 = pneg %p153
    %p160 = scmp.eq.s32.totalorder %s11, 1
    %p161 = por %p159, %p160
    %p162 = scmp.ne.s32.totalorder %s154, %s157
    %p163 = scmp.eq.s32.totalorder %s11, 0
    %p164 = por %p162, %p163
    %p165 = scmp.ne.s32.totalorder %s154, %s157
    %p166 = scmp.eq.s32.totalorder %s16, 1
    %p167 = por %p165, %p166
    %p168 = scmp.ne.s32.totalorder %s157, %s158
    %p169 = scmp.eq.s32.totalorder %s16, 0
    %p170 = por %p168, %p169
    %p171 = scmp.ne.s32.totalorder %s157, %s158
    %p172 = scmp.eq.s32.totalorder %s17, 1
    %p173 = por %p171, %p172
    %p175 = scmp.ne.s32.totalorder %s158, %s174
    %p176 = scmp.eq.s32.totalorder %s17, 0
    %p177 = por %p175, %p176
    %p178 = scmp.le.s32.totalorder 1, %s11
    %p179 = scmp.lt.s32.totalorder %s11, 3
    %p180 = pnand %p178, %p179
    %p181 = pneg %p180
    // Predicated region
    $region9: #{_lambda_.19} parent=5 // pred_check
      _
    $region10: #{_lambda_.19} parent=5 // pred_check_branch
      %183 = sbr.rel (%p180) target = $region12
    $region11: #{_lambda_.19} parent=5 // pred_region
      %s184 = ssub.s32 %s11, 1
      // Predicated region
      $region13: #{_lambda_.19} parent=11 // pred_check
        %p185 = pneg %p100
      $region14: #{_lambda_.19} parent=11 // pred_check_branch
        %187 = sbr.rel (%p185) target = $region16
      $region15: #{_lambda_.19} parent=11 // pred_region
        _
      $region16: #{_lambda_.19} parent=11 // pred_fallthru
        _
      // Predicated region
      $region17: #{_lambda_.19} parent=11 // pred_check
        %p188 = pneg %p121
      $region18: #{_lambda_.19} parent=11 // pred_check_branch
        %190 = sbr.rel (%p188) target = $region20
      $region19: #{_lambda_.19} parent=11 // pred_region
        _
      $region20: #{_lambda_.19} parent=11 // pred_fallthru
        _
      // Predicated region
      $region21: #{_lambda_.19} parent=11 // pred_check
        %p191 = pneg %p142
      $region22: #{_lambda_.19} parent=11 // pred_check_branch
        %193 = sbr.rel (%p191) target = $region24
      $region23: #{_lambda_.19} parent=11 // pred_region
        _
      $region24: #{_lambda_.19} parent=11 // pred_fallthru
        _
    $region12: #{_lambda_.19} parent=5 // pred_fallthru
      _
    %p194 = scmp.lt.s32.totalorder %s11, 2
    // Predicated region
    $region25: #{_lambda_.19} parent=5 // pred_check
      %p195 = pneg %p194
    $region26: #{_lambda_.19} parent=5 // pred_check_branch
      %197 = sbr.rel (%p195) target = $region28
    $region27: #{_lambda_.19} parent=5 // pred_region
      // Predicated region
      $region29: #{_lambda_.19} parent=27 // pred_check
        %p198 = pneg %p45
      $region30: #{_lambda_.19} parent=27 // pred_check_branch
        %200 = sbr.rel (%p198) target = $region32
      $region31: #{_lambda_.19} parent=27 // pred_region
        %s201 = smul.u32 8, %s19
        %p202 = scmp.lt.s32.totalorder %s18, 1
        %s203 = scalar_select %p202, %s18, 1
        %p204 = scmp.lt.s32.totalorder %s201, 7
        %s205 = scalar_select %p204, %s201, 7
        %s206 = smul.addr %s203, 16
        %s207 = sadd.s32 %s205, %s206
        %s208 = smul.addr %s207, 8
        %s209 = scalar_lea.vmem %s0, %s208
        %s210 = smul.u32 8, %s19
      $region32: #{_lambda_.19} parent=27 // pred_fallthru
        _
      // Predicated region
      $region33: #{_lambda_.19} parent=27 // pred_check
        %p211 = pneg %p73
      $region34: #{_lambda_.19} parent=27 // pred_check_branch
        %213 = sbr.rel (%p211) target = $region36
      $region35: #{_lambda_.19} parent=27 // pred_region
        %s214 = smul.u32 8, %s19
        %p215 = scmp.lt.s32.totalorder %s18, 1
        %s216 = scalar_select %p215, %s18, 1
        %p217 = scmp.lt.s32.totalorder %s214, 7
        %s218 = scalar_select %p217, %s214, 7
        %s219 = smul.addr %s216, 8
        %s220 = sadd.s32 %s218, %s219
        %s221 = smul.addr %s220, 2
        %s222 = scalar_lea.vmem %s1, %s221
        %s223 = smul.u32 8, %s19
      $region36: #{_lambda_.19} parent=27 // pred_fallthru
        _
    $region28: #{_lambda_.19} parent=5 // pred_fallthru
      _
    %p224 = scmp.le.s32.totalorder 1, %s11
    %p225 = scmp.lt.s32.totalorder %s11, 3
    %p226 = pnand %p224, %p225
    %p227 = pneg %p226
    // Predicated region
    $region37: #{_lambda_.19} parent=5 // pred_check
      _
    $region38: #{_lambda_.19} parent=5 // pred_check_branch
      %229 = sbr.rel (%p226) target = $region40
    $region39: #{_lambda_.19} parent=5 // pred_region
      %s230 = ssub.s32 %s11, 1
      %s231 = smul.u32 8, %s21
      %p232 = scmp.lt.s32.totalorder %s20, 1
      %s233 = scalar_select %p232, %s20, 1
      %p234 = scmp.lt.s32.totalorder %s231, 7
      %s235 = scalar_select %p234, %s231, 7
      %s236 = smul.addr %s233, 16
      %s237 = sadd.s32 %s235, %s236
      %s238 = smul.addr %s237, 8
      %s239 = scalar_lea.vmem %s0, %s238
      %p240 = pneg %p51
      %p241 = pneg %p48
      %s242 = smul.u32 8, %s21
      %p243 = scmp.lt.s32.totalorder %s20, 1
      %s244 = scalar_select %p243, %s20, 1
      %p245 = scmp.lt.s32.totalorder %s242, 7
      %s246 = scalar_select %p245, %s242, 7
      %s247 = smul.addr %s244, 8
      %s248 = sadd.s32 %s246, %s247
      %s249 = smul.addr %s248, 2
      %s250 = scalar_lea.vmem %s1, %s249
      %p251 = pneg %p79
      %p252 = pneg %p76
      %p253 = pneg %p100
      %p254 = pneg %p97
      %p255 = pneg %p121
      %p256 = pneg %p118
      %p257 = pneg %p142
      %p258 = pneg %p139
      %p259 = pneg %p170
      %p260 = pneg %p167
      %s261 = smul.u32 8, %s21
      %p262 = scmp.lt.s32.totalorder %s20, 1
      %s263 = scalar_select %p262, %s20, 1
      %p264 = scmp.lt.s32.totalorder %s261, 7
      %s265 = scalar_select %p264, %s261, 7
      %s266 = smul.addr %s263, 16
      %s267 = sadd.s32 %s265, %s266
      %s268 = smul.addr %s267, 8
      %s269 = scalar_lea.vmem %s5, %s268
      %s270 = smul.u32 8, %s21
      %p271 = scmp.lt.s32.totalorder %s20, 1
      %s272 = scalar_select %p271, %s20, 1
      %p273 = scmp.lt.s32.totalorder %s270, 7
      %s274 = scalar_select %p273, %s270, 7
      %s275 = smul.addr %s272, 16
      %s276 = sadd.s32 %s274, %s275
      %s277 = smul.addr %s276, 8
      %s278 = scalar_lea.vmem %s0, %s277
      %s279 = smul.u32 8, %s21
      %s280 = smul.u32 8, %s21
      %p281 = scmp.lt.s32.totalorder %s20, 1
      %s282 = scalar_select %p281, %s20, 1
      %p283 = scmp.lt.s32.totalorder %s280, 7
      %s284 = scalar_select %p283, %s280, 7
      %s285 = smul.addr %s282, 8
      %s286 = sadd.s32 %s284, %s285
      %s287 = smul.addr %s286, 2
      %s288 = scalar_lea.vmem %s1, %s287
      %s289 = smul.u32 8, %s21
      %s290 = smul.u32 8, %s21
      %p291 = scmp.lt.s32.totalorder %s20, 1
      %s292 = scalar_select %p291, %s20, 1
      %p293 = scmp.lt.s32.totalorder %s290, 7
      %s294 = scalar_select %p293, %s290, 7
      %s295 = smul.addr %s292, 16
      %s296 = sadd.s32 %s294, %s295
      %s297 = smul.addr %s296, 8
      %s298 = scalar_lea.vmem %s5, %s297
      %s299 = smul.u32 8, %s21
      %v301 = vld [vmem:[%s278] sm:$0xff]
      %v302 = vld [vmem:[%s278 + $0x8] sm:$0xff]
      %v303 = vld [vmem:[%s278 + $0x10] sm:$0xff]
      %v304 = vld [vmem:[%s278 + $0x18] sm:$0xff]
      %v305 = vld [vmem:[%s278 + $0x20] sm:$0xff]
      %v306 = vld [vmem:[%s278 + $0x28] sm:$0xff]
      %v307 = vld [vmem:[%s278 + $0x30] sm:$0xff]
      %v308 = vld [vmem:[%s278 + $0x38] sm:$0xff]
      %v309 = vld [vmem:[%s278 + $0x40] sm:$0xff]
      %v310 = vld [vmem:[%s278 + $0x48] sm:$0xff]
      %v311 = vld [vmem:[%s278 + $0x50] sm:$0xff]
      %v312 = vld [vmem:[%s278 + $0x58] sm:$0xff]
      %v313 = vld [vmem:[%s278 + $0x60] sm:$0xff]
      %v314 = vld [vmem:[%s278 + $0x68] sm:$0xff]
      %v315 = vld [vmem:[%s278 + $0x70] sm:$0xff]
      %v316 = vld [vmem:[%s278 + $0x78] sm:$0xff]
      %v317 = vld [vmem:[%s2] sm:$0xf]
      %v318 = vld [vmem:[%s2 + $0x4] sm:$0xf]
      %v319 = vld [vmem:[%s288] sm:$0xff]
      %v320 = vld [vmem:[%s288 + $0x8] sm:$0xff]
      %v321 = vld [vmem:[%s3] sm:$0xf]
      %v322 = vld [vmem:[%s3 + $0x4] sm:$0xf]
      %v323 = vpack.c.bf16 %v309, %v301
      %v324 = vpack.c.bf16 %v310, %v302
      %v325 = vpack.c.bf16 %v311, %v303
      %v326 = vpack.c.bf16 %v312, %v304
      %v327 = vpack.c.bf16 %v313, %v305
      %v328 = vpack.c.bf16 %v314, %v306
      %v329 = vpack.c.bf16 %v315, %v307
      %v330 = vpack.c.bf16 %v316, %v308
      %v333 = vunpack.c.l.b16 %v321
      %v334 = vunpack.c.l.b16 %v322
      %v335 = vpack.c.b16 %v334, %v333
      %vm336 = vcmask 130048
      %v338 = vsel %vm336, %v335, 0
      %340 = vmatprep.subr.bf16.mxu0 0
      %341 = vmatpush1.bf16.msra.mxu0 0
      %342 = vmatprep.subr.bf16.mxu0 0
      %343 = vmatpush1.bf16.msra.mxu0 0
      %344 = vmatprep.subr.bf16.mxu0 0
      %345 = vmatpush1.bf16.msra.mxu0 0
      %346 = vmatprep.subr.bf16.mxu0 0
      %347 = vmatpush1.bf16.msra.mxu0 0
      %348 = vmatprep.subr.bf16.mxu0 0
      %349 = vmatpush1.bf16.msra.mxu0 0
      %350 = vmatprep.subr.bf16.mxu0 0
      %351 = vmatpush1.bf16.msra.mxu0 0
      %352 = vmatprep.subr.bf16.mxu0 0
      %353 = vmatpush1.bf16.msra.mxu0 0
      %354 = vmatprep.subr.bf16.mxu0 %v324
      %355 = vmatpush1.bf16.msra.mxu0 %v323
      %356 = vmatprep.subr.bf16.mxu0 0
      %357 = vmatpush2.bf16.msra.mxu0 0
      %358 = vmatprep.subr.bf16.mxu0 0
      %359 = vmatpush2.bf16.msra.mxu0 0
      %360 = vmatprep.subr.bf16.mxu0 0
      %361 = vmatpush2.bf16.msra.mxu0 0
      %362 = vmatprep.subr.bf16.mxu0 0
      %363 = vmatpush2.bf16.msra.mxu0 0
      %364 = vmatprep.subr.bf16.mxu0 0
      %365 = vmatpush2.bf16.msra.mxu0 0
      %366 = vmatprep.subr.bf16.mxu0 0
      %367 = vmatpush2.bf16.msra.mxu0 0
      %368 = vmatprep.subr.bf16.mxu0 0
      %369 = vmatpush2.bf16.msra.mxu0 0
      %370 = vmatprep.subr.bf16.mxu0 0
      %371 = vmatpush2.bf16.msra.mxu0 0
      %372 = vmatprep.mubr.bf16.mxu0 0
      %373 = vmatmul.mubr.bf16.gmra.mxu0 %v338
      %v374 = vpop.f32.mrf.mxu0
      %v375 = vadd.f32 0.0, %v374
      %v376 = vpop.f32.mrf.mxu0
      %v377 = vadd.f32 0.0, %v376
      %v378 = vpop.f32.mrf.mxu0
      %v379 = vadd.f32 0.0, %v378
      %v380 = vpop.f32.mrf.mxu0
      %v381 = vadd.f32 0.0, %v380
      %382 = vdwg.mxu0
      %383 = vmatprep.subr.bf16.mxu0 0
      %384 = vmatpush1.bf16.msra.mxu0 0
      %385 = vmatprep.subr.bf16.mxu0 0
      %386 = vmatpush1.bf16.msra.mxu0 0
      %387 = vmatprep.subr.bf16.mxu0 0
      %388 = vmatpush1.bf16.msra.mxu0 0
      %389 = vmatprep.subr.bf16.mxu0 0
      %390 = vmatpush1.bf16.msra.mxu0 0
      %391 = vmatprep.subr.bf16.mxu0 0
      %392 = vmatpush1.bf16.msra.mxu0 0
      %393 = vmatprep.subr.bf16.mxu0 0
      %394 = vmatpush1.bf16.msra.mxu0 0
      %395 = vmatprep.subr.bf16.mxu0 0
      %396 = vmatpush1.bf16.msra.mxu0 0
      %397 = vmatprep.subr.bf16.mxu0 %v326
      %398 = vmatpush1.bf16.msra.mxu0 %v325
      %399 = vmatprep.subr.bf16.mxu0 0
      %400 = vmatpush2.bf16.msra.mxu0 0
      %401 = vmatprep.subr.bf16.mxu0 0
      %402 = vmatpush2.bf16.msra.mxu0 0
      %403 = vmatprep.subr.bf16.mxu0 0
      %404 = vmatpush2.bf16.msra.mxu0 0
      %405 = vmatprep.subr.bf16.mxu0 0
      %406 = vmatpush2.bf16.msra.mxu0 0
      %407 = vmatprep.subr.bf16.mxu0 0
      %408 = vmatpush2.bf16.msra.mxu0 0
      %409 = vmatprep.subr.bf16.mxu0 0
      %410 = vmatpush2.bf16.msra.mxu0 0
      %411 = vmatprep.subr.bf16.mxu0 0
      %412 = vmatpush2.bf16.msra.mxu0 0
      %413 = vmatprep.subr.bf16.mxu0 0
      %414 = vmatpush2.bf16.msra.mxu0 0
      %415 = vmatprep.mubr.bf16.mxu0 0
      %416 = vmatmul.mubr.bf16.gmra.mxu0 %v338
      %v417 = vpop.f32.mrf.mxu0
      %v418 = vadd.f32 0.0, %v417
      %v419 = vpop.f32.mrf.mxu0
      %v420 = vadd.f32 0.0, %v419
      %v421 = vpop.f32.mrf.mxu0
      %v422 = vadd.f32 0.0, %v421
      %v423 = vpop.f32.mrf.mxu0
      %v424 = vadd.f32 0.0, %v423
      %425 = vdwg.mxu0
      %426 = vmatprep.subr.bf16.mxu0 0
      %427 = vmatpush1.bf16.msra.mxu0 0
      %428 = vmatprep.subr.bf16.mxu0 0
      %429 = vmatpush1.bf16.msra.mxu0 0
      %430 = vmatprep.subr.bf16.mxu0 0
      %431 = vmatpush1.bf16.msra.mxu0 0
      %432 = vmatprep.subr.bf16.mxu0 0
      %433 = vmatpush1.bf16.msra.mxu0 0
      %434 = vmatprep.subr.bf16.mxu0 0
      %435 = vmatpush1.bf16.msra.mxu0 0
      %436 = vmatprep.subr.bf16.mxu0 0
      %437 = vmatpush1.bf16.msra.mxu0 0
      %438 = vmatprep.subr.bf16.mxu0 0
      %439 = vmatpush1.bf16.msra.mxu0 0
      %440 = vmatprep.subr.bf16.mxu0 %v328
      %441 = vmatpush1.bf16.msra.mxu0 %v327
      %442 = vmatprep.subr.bf16.mxu0 0
      %443 = vmatpush2.bf16.msra.mxu0 0
      %444 = vmatprep.subr.bf16.mxu0 0
      %445 = vmatpush2.bf16.msra.mxu0 0
      %446 = vmatprep.subr.bf16.mxu0 0
      %447 = vmatpush2.bf16.msra.mxu0 0
      %448 = vmatprep.subr.bf16.mxu0 0
      %449 = vmatpush2.bf16.msra.mxu0 0
      %450 = vmatprep.subr.bf16.mxu0 0
      %451 = vmatpush2.bf16.msra.mxu0 0
      %452 = vmatprep.subr.bf16.mxu0 0
      %453 = vmatpush2.bf16.msra.mxu0 0
      %454 = vmatprep.subr.bf16.mxu0 0
      %455 = vmatpush2.bf16.msra.mxu0 0
      %456 = vmatprep.subr.bf16.mxu0 0
      %457 = vmatpush2.bf16.msra.mxu0 0
      %458 = vmatprep.mubr.bf16.mxu0 0
      %459 = vmatmul.mubr.bf16.gmra.mxu0 %v338
      %v460 = vpop.f32.mrf.mxu0
      %v461 = vadd.f32 0.0, %v460
      %v462 = vpop.f32.mrf.mxu0
      %v463 = vadd.f32 0.0, %v462
      %v464 = vpop.f32.mrf.mxu0
      %v465 = vadd.f32 0.0, %v464
      %v466 = vpop.f32.mrf.mxu0
      %v467 = vadd.f32 0.0, %v466
      %468 = vdwg.mxu0
      %469 = vmatprep.subr.bf16.mxu0 0
      %470 = vmatpush1.bf16.msra.mxu0 0
      %471 = vmatprep.subr.bf16.mxu0 0
      %472 = vmatpush1.bf16.msra.mxu0 0
      %473 = vmatprep.subr.bf16.mxu0 0
      %474 = vmatpush1.bf16.msra.mxu0 0
      %475 = vmatprep.subr.bf16.mxu0 0
      %476 = vmatpush1.bf16.msra.mxu0 0
      %477 = vmatprep.subr.bf16.mxu0 0
      %478 = vmatpush1.bf16.msra.mxu0 0
      %479 = vmatprep.subr.bf16.mxu0 0
      %480 = vmatpush1.bf16.msra.mxu0 0
      %481 = vmatprep.subr.bf16.mxu0 0
      %482 = vmatpush1.bf16.msra.mxu0 0
      %483 = vmatprep.subr.bf16.mxu0 %v330
      %484 = vmatpush1.bf16.msra.mxu0 %v329
      %485 = vmatprep.subr.bf16.mxu0 0
      %486 = vmatpush2.bf16.msra.mxu0 0
      %487 = vmatprep.subr.bf16.mxu0 0
      %488 = vmatpush2.bf16.msra.mxu0 0
      %489 = vmatprep.subr.bf16.mxu0 0
      %490 = vmatpush2.bf16.msra.mxu0 0
      %491 = vmatprep.subr.bf16.mxu0 0
      %492 = vmatpush2.bf16.msra.mxu0 0
      %493 = vmatprep.subr.bf16.mxu0 0
      %494 = vmatpush2.bf16.msra.mxu0 0
      %495 = vmatprep.subr.bf16.mxu0 0
      %496 = vmatpush2.bf16.msra.mxu0 0
      %497 = vmatprep.subr.bf16.mxu0 0
      %498 = vmatpush2.bf16.msra.mxu0 0
      %499 = vmatprep.subr.bf16.mxu0 0
      %500 = vmatpush2.bf16.msra.mxu0 0
      %501 = vmatprep.mubr.bf16.mxu0 0
      %502 = vmatmul.mubr.bf16.gmra.mxu0 %v338
      %v503 = vpop.f32.mrf.mxu0
      %v504 = vadd.f32 0.0, %v503
      %v505 = vpop.f32.mrf.mxu0
      %v506 = vadd.f32 0.0, %v505
      %v507 = vpop.f32.mrf.mxu0
      %v508 = vadd.f32 0.0, %v507
      %v509 = vpop.f32.mrf.mxu0
      %v510 = vadd.f32 0.0, %v509
      %511 = vdwg.mxu0
      %v514 = vunpack.c.l.b16 %v317
      %v515 = vunpack.c.l.b16 %v318
      %v516 = vpack.c.b16 %v515, %v514
      %v519 = vcombine.high %v319, %v319
      %v521 = vunpack.c.l.s4 1983009808
      %v522 = vunpack.c.0.s8 %v521
      %v523 = vlaneseq
      %v524 = vshrl.u32 %v523, 7
      %v525 = vsub.s32 %v522, %v524
      %v526 = vrot.slane %v319, %v525
      %v528 = vunpack.c.l.s4 1983009808
      %v529 = vunpack.c.0.s8 %v528
      %v530 = vlaneseq
      %v531 = vshrl.u32 %v530, 7
      %v532 = vsub.s32 %v529, %v531
      %v533 = vrot.slane %v519, %v532
      %v534 = vcombine.high %v526, %v526
      %v535 = vcombine.high %v533, %v533
      %v536 = vcombine.high %v320, %v320
      %v538 = vunpack.c.l.s4 1983009808
      %v539 = vunpack.c.0.s8 %v538
      %v540 = vlaneseq
      %v541 = vshrl.u32 %v540, 7
      %v542 = vsub.s32 %v539, %v541
      %v543 = vrot.slane %v320, %v542
      %v545 = vunpack.c.l.s4 1983009808
      %v546 = vunpack.c.0.s8 %v545
      %v547 = vlaneseq
      %v548 = vshrl.u32 %v547, 7
      %v549 = vsub.s32 %v546, %v548
      %v550 = vrot.slane %v536, %v549
      %v551 = vcombine.high %v543, %v543
      %v552 = vcombine.high %v550, %v550
      %vm553 = vcmask 31744
      %v555 = vsel %vm553, %v516, 0
      %vm557 = vcmask 1041408
      %v559 = vsel %vm557, %v526, 0
      %v562 = vsel %vm557, %v534, 0
      %v565 = vsel %vm557, %v533, 0
      %v568 = vsel %vm557, %v535, 0
      %v571 = vsel %vm557, %v543, 0
      %v574 = vsel %vm557, %v551, 0
      %v577 = vsel %vm557, %v550, 0
      %v580 = vsel %vm557, %v552, 0
      %582 = vmatprep.subr.bf16.mxu0 0
      %583 = vmatpush1.bf16.msra.mxu0 0
      %584 = vmatprep.subr.bf16.mxu0 0
      %585 = vmatpush1.bf16.msra.mxu0 0
      %586 = vmatprep.subr.bf16.mxu0 0
      %587 = vmatpush1.bf16.msra.mxu0 0
      %588 = vmatprep.subr.bf16.mxu0 0
      %589 = vmatpush1.bf16.msra.mxu0 0
      %590 = vmatprep.subr.bf16.mxu0 0
      %591 = vmatpush1.bf16.msra.mxu0 0
      %592 = vmatprep.subr.bf16.mxu0 0
      %593 = vmatpush1.bf16.msra.mxu0 0
      %594 = vmatprep.subr.bf16.mxu0 0
      %595 = vmatpush1.bf16.msra.mxu0 0
      %596 = vmatprep.subr.bf16.mxu0 %v562
      %597 = vmatpush1.bf16.msra.mxu0 %v559
      %598 = vmatprep.subr.bf16.mxu0 0
      %599 = vmatpush2.bf16.msra.mxu0 0
      %600 = vmatprep.subr.bf16.mxu0 0
      %601 = vmatpush2.bf16.msra.mxu0 0
      %602 = vmatprep.subr.bf16.mxu0 0
      %603 = vmatpush2.bf16.msra.mxu0 0
      %604 = vmatprep.subr.bf16.mxu0 0
      %605 = vmatpush2.bf16.msra.mxu0 0
      %606 = vmatprep.subr.bf16.mxu0 0
      %607 = vmatpush2.bf16.msra.mxu0 0
      %608 = vmatprep.subr.bf16.mxu0 0
      %609 = vmatpush2.bf16.msra.mxu0 0
      %610 = vmatprep.subr.bf16.mxu0 0
      %611 = vmatpush2.bf16.msra.mxu0 0
      %612 = vmatprep.subr.bf16.mxu0 0
      %613 = vmatpush2.bf16.msra.mxu0 0
      %614 = vmatprep.mubr.bf16.mxu0 0
      %615 = vmatmul.mubr.bf16.gmra.mxu0 %v555
      %v616 = vpop.f32.mrf.mxu0
      %v617 = vadd.f32 %v375, %v616
      %v618 = vpop.f32.mrf.mxu0
      %v619 = vadd.f32 %v377, %v618
      %v620 = vpop.f32.mrf.mxu0
      %v621 = vadd.f32 %v379, %v620
      %v622 = vpop.f32.mrf.mxu0
      %v623 = vadd.f32 %v381, %v622
      %624 = vdwg.mxu0
      %625 = vmatprep.subr.bf16.mxu0 0
      %626 = vmatpush1.bf16.msra.mxu0 0
      %627 = vmatprep.subr.bf16.mxu0 0
      %628 = vmatpush1.bf16.msra.mxu0 0
      %629 = vmatprep.subr.bf16.mxu0 0
      %630 = vmatpush1.bf16.msra.mxu0 0
      %631 = vmatprep.subr.bf16.mxu0 0
      %632 = vmatpush1.bf16.msra.mxu0 0
      %633 = vmatprep.subr.bf16.mxu0 0
      %634 = vmatpush1.bf16.msra.mxu0 0
      %635 = vmatprep.subr.bf16.mxu0 0
      %636 = vmatpush1.bf16.msra.mxu0 0
      %637 = vmatprep.subr.bf16.mxu0 0
      %638 = vmatpush1.bf16.msra.mxu0 0
      %639 = vmatprep.subr.bf16.mxu0 %v568
      %640 = vmatpush1.bf16.msra.mxu0 %v565
      %641 = vmatprep.subr.bf16.mxu0 0
      %642 = vmatpush2.bf16.msra.mxu0 0
      %643 = vmatprep.subr.bf16.mxu0 0
      %644 = vmatpush2.bf16.msra.mxu0 0
      %645 = vmatprep.subr.bf16.mxu0 0
      %646 = vmatpush2.bf16.msra.mxu0 0
      %647 = vmatprep.subr.bf16.mxu0 0
      %648 = vmatpush2.bf16.msra.mxu0 0
      %649 = vmatprep.subr.bf16.mxu0 0
      %650 = vmatpush2.bf16.msra.mxu0 0
      %651 = vmatprep.subr.bf16.mxu0 0
      %652 = vmatpush2.bf16.msra.mxu0 0
      %653 = vmatprep.subr.bf16.mxu0 0
      %654 = vmatpush2.bf16.msra.mxu0 0
      %655 = vmatprep.subr.bf16.mxu0 0
      %656 = vmatpush2.bf16.msra.mxu0 0
      %657 = vmatprep.mubr.bf16.mxu0 0
      %658 = vmatmul.mubr.bf16.gmra.mxu0 %v555
      %v659 = vpop.f32.mrf.mxu0
      %v660 = vadd.f32 %v418, %v659
      %v661 = vpop.f32.mrf.mxu0
      %v662 = vadd.f32 %v420, %v661
      %v663 = vpop.f32.mrf.mxu0
      %v664 = vadd.f32 %v422, %v663
      %v665 = vpop.f32.mrf.mxu0
      %v666 = vadd.f32 %v424, %v665
      %667 = vdwg.mxu0
      %668 = vmatprep.subr.bf16.mxu0 0
      %669 = vmatpush1.bf16.msra.mxu0 0
      %670 = vmatprep.subr.bf16.mxu0 0
      %671 = vmatpush1.bf16.msra.mxu0 0
      %672 = vmatprep.subr.bf16.mxu0 0
      %673 = vmatpush1.bf16.msra.mxu0 0
      %674 = vmatprep.subr.bf16.mxu0 0
      %675 = vmatpush1.bf16.msra.mxu0 0
      %676 = vmatprep.subr.bf16.mxu0 0
      %677 = vmatpush1.bf16.msra.mxu0 0
      %678 = vmatprep.subr.bf16.mxu0 0
      %679 = vmatpush1.bf16.msra.mxu0 0
      %680 = vmatprep.subr.bf16.mxu0 0
      %681 = vmatpush1.bf16.msra.mxu0 0
      %682 = vmatprep.subr.bf16.mxu0 %v574
      %683 = vmatpush1.bf16.msra.mxu0 %v571
      %684 = vmatprep.subr.bf16.mxu0 0
      %685 = vmatpush2.bf16.msra.mxu0 0
      %686 = vmatprep.subr.bf16.mxu0 0
      %687 = vmatpush2.bf16.msra.mxu0 0
      %688 = vmatprep.subr.bf16.mxu0 0
      %689 = vmatpush2.bf16.msra.mxu0 0
      %690 = vmatprep.subr.bf16.mxu0 0
      %691 = vmatpush2.bf16.msra.mxu0 0
      %692 = vmatprep.subr.bf16.mxu0 0
      %693 = vmatpush2.bf16.msra.mxu0 0
      %694 = vmatprep.subr.bf16.mxu0 0
      %695 = vmatpush2.bf16.msra.mxu0 0
      %696 = vmatprep.subr.bf16.mxu0 0
      %697 = vmatpush2.bf16.msra.mxu0 0
      %698 = vmatprep.subr.bf16.mxu0 0
      %699 = vmatpush2.bf16.msra.mxu0 0
      %700 = vmatprep.mubr.bf16.mxu0 0
      %701 = vmatmul.mubr.bf16.gmra.mxu0 %v555
      %v702 = vpop.f32.mrf.mxu0
      %v703 = vadd.f32 %v461, %v702
      %v704 = vpop.f32.mrf.mxu0
      %v705 = vadd.f32 %v463, %v704
      %v706 = vpop.f32.mrf.mxu0
      %v707 = vadd.f32 %v465, %v706
      %v708 = vpop.f32.mrf.mxu0
      %v709 = vadd.f32 %v467, %v708
      %710 = vdwg.mxu0
      %711 = vmatprep.subr.bf16.mxu0 0
      %712 = vmatpush1.bf16.msra.mxu0 0
      %713 = vmatprep.subr.bf16.mxu0 0
      %714 = vmatpush1.bf16.msra.mxu0 0
      %715 = vmatprep.subr.bf16.mxu0 0
      %716 = vmatpush1.bf16.msra.mxu0 0
      %717 = vmatprep.subr.bf16.mxu0 0
      %718 = vmatpush1.bf16.msra.mxu0 0
      %719 = vmatprep.subr.bf16.mxu0 0
      %720 = vmatpush1.bf16.msra.mxu0 0
      %721 = vmatprep.subr.bf16.mxu0 0
      %722 = vmatpush1.bf16.msra.mxu0 0
      %723 = vmatprep.subr.bf16.mxu0 0
      %724 = vmatpush1.bf16.msra.mxu0 0
      %725 = vmatprep.subr.bf16.mxu0 %v580
      %726 = vmatpush1.bf16.msra.mxu0 %v577
      %727 = vmatprep.subr.bf16.mxu0 0
      %728 = vmatpush2.bf16.msra.mxu0 0
      %729 = vmatprep.subr.bf16.mxu0 0
      %730 = vmatpush2.bf16.msra.mxu0 0
      %731 = vmatprep.subr.bf16.mxu0 0
      %732 = vmatpush2.bf16.msra.mxu0 0
      %733 = vmatprep.subr.bf16.mxu0 0
      %734 = vmatpush2.bf16.msra.mxu0 0
      %735 = vmatprep.subr.bf16.mxu0 0
      %736 = vmatpush2.bf16.msra.mxu0 0
      %737 = vmatprep.subr.bf16.mxu0 0
      %738 = vmatpush2.bf16.msra.mxu0 0
      %739 = vmatprep.subr.bf16.mxu0 0
      %740 = vmatpush2.bf16.msra.mxu0 0
      %741 = vmatprep.subr.bf16.mxu0 0
      %742 = vmatpush2.bf16.msra.mxu0 0
      %743 = vmatprep.mubr.bf16.mxu0 0
      %744 = vmatmul.mubr.bf16.gmra.mxu0 %v555
      %v745 = vpop.f32.mrf.mxu0
      %v746 = vadd.f32 %v504, %v745
      %v747 = vpop.f32.mrf.mxu0
      %v748 = vadd.f32 %v506, %v747
      %v749 = vpop.f32.mrf.mxu0
      %v750 = vadd.f32 %v508, %v749
      %v751 = vpop.f32.mrf.mxu0
      %v752 = vadd.f32 %v510, %v751
      %753 = vdwg.mxu0
      %v754 = vld [vmem:[%s4] sm:$0xff]
      %v755 = vld [vmem:[%s4 + $0x8] sm:$0xff]
      %757 = vset.pattern.permute.xlu0 0
      %758 = vperm.xlu0 %757, %v754
      %v759 = vpop.permute.xlu0 %758
      %762 = vset.pattern.permute.xlu0 0
      %763 = vperm.xlu0 %762, %v755
      %v764 = vpop.permute.xlu0 %763
      %v766 = vadd.f32 %v617, %v759
      %v767 = vadd.f32 %v619, %v759
      %v768 = vadd.f32 %v660, %v759
      %v769 = vadd.f32 %v662, %v759
      %v770 = vadd.f32 %v703, %v759
      %v771 = vadd.f32 %v705, %v759
      %v772 = vadd.f32 %v746, %v759
      %v773 = vadd.f32 %v748, %v759
      %v774 = vadd.f32 %v621, %v764
      %v775 = vadd.f32 %v623, %v764
      %v776 = vadd.f32 %v664, %v764
      %v777 = vadd.f32 %v666, %v764
      %v778 = vadd.f32 %v707, %v764
      %v779 = vadd.f32 %v709, %v764
      %v780 = vadd.f32 %v750, %v764
      %v781 = vadd.f32 %v752, %v764
      %v782 = vsub.f32 0.0, %v766
      %v783 = vsub.f32 0.0, %v767
      %v784 = vsub.f32 0.0, %v768
      %v785 = vsub.f32 0.0, %v769
      %v786 = vsub.f32 0.0, %v770
      %v787 = vsub.f32 0.0, %v771
      %v788 = vsub.f32 0.0, %v772
      %v789 = vsub.f32 0.0, %v773
      %v790 = vsub.f32 0.0, %v774
      %v791 = vsub.f32 0.0, %v775
      %v792 = vsub.f32 0.0, %v776
      %v793 = vsub.f32 0.0, %v777
      %v794 = vsub.f32 0.0, %v778
      %v795 = vsub.f32 0.0, %v779
      %v796 = vsub.f32 0.0, %v780
      %v797 = vsub.f32 0.0, %v781
      %v798 = vmul.f32 %v782, 1.442695
      %v799 = vpow.pop %v798
      %v800 = vmul.f32 %v783, 1.442695
      %v801 = vpow.pop %v800
      %v802 = vmul.f32 %v784, 1.442695
      %v803 = vpow.pop %v802
      %v804 = vmul.f32 %v785, 1.442695
      %v805 = vpow.pop %v804
      %v806 = vmul.f32 %v786, 1.442695
      %v807 = vpow.pop %v806
      %v808 = vmul.f32 %v787, 1.442695
      %v809 = vpow.pop %v808
      %v810 = vmul.f32 %v788, 1.442695
      %v811 = vpow.pop %v810
      %v812 = vmul.f32 %v789, 1.442695
      %v813 = vpow.pop %v812
      %v814 = vmul.f32 %v790, 1.442695
      %v815 = vpow.pop %v814
      %v816 = vmul.f32 %v791, 1.442695
      %v817 = vpow.pop %v816
      %v818 = vmul.f32 %v792, 1.442695
      %v819 = vpow.pop %v818
      %v820 = vmul.f32 %v793, 1.442695
      %v821 = vpow.pop %v820
      %v822 = vmul.f32 %v794, 1.442695
      %v823 = vpow.pop %v822
      %v824 = vmul.f32 %v795, 1.442695
      %v825 = vpow.pop %v824
      %v826 = vmul.f32 %v796, 1.442695
      %v827 = vpow.pop %v826
      %v828 = vmul.f32 %v797, 1.442695
      %v829 = vpow.pop %v828
      %v830 = vadd.f32 %v799, 1.0
      %v831 = vadd.f32 %v801, 1.0
      %v832 = vadd.f32 %v803, 1.0
      %v833 = vadd.f32 %v805, 1.0
      %v834 = vadd.f32 %v807, 1.0
      %v835 = vadd.f32 %v809, 1.0
      %v836 = vadd.f32 %v811, 1.0
      %v837 = vadd.f32 %v813, 1.0
      %v838 = vadd.f32 %v815, 1.0
      %v839 = vadd.f32 %v817, 1.0
      %v840 = vadd.f32 %v819, 1.0
      %v841 = vadd.f32 %v821, 1.0
      %v842 = vadd.f32 %v823, 1.0
      %v843 = vadd.f32 %v825, 1.0
      %v844 = vadd.f32 %v827, 1.0
      %v845 = vadd.f32 %v829, 1.0
      %v846 = vrcp.pop %v830
      %v847 = vmul.f32 1.0, %v846
      %v848 = vrcp.pop %v831
      %v849 = vmul.f32 1.0, %v848
      %v850 = vrcp.pop %v832
      %v851 = vmul.f32 1.0, %v850
      %v852 = vrcp.pop %v833
      %v853 = vmul.f32 1.0, %v852
      %v854 = vrcp.pop %v834
      %v855 = vmul.f32 1.0, %v854
      %v856 = vrcp.pop %v835
      %v857 = vmul.f32 1.0, %v856
      %v858 = vrcp.pop %v836
      %v859 = vmul.f32 1.0, %v858
      %v860 = vrcp.pop %v837
      %v861 = vmul.f32 1.0, %v860
      %v862 = vrcp.pop %v838
      %v863 = vmul.f32 1.0, %v862
      %v864 = vrcp.pop %v839
      %v865 = vmul.f32 1.0, %v864
      %v866 = vrcp.pop %v840
      %v867 = vmul.f32 1.0, %v866
      %v868 = vrcp.pop %v841
      %v869 = vmul.f32 1.0, %v868
      %v870 = vrcp.pop %v842
      %v871 = vmul.f32 1.0, %v870
      %v872 = vrcp.pop %v843
      %v873 = vmul.f32 1.0, %v872
      %v874 = vrcp.pop %v844
      %v875 = vmul.f32 1.0, %v874
      %v876 = vrcp.pop %v845
      %v877 = vmul.f32 1.0, %v876
      %v878 = vmul.f32 %v301, %v847
      %v879 = vmul.f32 %v302, %v849
      %v880 = vmul.f32 %v303, %v851
      %v881 = vmul.f32 %v304, %v853
      %v882 = vmul.f32 %v305, %v855
      %v883 = vmul.f32 %v306, %v857
      %v884 = vmul.f32 %v307, %v859
      %v885 = vmul.f32 %v308, %v861
      %v886 = vmul.f32 %v309, %v863
      %v887 = vmul.f32 %v310, %v865
      %v888 = vmul.f32 %v311, %v867
      %v889 = vmul.f32 %v312, %v869
      %v890 = vmul.f32 %v313, %v871
      %v891 = vmul.f32 %v314, %v873
      %v892 = vmul.f32 %v315, %v875
      %v893 = vmul.f32 %v316, %v877
      %894 = vst [vmem:[%s298] sm:$0xff] %v878
      %895 = vst [vmem:[%s298 + $0x8] sm:$0xff] %v879
      %896 = vst [vmem:[%s298 + $0x10] sm:$0xff] %v880
      %897 = vst [vmem:[%s298 + $0x18] sm:$0xff] %v881
      %898 = vst [vmem:[%s298 + $0x20] sm:$0xff] %v882
      %899 = vst [vmem:[%s298 + $0x28] sm:$0xff] %v883
      %900 = vst [vmem:[%s298 + $0x30] sm:$0xff] %v884
      %901 = vst [vmem:[%s298 + $0x38] sm:$0xff] %v885
      %902 = vst [vmem:[%s298 + $0x40] sm:$0xff] %v886
      %903 = vst [vmem:[%s298 + $0x48] sm:$0xff] %v887
      %904 = vst [vmem:[%s298 + $0x50] sm:$0xff] %v888
      %905 = vst [vmem:[%s298 + $0x58] sm:$0xff] %v889
      %906 = vst [vmem:[%s298 + $0x60] sm:$0xff] %v890
      %907 = vst [vmem:[%s298 + $0x68] sm:$0xff] %v891
      %908 = vst [vmem:[%s298 + $0x70] sm:$0xff] %v892
      %909 = vst [vmem:[%s298 + $0x78] sm:$0xff] %v893
      %s910 = smul.u32 8, %s21
      %p911 = scmp.lt.s32.totalorder %s20, 1
      %s912 = scalar_select %p911, %s20, 1
      %p913 = scmp.lt.s32.totalorder %s910, 7
      %s914 = scalar_select %p913, %s910, 7
      %s915 = smul.addr %s912, 16
      %s916 = sadd.s32 %s914, %s915
      %s917 = smul.addr %s916, 8
      %s918 = scalar_lea.vmem %s5, %s917
      // Predicated region
      $region41: #{_lambda_.19} parent=39 // pred_check
        %p919 = pneg %p167
      $region42: #{_lambda_.19} parent=39 // pred_check_branch
        %921 = sbr.rel (%p919) target = $region44
      $region43: #{_lambda_.19} parent=39 // pred_region
        %s922 = smul.u32 8, %s21
      $region44: #{_lambda_.19} parent=39 // pred_fallthru
        _
    $region40: #{_lambda_.19} parent=5 // pred_fallthru
      _
    %p923 = scmp.le.s32.totalorder 2, %s11
    // Predicated region
    $region45: #{_lambda_.19} parent=5 // pred_check
      %p924 = pneg %p923
    $region46: #{_lambda_.19} parent=5 // pred_check_branch
      %926 = sbr.rel (%p924) target = $region48
    $region47: #{_lambda_.19} parent=5 // pred_region
      %s927 = ssub.s32 %s11, 2
      // Predicated region
      $region49: #{_lambda_.19} parent=47 // pred_check
        %p928 = pneg %p173
      $region50: #{_lambda_.19} parent=47 // pred_check_branch
        %930 = sbr.rel (%p928) target = $region52
      $region51: #{_lambda_.19} parent=47 // pred_region
        %s931 = smul.u32 8, %s23
        %p932 = scmp.lt.s32.totalorder %s22, 1
        %s933 = scalar_select %p932, %s22, 1
        %p934 = scmp.lt.s32.totalorder %s931, 7
        %s935 = scalar_select %p934, %s931, 7
        %s936 = smul.addr %s933, 16
        %s937 = sadd.s32 %s935, %s936
        %s938 = smul.addr %s937, 8
        %s939 = scalar_lea.vmem %s5, %s938
      $region52: #{_lambda_.19} parent=47 // pred_fallthru
        _
    $region48: #{_lambda_.19} parent=5 // pred_fallthru
      _
  $region6: #{_lambda_.19} parent=0 // loop_footer
    %s15 = sadd.s32 1, %s11
  $region7: #{_lambda_.19} parent=0 // loop_footer_branch
    %10 = sbr.rel target = $region3
  $region8: #{_lambda_.19} parent=0 // loop_exit
    _

</llo_original>
